<compile_context>
chip_gen: v5e
topology: v5e:2x2
jax: 0.10.0
libtpu: 0.0.40
codegen_flags: <defaults>
</compile_context>

<pallas_src>
import functools

import jax
import jax.numpy as jnp
from jax import lax
from jax.experimental import pallas as pl
from jax.experimental.pallas import tpu as pltpu

EPS = 1e-8  # epsilon used by espnet gLN / cLN


# ----------------------------------------------------------------------------
# Fused SegLSTM kernel: biLSTM recurrence + proj + norm + residual
# ----------------------------------------------------------------------------
def _seg_lstm_kernel(x_ref, h0_ref, c0_ref, wih_ref, whh_ref, b_ref,
                     wp_ref, bp_ref, gamma_ref, beta_ref,
                     out_ref, hT_ref, cT_ref,
                     xw_scr, y_scr, pb_scr,
                     *, hidden_size, num_dir, norm_type, unroll_steps):
    """One batch block.

    x_ref   : (T, Nb, D)    time-major input block (also the residual)
    h0/c0   : (ND, Nb, H)   initial states
    wih     : (D, G)        fused input->gate weights (gate-major, dir-adjacent)
    whh     : (ND*H, G)     block-diagonal hidden->gate weights
    b       : (1, G)        fused bias (b_ih + b_hh)
    wp/bp   : (ND*H, D), (1, D)  projection
    gamma/beta : (1, D)     norm affine params
    out_ref : (T, Nb, D)    x + norm(proj(lstm(x)))
    hT/cT   : (ND, Nb, H)   final states
    xw_scr  : (T, Nb, G)    hoisted input pre-activations (VMEM only)
    y_scr   : (T, Nb, ND*H) LSTM outputs (VMEM only)
    pb_scr  : (T, Nb, D)    backward-direction projection (VMEM only)
    """
    T, Nb, D = x_ref.shape
    H = hidden_size
    ND = num_dir
    DH = ND * H               # hidden width across directions
    G = 4 * DH                # total gate width

    wih = wih_ref[...]
    whh = whh_ref[...]        # stays resident across the loop
    mxu = whh.dtype

    # ---- hoisted input projection: one big MXU matmul over all time steps ----
    x_all = x_ref[...].reshape(T * Nb, D).astype(mxu)
    xw = jnp.dot(x_all, wih, preferred_element_type=jnp.float32)
    xw_scr[...] = (xw + b_ref[...]).reshape(T, Nb, G)      # bias folded once

    # activation constants (hoisted): g-block uses tanh, others sigmoid via
    # sigmoid(x) = 0.5 * tanh(x / 2) + 0.5  (single EUP pass per step)
    lane = lax.broadcasted_iota(jnp.int32, (Nb, G), 1)
    g_blk = (lane >= 2 * DH) & (lane < 3 * DH)
    act_scale = jnp.where(g_blk, 1.0, 0.5)
    act_off = jnp.where(g_blk, 0.0, 0.5)
    if ND == 2:
        dir0 = (lane % DH) < H          # dir-0 columns within every gate block

    # carries hold both directions side by side along lanes: [dir0 | dir1]
    h_cat = jnp.concatenate([h0_ref[d] for d in range(ND)], axis=-1)
    c_cat = jnp.concatenate([c0_ref[d] for d in range(ND)], axis=-1)

    def step(s, carry):
        h_c, c_c = carry
        pre = xw_scr[s]                                   # forward at time s
        if ND == 2:
            # backward direction consumes x[T-1-s]; lane-masked select, no concat
            pre = jnp.where(dir0, pre, xw_scr[T - 1 - s])
        gates = pre + jnp.dot(h_c.astype(mxu), whh,
                              preferred_element_type=jnp.float32)
        act = jnp.tanh(gates * act_scale) * act_scale + act_off
        i_g = act[:, 0:DH]
        f_g = act[:, DH:2 * DH]
        g_g = act[:, 2 * DH:3 * DH]
        o_g = act[:, 3 * DH:4 * DH]
        c_new = f_g * c_c + i_g * g_g
        h_new = o_g * jnp.tanh(c_new)
        y_scr[s] = h_new                                  # single store per step
        return h_new, c_new

    if unroll_steps >= T:
        carry = (h_cat, c_cat)
        for s in range(T):                                # short T: static indices
            carry = step(s, carry)
        h_cat, c_cat = carry
    else:
        h_cat, c_cat = lax.fori_loop(0, T, step, (h_cat, c_cat),
                                     unroll=unroll_steps)

    for d in range(ND):
        hT_ref[d] = h_cat[:, d * H:(d + 1) * H]
        cT_ref[d] = c_cat[:, d * H:(d + 1) * H]

    # ---- fused epilogue (one-shot): projection -> norm -> residual ----
    y = y_scr[...]
    wp = wp_ref[...]
    yf = y[:, :, 0:H].reshape(T * Nb, H).astype(mxu)
    p = (jnp.dot(yf, wp[0:H, :], preferred_element_type=jnp.float32)
         + bp_ref[...]).reshape(T, Nb, D)

    if ND == 2:
        yb = y[:, :, H:DH].reshape(T * Nb, H).astype(mxu)
        pb_scr[...] = jnp.dot(yb, wp[H:DH, :],
                              preferred_element_type=jnp.float32).reshape(T, Nb, D)

        # un-reverse the backward direction in time (in-place slab swap, off the
        # serial recurrence path)
        def rev(t, carry):
            a = pb_scr[t]
            z = pb_scr[T - 1 - t]
            pb_scr[t] = z
            pb_scr[T - 1 - t] = a
            return carry

        lax.fori_loop(0, T // 2, rev, 0)
        p = p + pb_scr[...]

    if norm_type == "gLN":        # per-sample stats over (T, D)
        mean = jnp.mean(jnp.mean(p, axis=2, keepdims=True), axis=0, keepdims=True)
        cen = p - mean
        var = jnp.mean(jnp.mean(cen * cen, axis=2, keepdims=True),
                       axis=0, keepdims=True)
    else:                         # cLN: per (sample, time) stats over D
        mean = jnp.mean(p, axis=2, keepdims=True)
        cen = p - mean
        var = jnp.mean(cen * cen, axis=2, keepdims=True)
    normed = gamma_ref[...] * (cen * lax.rsqrt(var + EPS)) + beta_ref[...]
    out_ref[...] = x_ref[...] + normed


# ----------------------------------------------------------------------------
# Weight packing (gate-major columns, directions adjacent)
# ----------------------------------------------------------------------------
def _pack_lstm_weights(w_ih, w_hh, b, input_size, hidden_size, mxu_dtype):
    """Columns: [i_0 .. i_{ND-1} | f_* | g_* | o_*], each block H wide.
    W_ih (D, G); W_hh (ND*H, G) block-diagonal (rows d*H:(d+1)*H -> dir d)."""
    ND = w_ih.shape[0]
    D, H = input_size, hidden_size
    G = 4 * ND * H
    Wih = jnp.zeros((D, G), jnp.float32)
    Whh = jnp.zeros((ND * H, G), jnp.float32)
    bias = jnp.zeros((G,), jnp.float32)
    for d in range(ND):
        for g in range(4):
            col = (g * ND + d) * H
            Wih = Wih.at[:, col:col + H].set(w_ih[d, :, g * H:(g + 1) * H])
            Whh = Whh.at[d * H:(d + 1) * H, col:col + H].set(
                w_hh[d, :, g * H:(g + 1) * H])
            bias = bias.at[col:col + H].set(b[d, g * H:(g + 1) * H])
    return Wih.astype(mxu_dtype), Whh.astype(mxu_dtype), bias.reshape(1, -1)


# ----------------------------------------------------------------------------
# Wrapper: batch tiling, BlockSpecs, layout plumbing
# ----------------------------------------------------------------------------
def seg_lstm_pallas(x, hc, params, *, hidden_size, bidirectional=False,
                    norm_type="cLN", batch_block=None,
                    mxu_dtype=jnp.bfloat16):
    """SegLSTM.forward: x (B, T, D), hc None or ((ND,B,H),(ND,B,H)).

    Returns (out (B, T, D), (h, c) each (ND, B, H)).  Dropout p=0 -> identity.
    """
    assert norm_type in ("gLN", "cLN")
    x = jnp.asarray(x, jnp.float32)
    B, T, D = x.shape
    H = hidden_size
    ND = 2 if bidirectional else 1
    G = 4 * ND * H

    if hc is None:
        h0 = jnp.zeros((ND, B, H), jnp.float32)
        c0 = jnp.zeros((ND, B, H), jnp.float32)
    else:
        h0 = jnp.asarray(hc[0], jnp.float32)
        c0 = jnp.asarray(hc[1], jnp.float32)

    wih, whh, b_fused = _pack_lstm_weights(
        jnp.asarray(params["w_ih"], jnp.float32),
        jnp.asarray(params["w_hh"], jnp.float32),
        jnp.asarray(params["b"], jnp.float32), D, H, mxu_dtype)
    wp = jnp.asarray(params["proj_w"], jnp.float32).astype(mxu_dtype)
    bp = jnp.asarray(params["proj_b"], jnp.float32).reshape(1, D)
    gamma = jnp.asarray(params["gamma"], jnp.float32).reshape(1, D)
    beta = jnp.asarray(params["beta"], jnp.float32).reshape(1, D)

    # kernel-internal layout is time-major
    x_tm = jnp.transpose(x, (1, 0, 2))                    # (T, B, D)

    # pad batch to a multiple of 8 (sublane tile)
    Bp = -(-B // 8) * 8
    if Bp != B:
        pad = Bp - B
        x_tm = jnp.pad(x_tm, ((0, 0), (0, pad), (0, 0)))
        h0 = jnp.pad(h0, ((0, 0), (0, pad), (0, 0)))
        c0 = jnp.pad(c0, ((0, 0), (0, pad), (0, 0)))

    # batch block: as large as possible (fills MXU rows) but keep >= 2 grid
    # blocks when batch allows so "parallel" can shard across v7x's two TCs
    if batch_block is None:
        batch_block = 128
    Nb = max(8, (min(batch_block, Bp) // 8) * 8)
    while Bp % Nb:
        Nb -= 8
    if Bp // Nb < 2 and Bp >= 16:
        cand = (Bp // 2 // 8) * 8
        while cand >= 8 and Bp % cand:
            cand -= 8
        if cand >= 8:
            Nb = cand
    grid = (Bp // Nb,)

    unroll_steps = T if T <= 16 else 8    # bound live ranges for long sequences

    # rough per-block VMEM budget; raise the scoped limit only when needed
    est = (T * Nb * G * 4 + T * Nb * ND * H * 4 + T * Nb * D * 4        # scratch
           + 2 * 2 * T * Nb * D * 4                                      # x/out
           + 4 * 2 * ND * Nb * H * 4                                     # h/c
           + 2 * (D * G + ND * H * G + ND * H * D) * 2)                  # weights
    cparams = dict(dimension_semantics=("parallel",))
    if est > 24 * 1024 * 1024:
        cparams["vmem_limit_bytes"] = int(min(est * 2, 100 * 1024 * 1024))

    kern = functools.partial(_seg_lstm_kernel, hidden_size=H, num_dir=ND,
                             norm_type=norm_type, unroll_steps=unroll_steps)

    out_tm, hT, cT = pl.pallas_call(
        kern,
        grid=grid,
        in_specs=[
            pl.BlockSpec((T, Nb, D), lambda i: (0, i, 0)),        # x (time-major)
            pl.BlockSpec((ND, Nb, H), lambda i: (0, i, 0)),       # h0
            pl.BlockSpec((ND, Nb, H), lambda i: (0, i, 0)),       # c0
            pl.BlockSpec((D, G), lambda i: (0, 0)),               # W_ih fused
            pl.BlockSpec((ND * H, G), lambda i: (0, 0)),          # W_hh block-diag
            pl.BlockSpec((1, G), lambda i: (0, 0)),               # fused LSTM bias
            pl.BlockSpec((ND * H, D), lambda i: (0, 0)),          # proj W
            pl.BlockSpec((1, D), lambda i: (0, 0)),               # proj b
            pl.BlockSpec((1, D), lambda i: (0, 0)),               # gamma
            pl.BlockSpec((1, D), lambda i: (0, 0)),               # beta
        ],
        out_specs=(
            pl.BlockSpec((T, Nb, D), lambda i: (0, i, 0)),
            pl.BlockSpec((ND, Nb, H), lambda i: (0, i, 0)),
            pl.BlockSpec((ND, Nb, H), lambda i: (0, i, 0)),
        ),
        out_shape=(
            jax.ShapeDtypeStruct((T, Bp, D), jnp.float32),
            jax.ShapeDtypeStruct((ND, Bp, H), jnp.float32),
            jax.ShapeDtypeStruct((ND, Bp, H), jnp.float32),
        ),
        scratch_shapes=[
            pltpu.VMEM((T, Nb, G), jnp.float32),        # hoisted x@W_ih (+bias)
            pltpu.VMEM((T, Nb, ND * H), jnp.float32),   # LSTM outputs
            pltpu.VMEM((T, Nb, D), jnp.float32),        # backward proj (reversal)
        ],
        compiler_params=pltpu.CompilerParams(**cparams),
    )(x_tm, h0, c0, wih, whh, b_fused, wp, bp, gamma, beta)

    out = jnp.transpose(out_tm[:, :B, :], (1, 0, 2))
    return out, (hT[:, :B, :], cT[:, :B, :])


# ----------------------------------------------------------------------------
# Parameter construction
# ----------------------------------------------------------------------------
def init_params(key, input_size, hidden_size, bidirectional):
    D, H = input_size, hidden_size
    ND = 2 if bidirectional else 1
    ks = iter(jax.random.split(key, 16))

    def rnd(shape, scale=0.1):
        return scale * jax.random.normal(next(ks), shape, jnp.float32)

    return dict(
        w_ih=rnd((ND, D, 4 * H)),        # gate order i, f, g, o (PyTorch)
        w_hh=rnd((ND, H, 4 * H)),
        b=rnd((ND, 4 * H)),              # = b_ih + b_hh of PyTorch
        proj_w=rnd((ND * H, D)),         # Linear(ND*H, D), transposed
        proj_b=rnd((1, D)),
        gamma=1.0 + rnd((1, D)),
        beta=rnd((1, D)),
    )


# ----------------------------------------------------------------------------
# Pure-JAX reference (mirrors the PyTorch SegLSTM forward) for validation
# ----------------------------------------------------------------------------
def seg_lstm_ref(x, hc, p, *, hidden_size, bidirectional, norm_type,
                 mxu_dtype=jnp.float32):
    B, T, D = x.shape
    H = hidden_size
    ND = 2 if bidirectional else 1
    if hc is None:
        h0 = jnp.zeros((ND, B, H), jnp.float32)
        c0 = jnp.zeros((ND, B, H), jnp.float32)
    else:
        h0, c0 = hc

    def md(a, w):   # matmul with the same MXU operand dtype as the kernel
        return jnp.dot(a.astype(mxu_dtype), w.astype(mxu_dtype),
                       preferred_element_type=jnp.float32)

    def run_dir(xs, w_ih, w_hh, b, h, c):
        def step(carry, x_t):
            h, c = carry
            g = md(x_t, w_ih) + md(h, w_hh) + b
            i = jax.nn.sigmoid(g[:, 0:H])
            f = jax.nn.sigmoid(g[:, H:2 * H])
            gg = jnp.tanh(g[:, 2 * H:3 * H])
            o = jax.nn.sigmoid(g[:, 3 * H:4 * H])
            c = f * c + i * gg
            h = o * jnp.tanh(c)
            return (h, c), h
        (hT, cT), ys = lax.scan(step, (h, c), xs)
        return ys, hT, cT

    x_tm = jnp.transpose(x, (1, 0, 2))
    yf, hTf, cTf = run_dir(x_tm, p["w_ih"][0], p["w_hh"][0], p["b"][0], h0[0], c0[0])
    if ND == 2:
        yb, hTb, cTb = run_dir(x_tm[::-1], p["w_ih"][1], p["w_hh"][1], p["b"][1],
                               h0[1], c0[1])
        y = jnp.concatenate([yf, yb[::-1]], axis=-1)
        hT, cT = jnp.stack([hTf, hTb]), jnp.stack([cTf, cTb])
    else:
        y, hT, cT = yf, hTf[None], cTf[None]
    y = jnp.transpose(y, (1, 0, 2)).reshape(B * T, ND * H)
    proj = (md(y, p["proj_w"]) + p["proj_b"]).reshape(B, T, D)
    if norm_type == "gLN":
        mean = proj.mean(axis=(1, 2), keepdims=True)
        var = ((proj - mean) ** 2).mean(axis=(1, 2), keepdims=True)
    else:
        mean = proj.mean(axis=2, keepdims=True)
        var = ((proj - mean) ** 2).mean(axis=2, keepdims=True)
    normed = p["gamma"] * (proj - mean) / jnp.sqrt(var + EPS) + p["beta"]
    return x + normed, (hT, cT)


def _check(name, got, want, atol=2e-2, rtol=2e-2):
    err = float(jnp.max(jnp.abs(got - want)))
    assert bool(jnp.allclose(got, want, atol=atol, rtol=rtol)), \
        f"{name} mismatch, max abs err={err}"


# ----------------------------------------------------------------------------
if __name__ == "__main__":
    INPUT_SIZE = 16
    HIDDEN_SIZE = 32
    B, T = 16, 16

    key = jax.random.PRNGKey(0)
    kp1, kx, kp2, kh, kc = jax.random.split(key, 5)
    x = jax.random.normal(kx, (B, T, INPUT_SIZE), jnp.float32)

    # --- config 1: SkiM-style SegLSTM (bidirectional, gLN), hc=None, bf16 MXU --
    params_bi = init_params(kp1, INPUT_SIZE, HIDDEN_SIZE, bidirectional=True)
    out, (hT, cT) = seg_lstm_pallas(x, None, params_bi,
                                    hidden_size=HIDDEN_SIZE,
                                    bidirectional=True, norm_type="gLN",
                                    mxu_dtype=jnp.bfloat16)
    jax.block_until_ready(out)
    assert out.shape == (B, T, INPUT_SIZE), out.shape
    assert hT.shape == (2, B, HIDDEN_SIZE) and cT.shape == (2, B, HIDDEN_SIZE)
    assert bool(jnp.all(jnp.isfinite(out)))
    r_out, (r_h, r_c) = seg_lstm_ref(x, None, params_bi,
                                     hidden_size=HIDDEN_SIZE,
                                     bidirectional=True, norm_type="gLN",
                                     mxu_dtype=jnp.bfloat16)
    _check("out(bi,gLN,bf16)", out, r_out)
    _check("hT(bi,gLN,bf16)", hT, r_h)
    _check("cT(bi,gLN,bf16)", cT, r_c)

    # --- config 2: module defaults (unidirectional, cLN), hc provided, f32 ----
    params_uni = init_params(kp2, INPUT_SIZE, HIDDEN_SIZE, bidirectional=False)
    h0 = 0.1 * jax.random.normal(kh, (1, B, HIDDEN_SIZE), jnp.float32)
    c0 = 0.1 * jax.random.normal(kc, (1, B, HIDDEN_SIZE), jnp.float32)
    out_u, (hT_u, cT_u) = seg_lstm_pallas(x, (h0, c0), params_uni,
                                          hidden_size=HIDDEN_SIZE,
                                          bidirectional=False, norm_type="cLN",
                                          mxu_dtype=jnp.float32)
    jax.block_until_ready(out_u)
    assert out_u.shape == (B, T, INPUT_SIZE)
    r_out_u, (r_h_u, r_c_u) = seg_lstm_ref(x, (h0, c0), params_uni,
                                           hidden_size=HIDDEN_SIZE,
                                           bidirectional=False, norm_type="cLN",
                                           mxu_dtype=jnp.float32)
    _check("out(uni,cLN,f32)", out_u, r_out_u)
    _check("hT(uni,cLN,f32)", hT_u, r_h_u)
    _check("cT(uni,cLN,f32)", cT_u, r_c_u)

    # TODO(synk): nn.Dropout with p > 0 (training mode) would need in-kernel RNG;
    # it is the identity for the reference configuration (p = 0 / eval).
    print("KERNEL_OK")
</pallas_src>

<mosaic_0001>
module attributes {stable_mosaic.version = 11 : i64} {
  func.func @_seg_lstm_kernel(%arg0: i32, %arg1: memref<16x8x16xf32, #tpu.memory_space<vmem>>, %arg2: memref<2x8x32xf32, #tpu.memory_space<vmem>>, %arg3: memref<2x8x32xf32, #tpu.memory_space<vmem>>, %arg4: memref<16x256xbf16, #tpu.memory_space<vmem>>, %arg5: memref<64x256xbf16, #tpu.memory_space<vmem>>, %arg6: memref<1x256xf32, #tpu.memory_space<vmem>>, %arg7: memref<64x16xbf16, #tpu.memory_space<vmem>>, %arg8: memref<1x16xf32, #tpu.memory_space<vmem>>, %arg9: memref<1x16xf32, #tpu.memory_space<vmem>>, %arg10: memref<1x16xf32, #tpu.memory_space<vmem>>, %arg11: memref<16x8x16xf32, #tpu.memory_space<vmem>>, %arg12: memref<2x8x32xf32, #tpu.memory_space<vmem>>, %arg13: memref<2x8x32xf32, #tpu.memory_space<vmem>>, %arg14: memref<16x8x256xf32, #tpu.memory_space<vmem>>, %arg15: memref<16x8x64xf32, #tpu.memory_space<vmem>>, %arg16: memref<16x8x16xf32, #tpu.memory_space<vmem>>) attributes {dimension_semantics = [#tpu.dimension_semantics<parallel>], iteration_bounds = array<i64: 2>, scalar_prefetch = 0 : i64, scratch_operands = 3 : i64, tpu.core_type = #tpu.core_type<tc>, window_params = [{transform_indices = @transform_0, window_bounds = array<i64: 16, 8, 16>}, {transform_indices = @transform_1, window_bounds = array<i64: 2, 8, 32>}, {transform_indices = @transform_2, window_bounds = array<i64: 2, 8, 32>}, {pipeline_mode = #tpu.pipeline_mode<synchronous>, transform_indices = @transform_3, window_bounds = array<i64: 16, 256>}, {pipeline_mode = #tpu.pipeline_mode<synchronous>, transform_indices = @transform_4, window_bounds = array<i64: 64, 256>}, {pipeline_mode = #tpu.pipeline_mode<synchronous>, transform_indices = @transform_5, window_bounds = array<i64: 1, 256>}, {pipeline_mode = #tpu.pipeline_mode<synchronous>, transform_indices = @transform_6, window_bounds = array<i64: 64, 16>}, {pipeline_mode = #tpu.pipeline_mode<synchronous>, transform_indices = @transform_7, window_bounds = array<i64: 1, 16>}, {pipeline_mode = #tpu.pipeline_mode<synchronous>, transform_indices = @transform_8, window_bounds = array<i64: 1, 16>}, {pipeline_mode = #tpu.pipeline_mode<synchronous>, transform_indices = @transform_9, window_bounds = array<i64: 1, 16>}, {transform_indices = @transform_10, window_bounds = array<i64: 16, 8, 16>}, {transform_indices = @transform_11, window_bounds = array<i64: 2, 8, 32>}, {transform_indices = @transform_12, window_bounds = array<i64: 2, 8, 32>}]} {
    %c0 = arith.constant 0 : index
    %c0_0 = arith.constant 0 : index
    %0 = vector.load %arg4[%c0, %c0_0] : memref<16x256xbf16, #tpu.memory_space<vmem>>, vector<16x256xbf16>
    %c0_1 = arith.constant 0 : index
    %c0_2 = arith.constant 0 : index
    %1 = vector.load %arg5[%c0_1, %c0_2] : memref<64x256xbf16, #tpu.memory_space<vmem>>, vector<64x256xbf16>
    %c0_3 = arith.constant 0 : index
    %c0_4 = arith.constant 0 : index
    %c0_5 = arith.constant 0 : index
    %2 = vector.load %arg1[%c0_3, %c0_4, %c0_5] : memref<16x8x16xf32, #tpu.memory_space<vmem>>, vector<16x8x16xf32>
    %3 = vector.shape_cast %2 : vector<16x8x16xf32> to vector<128x16xf32>
    %4 = arith.truncf %3 : vector<128x16xf32> to vector<128x16xbf16>
    %cst = arith.constant dense<0.000000e+00> : vector<128x256xf32>
    %5 = tpu.matmul %4, %0, %cst {dimension_numbers = #tpu.dot_dimension_numbers<[1], [0], [0], [1], [0, 0, 1, 1], [], []>} : vector<128x16xbf16>, vector<16x256xbf16>, vector<128x256xf32> -> vector<128x256xf32>
    %c0_6 = arith.constant 0 : index
    %c0_7 = arith.constant 0 : index
    %6 = vector.load %arg6[%c0_6, %c0_7] : memref<1x256xf32, #tpu.memory_space<vmem>>, vector<1x256xf32>
    %7 = vector.broadcast %6 : vector<1x256xf32> to vector<128x256xf32>
    %8 = arith.addf %5, %7 : vector<128x256xf32>
    %9 = vector.shape_cast %8 : vector<128x256xf32> to vector<16x8x256xf32>
    %c0_8 = arith.constant 0 : index
    %c0_9 = arith.constant 0 : index
    %c0_10 = arith.constant 0 : index
    %10 = vector.load %arg14[%c0_8, %c0_9, %c0_10] : memref<16x8x256xf32, #tpu.memory_space<vmem>>, vector<16x8x256xf32>
    tpu.vector_store %arg14[%c0_8, %c0_9, %c0_10], %9 {strides = array<i32>} : memref<16x8x256xf32, #tpu.memory_space<vmem>>, vector<16x8x256xf32>,
    %11 = tpu.iota {dimensions = array<i32: 1>} : vector<8x256xi32>
    %c128_i32 = arith.constant 128 : i32
    %12 = vector.broadcast %c128_i32 : i32 to vector<8x256xi32>
    %13 = arith.cmpi sge, %11, %12 : vector<8x256xi32>
    %c192_i32 = arith.constant 192 : i32
    %14 = vector.broadcast %c192_i32 : i32 to vector<8x256xi32>
    %15 = arith.cmpi slt, %11, %14 : vector<8x256xi32>
    %16 = arith.andi %13, %15 : vector<8x256xi1>
    %cst_11 = arith.constant 1.000000e+00 : f32
    %cst_12 = arith.constant 5.000000e-01 : f32
    %17 = vector.broadcast %cst_11 : f32 to vector<8x256xf32>
    %18 = vector.broadcast %cst_12 : f32 to vector<8x256xf32>
    %19 = arith.select %16, %17, %18 : vector<8x256xi1>, vector<8x256xf32>
    %cst_13 = arith.constant 0.000000e+00 : f32
    %cst_14 = arith.constant 5.000000e-01 : f32
    %20 = vector.broadcast %cst_13 : f32 to vector<8x256xf32>
    %21 = vector.broadcast %cst_14 : f32 to vector<8x256xf32>
    %22 = arith.select %16, %20, %21 : vector<8x256xi1>, vector<8x256xf32>
    %c64_i32 = arith.constant 64 : i32
    %c0_i32 = arith.constant 0 : i32
    %23 = arith.cmpi eq, %c64_i32, %c0_i32 : i32
    %c1_i32 = arith.constant 1 : i32
    %24 = arith.select %23, %c1_i32, %c64_i32 : i32
    %25 = vector.broadcast %24 : i32 to vector<8x256xi32>
    %26 = arith.remsi %11, %25 : vector<8x256xi32>
    %c0_i32_15 = arith.constant 0 : i32
    %27 = vector.broadcast %c0_i32_15 : i32 to vector<8x256xi32>
    %28 = arith.cmpi ne, %26, %27 : vector<8x256xi32>
    %c0_i32_16 = arith.constant 0 : i32
    %29 = vector.broadcast %c0_i32_16 : i32 to vector<8x256xi32>
    %30 = arith.cmpi slt, %26, %29 : vector<8x256xi32>
    %c0_i32_17 = arith.constant 0 : i32
    %31 = arith.cmpi slt, %24, %c0_i32_17 : i32
    %32 = vector.broadcast %31 : i1 to vector<8x256xi1>
    %33 = vector.broadcast %32 : vector<8x256xi1> to vector<8x256xi1>
    %34 = arith.xori %30, %33 : vector<8x256xi1>
    %35 = arith.andi %34, %28 : vector<8x256xi1>
    %36 = vector.broadcast %24 : i32 to vector<8x256xi32>
    %37 = arith.addi %26, %36 : vector<8x256xi32>
    %38 = arith.select %35, %37, %26 : vector<8x256xi1>, vector<8x256xi32>
    %c32_i32 = arith.constant 32 : i32
    %39 = vector.broadcast %c32_i32 : i32 to vector<8x256xi32>
    %40 = arith.cmpi slt, %38, %39 : vector<8x256xi32>
    %c0_18 = arith.constant 0 : index
    %c0_19 = arith.constant 0 : index
    %c0_20 = arith.constant 0 : index
    %41 = vector.load %arg2[%c0_18, %c0_19, %c0_20] : memref<2x8x32xf32, #tpu.memory_space<vmem>>, vector<1x8x32xf32>
    %42 = vector.shape_cast %41 : vector<1x8x32xf32> to vector<8x32xf32>
    %c1 = arith.constant 1 : index
    %c0_21 = arith.constant 0 : index
    %c0_22 = arith.constant 0 : index
    %43 = vector.load %arg2[%c1, %c0_21, %c0_22] : memref<2x8x32xf32, #tpu.memory_space<vmem>>, vector<1x8x32xf32>
    %44 = vector.shape_cast %43 : vector<1x8x32xf32> to vector<8x32xf32>
    %45 = tpu.concatenate %42, %44 in 1 : vector<8x32xf32>, vector<8x32xf32> -> vector<8x64xf32>
    %c0_23 = arith.constant 0 : index
    %c0_24 = arith.constant 0 : index
    %c0_25 = arith.constant 0 : index
    %46 = vector.load %arg3[%c0_23, %c0_24, %c0_25] : memref<2x8x32xf32, #tpu.memory_space<vmem>>, vector<1x8x32xf32>
    %47 = vector.shape_cast %46 : vector<1x8x32xf32> to vector<8x32xf32>
    %c1_26 = arith.constant 1 : index
    %c0_27 = arith.constant 0 : index
    %c0_28 = arith.constant 0 : index
    %48 = vector.load %arg3[%c1_26, %c0_27, %c0_28] : memref<2x8x32xf32, #tpu.memory_space<vmem>>, vector<1x8x32xf32>
    %49 = vector.shape_cast %48 : vector<1x8x32xf32> to vector<8x32xf32>
    %50 = tpu.concatenate %47, %49 in 1 : vector<8x32xf32>, vector<8x32xf32> -> vector<8x64xf32>
    %c0_29 = arith.constant 0 : index
    %c0_30 = arith.constant 0 : index
    %c0_31 = arith.constant 0 : index
    %51 = vector.load %arg14[%c0_29, %c0_30, %c0_31] : memref<16x8x256xf32, #tpu.memory_space<vmem>>, vector<1x8x256xf32>
    %52 = vector.shape_cast %51 : vector<1x8x256xf32> to vector<8x256xf32>
    %c15 = arith.constant 15 : index
    %c0_32 = arith.constant 0 : index
    %c0_33 = arith.constant 0 : index
    %53 = vector.load %arg14[%c15, %c0_32, %c0_33] : memref<16x8x256xf32, #tpu.memory_space<vmem>>, vector<1x8x256xf32>
    %54 = vector.shape_cast %53 : vector<1x8x256xf32> to vector<8x256xf32>
    %55 = arith.select %40, %52, %54 : vector<8x256xi1>, vector<8x256xf32>
    %56 = arith.truncf %45 : vector<8x64xf32> to vector<8x64xbf16>
    %cst_34 = arith.constant dense<0.000000e+00> : vector<8x256xf32>
    %57 = tpu.matmul %56, %1, %cst_34 {dimension_numbers = #tpu.dot_dimension_numbers<[1], [0], [0], [1], [0, 0, 1, 1], [], []>} : vector<8x64xbf16>, vector<64x256xbf16>, vector<8x256xf32> -> vector<8x256xf32>
    %58 = arith.addf %55, %57 : vector<8x256xf32>
    %59 = arith.mulf %58, %19 : vector<8x256xf32>
    %60 = math.tanh %59 : vector<8x256xf32>
    %61 = arith.mulf %60, %19 : vector<8x256xf32>
    %62 = arith.addf %61, %22 : vector<8x256xf32>
    %63 = vector.extract_strided_slice %62 {offsets = [0, 0], sizes = [8, 64], strides = [1, 1]} : vector<8x256xf32> to vector<8x64xf32>
    %64 = vector.extract_strided_slice %62 {offsets = [0, 64], sizes = [8, 64], strides = [1, 1]} : vector<8x256xf32> to vector<8x64xf32>
    %65 = vector.extract_strided_slice %62 {offsets = [0, 128], sizes = [8, 64], strides = [1, 1]} : vector<8x256xf32> to vector<8x64xf32>
    %66 = vector.extract_strided_slice %62 {offsets = [0, 192], sizes = [8, 64], strides = [1, 1]} : vector<8x256xf32> to vector<8x64xf32>
    %67 = arith.mulf %64, %50 : vector<8x64xf32>
    %68 = arith.mulf %63, %65 : vector<8x64xf32>
    %69 = arith.addf %67, %68 : vector<8x64xf32>
    %70 = math.tanh %69 : vector<8x64xf32>
    %71 = arith.mulf %66, %70 : vector<8x64xf32>
    %c0_35 = arith.constant 0 : index
    %c0_36 = arith.constant 0 : index
    %c0_37 = arith.constant 0 : index
    %72 = vector.load %arg15[%c0_35, %c0_36, %c0_37] : memref<16x8x64xf32, #tpu.memory_space<vmem>>, vector<1x8x64xf32>
    %73 = vector.shape_cast %72 : vector<1x8x64xf32> to vector<8x64xf32>
    %74 = vector.shape_cast %71 : vector<8x64xf32> to vector<1x8x64xf32>
    tpu.vector_store %arg15[%c0_35, %c0_36, %c0_37], %74 {strides = array<i32>} : memref<16x8x64xf32, #tpu.memory_space<vmem>>, vector<1x8x64xf32>,
    %c1_38 = arith.constant 1 : index
    %c0_39 = arith.constant 0 : index
    %c0_40 = arith.constant 0 : index
    %75 = vector.load %arg14[%c1_38, %c0_39, %c0_40] : memref<16x8x256xf32, #tpu.memory_space<vmem>>, vector<1x8x256xf32>
    %76 = vector.shape_cast %75 : vector<1x8x256xf32> to vector<8x256xf32>
    %c14 = arith.constant 14 : index
    %c0_41 = arith.constant 0 : index
    %c0_42 = arith.constant 0 : index
    %77 = vector.load %arg14[%c14, %c0_41, %c0_42] : memref<16x8x256xf32, #tpu.memory_space<vmem>>, vector<1x8x256xf32>
    %78 = vector.shape_cast %77 : vector<1x8x256xf32> to vector<8x256xf32>
    %79 = arith.select %40, %76, %78 : vector<8x256xi1>, vector<8x256xf32>
    %80 = arith.truncf %71 : vector<8x64xf32> to vector<8x64xbf16>
    %cst_43 = arith.constant dense<0.000000e+00> : vector<8x256xf32>
    %81 = tpu.matmul %80, %1, %cst_43 {dimension_numbers = #tpu.dot_dimension_numbers<[1], [0], [0], [1], [0, 0, 1, 1], [], []>} : vector<8x64xbf16>, vector<64x256xbf16>, vector<8x256xf32> -> vector<8x256xf32>
    %82 = arith.addf %79, %81 : vector<8x256xf32>
    %83 = arith.mulf %82, %19 : vector<8x256xf32>
    %84 = math.tanh %83 : vector<8x256xf32>
    %85 = arith.mulf %84, %19 : vector<8x256xf32>
    %86 = arith.addf %85, %22 : vector<8x256xf32>
    %87 = vector.extract_strided_slice %86 {offsets = [0, 0], sizes = [8, 64], strides = [1, 1]} : vector<8x256xf32> to vector<8x64xf32>
    %88 = vector.extract_strided_slice %86 {offsets = [0, 64], sizes = [8, 64], strides = [1, 1]} : vector<8x256xf32> to vector<8x64xf32>
    %89 = vector.extract_strided_slice %86 {offsets = [0, 128], sizes = [8, 64], strides = [1, 1]} : vector<8x256xf32> to vector<8x64xf32>
    %90 = vector.extract_strided_slice %86 {offsets = [0, 192], sizes = [8, 64], strides = [1, 1]} : vector<8x256xf32> to vector<8x64xf32>
    %91 = arith.mulf %88, %69 : vector<8x64xf32>
    %92 = arith.mulf %87, %89 : vector<8x64xf32>
    %93 = arith.addf %91, %92 : vector<8x64xf32>
    %94 = math.tanh %93 : vector<8x64xf32>
    %95 = arith.mulf %90, %94 : vector<8x64xf32>
    %c1_44 = arith.constant 1 : index
    %c0_45 = arith.constant 0 : index
    %c0_46 = arith.constant 0 : index
    %96 = vector.load %arg15[%c1_44, %c0_45, %c0_46] : memref<16x8x64xf32, #tpu.memory_space<vmem>>, vector<1x8x64xf32>
    %97 = vector.shape_cast %96 : vector<1x8x64xf32> to vector<8x64xf32>
    %98 = vector.shape_cast %95 : vector<8x64xf32> to vector<1x8x64xf32>
    tpu.vector_store %arg15[%c1_44, %c0_45, %c0_46], %98 {strides = array<i32>} : memref<16x8x64xf32, #tpu.memory_space<vmem>>, vector<1x8x64xf32>,
    %c2 = arith.constant 2 : index
    %c0_47 = arith.constant 0 : index
    %c0_48 = arith.constant 0 : index
    %99 = vector.load %arg14[%c2, %c0_47, %c0_48] : memref<16x8x256xf32, #tpu.memory_space<vmem>>, vector<1x8x256xf32>
    %100 = vector.shape_cast %99 : vector<1x8x256xf32> to vector<8x256xf32>
    %c13 = arith.constant 13 : index
    %c0_49 = arith.constant 0 : index
    %c0_50 = arith.constant 0 : index
    %101 = vector.load %arg14[%c13, %c0_49, %c0_50] : memref<16x8x256xf32, #tpu.memory_space<vmem>>, vector<1x8x256xf32>
    %102 = vector.shape_cast %101 : vector<1x8x256xf32> to vector<8x256xf32>
    %103 = arith.select %40, %100, %102 : vector<8x256xi1>, vector<8x256xf32>
    %104 = arith.truncf %95 : vector<8x64xf32> to vector<8x64xbf16>
    %cst_51 = arith.constant dense<0.000000e+00> : vector<8x256xf32>
    %105 = tpu.matmul %104, %1, %cst_51 {dimension_numbers = #tpu.dot_dimension_numbers<[1], [0], [0], [1], [0, 0, 1, 1], [], []>} : vector<8x64xbf16>, vector<64x256xbf16>, vector<8x256xf32> -> vector<8x256xf32>
    %106 = arith.addf %103, %105 : vector<8x256xf32>
    %107 = arith.mulf %106, %19 : vector<8x256xf32>
    %108 = math.tanh %107 : vector<8x256xf32>
    %109 = arith.mulf %108, %19 : vector<8x256xf32>
    %110 = arith.addf %109, %22 : vector<8x256xf32>
    %111 = vector.extract_strided_slice %110 {offsets = [0, 0], sizes = [8, 64], strides = [1, 1]} : vector<8x256xf32> to vector<8x64xf32>
    %112 = vector.extract_strided_slice %110 {offsets = [0, 64], sizes = [8, 64], strides = [1, 1]} : vector<8x256xf32> to vector<8x64xf32>
    %113 = vector.extract_strided_slice %110 {offsets = [0, 128], sizes = [8, 64], strides = [1, 1]} : vector<8x256xf32> to vector<8x64xf32>
    %114 = vector.extract_strided_slice %110 {offsets = [0, 192], sizes = [8, 64], strides = [1, 1]} : vector<8x256xf32> to vector<8x64xf32>
    %115 = arith.mulf %112, %93 : vector<8x64xf32>
    %116 = arith.mulf %111, %113 : vector<8x64xf32>
    %117 = arith.addf %115, %116 : vector<8x64xf32>
    %118 = math.tanh %117 : vector<8x64xf32>
    %119 = arith.mulf %114, %118 : vector<8x64xf32>
    %c2_52 = arith.constant 2 : index
    %c0_53 = arith.constant 0 : index
    %c0_54 = arith.constant 0 : index
    %120 = vector.load %arg15[%c2_52, %c0_53, %c0_54] : memref<16x8x64xf32, #tpu.memory_space<vmem>>, vector<1x8x64xf32>
    %121 = vector.shape_cast %120 : vector<1x8x64xf32> to vector<8x64xf32>
    %122 = vector.shape_cast %119 : vector<8x64xf32> to vector<1x8x64xf32>
    tpu.vector_store %arg15[%c2_52, %c0_53, %c0_54], %122 {strides = array<i32>} : memref<16x8x64xf32, #tpu.memory_space<vmem>>, vector<1x8x64xf32>,
    %c3 = arith.constant 3 : index
    %c0_55 = arith.constant 0 : index
    %c0_56 = arith.constant 0 : index
    %123 = vector.load %arg14[%c3, %c0_55, %c0_56] : memref<16x8x256xf32, #tpu.memory_space<vmem>>, vector<1x8x256xf32>
    %124 = vector.shape_cast %123 : vector<1x8x256xf32> to vector<8x256xf32>
    %c12 = arith.constant 12 : index
    %c0_57 = arith.constant 0 : index
    %c0_58 = arith.constant 0 : index
    %125 = vector.load %arg14[%c12, %c0_57, %c0_58] : memref<16x8x256xf32, #tpu.memory_space<vmem>>, vector<1x8x256xf32>
    %126 = vector.shape_cast %125 : vector<1x8x256xf32> to vector<8x256xf32>
    %127 = arith.select %40, %124, %126 : vector<8x256xi1>, vector<8x256xf32>
    %128 = arith.truncf %119 : vector<8x64xf32> to vector<8x64xbf16>
    %cst_59 = arith.constant dense<0.000000e+00> : vector<8x256xf32>
    %129 = tpu.matmul %128, %1, %cst_59 {dimension_numbers = #tpu.dot_dimension_numbers<[1], [0], [0], [1], [0, 0, 1, 1], [], []>} : vector<8x64xbf16>, vector<64x256xbf16>, vector<8x256xf32> -> vector<8x256xf32>
    %130 = arith.addf %127, %129 : vector<8x256xf32>
    %131 = arith.mulf %130, %19 : vector<8x256xf32>
    %132 = math.tanh %131 : vector<8x256xf32>
    %133 = arith.mulf %132, %19 : vector<8x256xf32>
    %134 = arith.addf %133, %22 : vector<8x256xf32>
    %135 = vector.extract_strided_slice %134 {offsets = [0, 0], sizes = [8, 64], strides = [1, 1]} : vector<8x256xf32> to vector<8x64xf32>
    %136 = vector.extract_strided_slice %134 {offsets = [0, 64], sizes = [8, 64], strides = [1, 1]} : vector<8x256xf32> to vector<8x64xf32>
    %137 = vector.extract_strided_slice %134 {offsets = [0, 128], sizes = [8, 64], strides = [1, 1]} : vector<8x256xf32> to vector<8x64xf32>
    %138 = vector.extract_strided_slice %134 {offsets = [0, 192], sizes = [8, 64], strides = [1, 1]} : vector<8x256xf32> to vector<8x64xf32>
    %139 = arith.mulf %136, %117 : vector<8x64xf32>
    %140 = arith.mulf %135, %137 : vector<8x64xf32>
    %141 = arith.addf %139, %140 : vector<8x64xf32>
    %142 = math.tanh %141 : vector<8x64xf32>
    %143 = arith.mulf %138, %142 : vector<8x64xf32>
    %c3_60 = arith.constant 3 : index
    %c0_61 = arith.constant 0 : index
    %c0_62 = arith.constant 0 : index
    %144 = vector.load %arg15[%c3_60, %c0_61, %c0_62] : memref<16x8x64xf32, #tpu.memory_space<vmem>>, vector<1x8x64xf32>
    %145 = vector.shape_cast %144 : vector<1x8x64xf32> to vector<8x64xf32>
    %146 = vector.shape_cast %143 : vector<8x64xf32> to vector<1x8x64xf32>
    tpu.vector_store %arg15[%c3_60, %c0_61, %c0_62], %146 {strides = array<i32>} : memref<16x8x64xf32, #tpu.memory_space<vmem>>, vector<1x8x64xf32>,
    %c4 = arith.constant 4 : index
    %c0_63 = arith.constant 0 : index
    %c0_64 = arith.constant 0 : index
    %147 = vector.load %arg14[%c4, %c0_63, %c0_64] : memref<16x8x256xf32, #tpu.memory_space<vmem>>, vector<1x8x256xf32>
    %148 = vector.shape_cast %147 : vector<1x8x256xf32> to vector<8x256xf32>
    %c11 = arith.constant 11 : index
    %c0_65 = arith.constant 0 : index
    %c0_66 = arith.constant 0 : index
    %149 = vector.load %arg14[%c11, %c0_65, %c0_66] : memref<16x8x256xf32, #tpu.memory_space<vmem>>, vector<1x8x256xf32>
    %150 = vector.shape_cast %149 : vector<1x8x256xf32> to vector<8x256xf32>
    %151 = arith.select %40, %148, %150 : vector<8x256xi1>, vector<8x256xf32>
    %152 = arith.truncf %143 : vector<8x64xf32> to vector<8x64xbf16>
    %cst_67 = arith.constant dense<0.000000e+00> : vector<8x256xf32>
    %153 = tpu.matmul %152, %1, %cst_67 {dimension_numbers = #tpu.dot_dimension_numbers<[1], [0], [0], [1], [0, 0, 1, 1], [], []>} : vector<8x64xbf16>, vector<64x256xbf16>, vector<8x256xf32> -> vector<8x256xf32>
    %154 = arith.addf %151, %153 : vector<8x256xf32>
    %155 = arith.mulf %154, %19 : vector<8x256xf32>
    %156 = math.tanh %155 : vector<8x256xf32>
    %157 = arith.mulf %156, %19 : vector<8x256xf32>
    %158 = arith.addf %157, %22 : vector<8x256xf32>
    %159 = vector.extract_strided_slice %158 {offsets = [0, 0], sizes = [8, 64], strides = [1, 1]} : vector<8x256xf32> to vector<8x64xf32>
    %160 = vector.extract_strided_slice %158 {offsets = [0, 64], sizes = [8, 64], strides = [1, 1]} : vector<8x256xf32> to vector<8x64xf32>
    %161 = vector.extract_strided_slice %158 {offsets = [0, 128], sizes = [8, 64], strides = [1, 1]} : vector<8x256xf32> to vector<8x64xf32>
    %162 = vector.extract_strided_slice %158 {offsets = [0, 192], sizes = [8, 64], strides = [1, 1]} : vector<8x256xf32> to vector<8x64xf32>
    %163 = arith.mulf %160, %141 : vector<8x64xf32>
    %164 = arith.mulf %159, %161 : vector<8x64xf32>
    %165 = arith.addf %163, %164 : vector<8x64xf32>
    %166 = math.tanh %165 : vector<8x64xf32>
    %167 = arith.mulf %162, %166 : vector<8x64xf32>
    %c4_68 = arith.constant 4 : index
    %c0_69 = arith.constant 0 : index
    %c0_70 = arith.constant 0 : index
    %168 = vector.load %arg15[%c4_68, %c0_69, %c0_70] : memref<16x8x64xf32, #tpu.memory_space<vmem>>, vector<1x8x64xf32>
    %169 = vector.shape_cast %168 : vector<1x8x64xf32> to vector<8x64xf32>
    %170 = vector.shape_cast %167 : vector<8x64xf32> to vector<1x8x64xf32>
    tpu.vector_store %arg15[%c4_68, %c0_69, %c0_70], %170 {strides = array<i32>} : memref<16x8x64xf32, #tpu.memory_space<vmem>>, vector<1x8x64xf32>,
    %c5 = arith.constant 5 : index
    %c0_71 = arith.constant 0 : index
    %c0_72 = arith.constant 0 : index
    %171 = vector.load %arg14[%c5, %c0_71, %c0_72] : memref<16x8x256xf32, #tpu.memory_space<vmem>>, vector<1x8x256xf32>
    %172 = vector.shape_cast %171 : vector<1x8x256xf32> to vector<8x256xf32>
    %c10 = arith.constant 10 : index
    %c0_73 = arith.constant 0 : index
    %c0_74 = arith.constant 0 : index
    %173 = vector.load %arg14[%c10, %c0_73, %c0_74] : memref<16x8x256xf32, #tpu.memory_space<vmem>>, vector<1x8x256xf32>
    %174 = vector.shape_cast %173 : vector<1x8x256xf32> to vector<8x256xf32>
    %175 = arith.select %40, %172, %174 : vector<8x256xi1>, vector<8x256xf32>
    %176 = arith.truncf %167 : vector<8x64xf32> to vector<8x64xbf16>
    %cst_75 = arith.constant dense<0.000000e+00> : vector<8x256xf32>
    %177 = tpu.matmul %176, %1, %cst_75 {dimension_numbers = #tpu.dot_dimension_numbers<[1], [0], [0], [1], [0, 0, 1, 1], [], []>} : vector<8x64xbf16>, vector<64x256xbf16>, vector<8x256xf32> -> vector<8x256xf32>
    %178 = arith.addf %175, %177 : vector<8x256xf32>
    %179 = arith.mulf %178, %19 : vector<8x256xf32>
    %180 = math.tanh %179 : vector<8x256xf32>
    %181 = arith.mulf %180, %19 : vector<8x256xf32>
    %182 = arith.addf %181, %22 : vector<8x256xf32>
    %183 = vector.extract_strided_slice %182 {offsets = [0, 0], sizes = [8, 64], strides = [1, 1]} : vector<8x256xf32> to vector<8x64xf32>
    %184 = vector.extract_strided_slice %182 {offsets = [0, 64], sizes = [8, 64], strides = [1, 1]} : vector<8x256xf32> to vector<8x64xf32>
    %185 = vector.extract_strided_slice %182 {offsets = [0, 128], sizes = [8, 64], strides = [1, 1]} : vector<8x256xf32> to vector<8x64xf32>
    %186 = vector.extract_strided_slice %182 {offsets = [0, 192], sizes = [8, 64], strides = [1, 1]} : vector<8x256xf32> to vector<8x64xf32>
    %187 = arith.mulf %184, %165 : vector<8x64xf32>
    %188 = arith.mulf %183, %185 : vector<8x64xf32>
    %189 = arith.addf %187, %188 : vector<8x64xf32>
    %190 = math.tanh %189 : vector<8x64xf32>
    %191 = arith.mulf %186, %190 : vector<8x64xf32>
    %c5_76 = arith.constant 5 : index
    %c0_77 = arith.constant 0 : index
    %c0_78 = arith.constant 0 : index
    %192 = vector.load %arg15[%c5_76, %c0_77, %c0_78] : memref<16x8x64xf32, #tpu.memory_space<vmem>>, vector<1x8x64xf32>
    %193 = vector.shape_cast %192 : vector<1x8x64xf32> to vector<8x64xf32>
    %194 = vector.shape_cast %191 : vector<8x64xf32> to vector<1x8x64xf32>
    tpu.vector_store %arg15[%c5_76, %c0_77, %c0_78], %194 {strides = array<i32>} : memref<16x8x64xf32, #tpu.memory_space<vmem>>, vector<1x8x64xf32>,
    %c6 = arith.constant 6 : index
    %c0_79 = arith.constant 0 : index
    %c0_80 = arith.constant 0 : index
    %195 = vector.load %arg14[%c6, %c0_79, %c0_80] : memref<16x8x256xf32, #tpu.memory_space<vmem>>, vector<1x8x256xf32>
    %196 = vector.shape_cast %195 : vector<1x8x256xf32> to vector<8x256xf32>
    %c9 = arith.constant 9 : index
    %c0_81 = arith.constant 0 : index
    %c0_82 = arith.constant 0 : index
    %197 = vector.load %arg14[%c9, %c0_81, %c0_82] : memref<16x8x256xf32, #tpu.memory_space<vmem>>, vector<1x8x256xf32>
    %198 = vector.shape_cast %197 : vector<1x8x256xf32> to vector<8x256xf32>
    %199 = arith.select %40, %196, %198 : vector<8x256xi1>, vector<8x256xf32>
    %200 = arith.truncf %191 : vector<8x64xf32> to vector<8x64xbf16>
    %cst_83 = arith.constant dense<0.000000e+00> : vector<8x256xf32>
    %201 = tpu.matmul %200, %1, %cst_83 {dimension_numbers = #tpu.dot_dimension_numbers<[1], [0], [0], [1], [0, 0, 1, 1], [], []>} : vector<8x64xbf16>, vector<64x256xbf16>, vector<8x256xf32> -> vector<8x256xf32>
    %202 = arith.addf %199, %201 : vector<8x256xf32>
    %203 = arith.mulf %202, %19 : vector<8x256xf32>
    %204 = math.tanh %203 : vector<8x256xf32>
    %205 = arith.mulf %204, %19 : vector<8x256xf32>
    %206 = arith.addf %205, %22 : vector<8x256xf32>
    %207 = vector.extract_strided_slice %206 {offsets = [0, 0], sizes = [8, 64], strides = [1, 1]} : vector<8x256xf32> to vector<8x64xf32>
    %208 = vector.extract_strided_slice %206 {offsets = [0, 64], sizes = [8, 64], strides = [1, 1]} : vector<8x256xf32> to vector<8x64xf32>
    %209 = vector.extract_strided_slice %206 {offsets = [0, 128], sizes = [8, 64], strides = [1, 1]} : vector<8x256xf32> to vector<8x64xf32>
    %210 = vector.extract_strided_slice %206 {offsets = [0, 192], sizes = [8, 64], strides = [1, 1]} : vector<8x256xf32> to vector<8x64xf32>
    %211 = arith.mulf %208, %189 : vector<8x64xf32>
    %212 = arith.mulf %207, %209 : vector<8x64xf32>
    %213 = arith.addf %211, %212 : vector<8x64xf32>
    %214 = math.tanh %213 : vector<8x64xf32>
    %215 = arith.mulf %210, %214 : vector<8x64xf32>
    %c6_84 = arith.constant 6 : index
    %c0_85 = arith.constant 0 : index
    %c0_86 = arith.constant 0 : index
    %216 = vector.load %arg15[%c6_84, %c0_85, %c0_86] : memref<16x8x64xf32, #tpu.memory_space<vmem>>, vector<1x8x64xf32>
    %217 = vector.shape_cast %216 : vector<1x8x64xf32> to vector<8x64xf32>
    %218 = vector.shape_cast %215 : vector<8x64xf32> to vector<1x8x64xf32>
    tpu.vector_store %arg15[%c6_84, %c0_85, %c0_86], %218 {strides = array<i32>} : memref<16x8x64xf32, #tpu.memory_space<vmem>>, vector<1x8x64xf32>,
    %c7 = arith.constant 7 : index
    %c0_87 = arith.constant 0 : index
    %c0_88 = arith.constant 0 : index
    %219 = vector.load %arg14[%c7, %c0_87, %c0_88] : memref<16x8x256xf32, #tpu.memory_space<vmem>>, vector<1x8x256xf32>
    %220 = vector.shape_cast %219 : vector<1x8x256xf32> to vector<8x256xf32>
    %c8 = arith.constant 8 : index
    %c0_89 = arith.constant 0 : index
    %c0_90 = arith.constant 0 : index
    %221 = vector.load %arg14[%c8, %c0_89, %c0_90] : memref<16x8x256xf32, #tpu.memory_space<vmem>>, vector<1x8x256xf32>
    %222 = vector.shape_cast %221 : vector<1x8x256xf32> to vector<8x256xf32>
    %223 = arith.select %40, %220, %222 : vector<8x256xi1>, vector<8x256xf32>
    %224 = arith.truncf %215 : vector<8x64xf32> to vector<8x64xbf16>
    %cst_91 = arith.constant dense<0.000000e+00> : vector<8x256xf32>
    %225 = tpu.matmul %224, %1, %cst_91 {dimension_numbers = #tpu.dot_dimension_numbers<[1], [0], [0], [1], [0, 0, 1, 1], [], []>} : vector<8x64xbf16>, vector<64x256xbf16>, vector<8x256xf32> -> vector<8x256xf32>
    %226 = arith.addf %223, %225 : vector<8x256xf32>
    %227 = arith.mulf %226, %19 : vector<8x256xf32>
    %228 = math.tanh %227 : vector<8x256xf32>
    %229 = arith.mulf %228, %19 : vector<8x256xf32>
    %230 = arith.addf %229, %22 : vector<8x256xf32>
    %231 = vector.extract_strided_slice %230 {offsets = [0, 0], sizes = [8, 64], strides = [1, 1]} : vector<8x256xf32> to vector<8x64xf32>
    %232 = vector.extract_strided_slice %230 {offsets = [0, 64], sizes = [8, 64], strides = [1, 1]} : vector<8x256xf32> to vector<8x64xf32>
    %233 = vector.extract_strided_slice %230 {offsets = [0, 128], sizes = [8, 64], strides = [1, 1]} : vector<8x256xf32> to vector<8x64xf32>
    %234 = vector.extract_strided_slice %230 {offsets = [0, 192], sizes = [8, 64], strides = [1, 1]} : vector<8x256xf32> to vector<8x64xf32>
    %235 = arith.mulf %232, %213 : vector<8x64xf32>
    %236 = arith.mulf %231, %233 : vector<8x64xf32>
    %237 = arith.addf %235, %236 : vector<8x64xf32>
    %238 = math.tanh %237 : vector<8x64xf32>
    %239 = arith.mulf %234, %238 : vector<8x64xf32>
    %c7_92 = arith.constant 7 : index
    %c0_93 = arith.constant 0 : index
    %c0_94 = arith.constant 0 : index
    %240 = vector.load %arg15[%c7_92, %c0_93, %c0_94] : memref<16x8x64xf32, #tpu.memory_space<vmem>>, vector<1x8x64xf32>
    %241 = vector.shape_cast %240 : vector<1x8x64xf32> to vector<8x64xf32>
    %242 = vector.shape_cast %239 : vector<8x64xf32> to vector<1x8x64xf32>
    tpu.vector_store %arg15[%c7_92, %c0_93, %c0_94], %242 {strides = array<i32>} : memref<16x8x64xf32, #tpu.memory_space<vmem>>, vector<1x8x64xf32>,
    %c8_95 = arith.constant 8 : index
    %c0_96 = arith.constant 0 : index
    %c0_97 = arith.constant 0 : index
    %243 = vector.load %arg14[%c8_95, %c0_96, %c0_97] : memref<16x8x256xf32, #tpu.memory_space<vmem>>, vector<1x8x256xf32>
    %244 = vector.shape_cast %243 : vector<1x8x256xf32> to vector<8x256xf32>
    %c7_98 = arith.constant 7 : index
    %c0_99 = arith.constant 0 : index
    %c0_100 = arith.constant 0 : index
    %245 = vector.load %arg14[%c7_98, %c0_99, %c0_100] : memref<16x8x256xf32, #tpu.memory_space<vmem>>, vector<1x8x256xf32>
    %246 = vector.shape_cast %245 : vector<1x8x256xf32> to vector<8x256xf32>
    %247 = arith.select %40, %244, %246 : vector<8x256xi1>, vector<8x256xf32>
    %248 = arith.truncf %239 : vector<8x64xf32> to vector<8x64xbf16>
    %cst_101 = arith.constant dense<0.000000e+00> : vector<8x256xf32>
    %249 = tpu.matmul %248, %1, %cst_101 {dimension_numbers = #tpu.dot_dimension_numbers<[1], [0], [0], [1], [0, 0, 1, 1], [], []>} : vector<8x64xbf16>, vector<64x256xbf16>, vector<8x256xf32> -> vector<8x256xf32>
    %250 = arith.addf %247, %249 : vector<8x256xf32>
    %251 = arith.mulf %250, %19 : vector<8x256xf32>
    %252 = math.tanh %251 : vector<8x256xf32>
    %253 = arith.mulf %252, %19 : vector<8x256xf32>
    %254 = arith.addf %253, %22 : vector<8x256xf32>
    %255 = vector.extract_strided_slice %254 {offsets = [0, 0], sizes = [8, 64], strides = [1, 1]} : vector<8x256xf32> to vector<8x64xf32>
    %256 = vector.extract_strided_slice %254 {offsets = [0, 64], sizes = [8, 64], strides = [1, 1]} : vector<8x256xf32> to vector<8x64xf32>
    %257 = vector.extract_strided_slice %254 {offsets = [0, 128], sizes = [8, 64], strides = [1, 1]} : vector<8x256xf32> to vector<8x64xf32>
    %258 = vector.extract_strided_slice %254 {offsets = [0, 192], sizes = [8, 64], strides = [1, 1]} : vector<8x256xf32> to vector<8x64xf32>
    %259 = arith.mulf %256, %237 : vector<8x64xf32>
    %260 = arith.mulf %255, %257 : vector<8x64xf32>
    %261 = arith.addf %259, %260 : vector<8x64xf32>
    %262 = math.tanh %261 : vector<8x64xf32>
    %263 = arith.mulf %258, %262 : vector<8x64xf32>
    %c8_102 = arith.constant 8 : index
    %c0_103 = arith.constant 0 : index
    %c0_104 = arith.constant 0 : index
    %264 = vector.load %arg15[%c8_102, %c0_103, %c0_104] : memref<16x8x64xf32, #tpu.memory_space<vmem>>, vector<1x8x64xf32>
    %265 = vector.shape_cast %264 : vector<1x8x64xf32> to vector<8x64xf32>
    %266 = vector.shape_cast %263 : vector<8x64xf32> to vector<1x8x64xf32>
    tpu.vector_store %arg15[%c8_102, %c0_103, %c0_104], %266 {strides = array<i32>} : memref<16x8x64xf32, #tpu.memory_space<vmem>>, vector<1x8x64xf32>,
    %c9_105 = arith.constant 9 : index
    %c0_106 = arith.constant 0 : index
    %c0_107 = arith.constant 0 : index
    %267 = vector.load %arg14[%c9_105, %c0_106, %c0_107] : memref<16x8x256xf32, #tpu.memory_space<vmem>>, vector<1x8x256xf32>
    %268 = vector.shape_cast %267 : vector<1x8x256xf32> to vector<8x256xf32>
    %c6_108 = arith.constant 6 : index
    %c0_109 = arith.constant 0 : index
    %c0_110 = arith.constant 0 : index
    %269 = vector.load %arg14[%c6_108, %c0_109, %c0_110] : memref<16x8x256xf32, #tpu.memory_space<vmem>>, vector<1x8x256xf32>
    %270 = vector.shape_cast %269 : vector<1x8x256xf32> to vector<8x256xf32>
    %271 = arith.select %40, %268, %270 : vector<8x256xi1>, vector<8x256xf32>
    %272 = arith.truncf %263 : vector<8x64xf32> to vector<8x64xbf16>
    %cst_111 = arith.constant dense<0.000000e+00> : vector<8x256xf32>
    %273 = tpu.matmul %272, %1, %cst_111 {dimension_numbers = #tpu.dot_dimension_numbers<[1], [0], [0], [1], [0, 0, 1, 1], [], []>} : vector<8x64xbf16>, vector<64x256xbf16>, vector<8x256xf32> -> vector<8x256xf32>
    %274 = arith.addf %271, %273 : vector<8x256xf32>
    %275 = arith.mulf %274, %19 : vector<8x256xf32>
    %276 = math.tanh %275 : vector<8x256xf32>
    %277 = arith.mulf %276, %19 : vector<8x256xf32>
    %278 = arith.addf %277, %22 : vector<8x256xf32>
    %279 = vector.extract_strided_slice %278 {offsets = [0, 0], sizes = [8, 64], strides = [1, 1]} : vector<8x256xf32> to vector<8x64xf32>
    %280 = vector.extract_strided_slice %278 {offsets = [0, 64], sizes = [8, 64], strides = [1, 1]} : vector<8x256xf32> to vector<8x64xf32>
    %281 = vector.extract_strided_slice %278 {offsets = [0, 128], sizes = [8, 64], strides = [1, 1]} : vector<8x256xf32> to vector<8x64xf32>
    %282 = vector.extract_strided_slice %278 {offsets = [0, 192], sizes = [8, 64], strides = [1, 1]} : vector<8x256xf32> to vector<8x64xf32>
    %283 = arith.mulf %280, %261 : vector<8x64xf32>
    %284 = arith.mulf %279, %281 : vector<8x64xf32>
    %285 = arith.addf %283, %284 : vector<8x64xf32>
    %286 = math.tanh %285 : vector<8x64xf32>
    %287 = arith.mulf %282, %286 : vector<8x64xf32>
    %c9_112 = arith.constant 9 : index
    %c0_113 = arith.constant 0 : index
    %c0_114 = arith.constant 0 : index
    %288 = vector.load %arg15[%c9_112, %c0_113, %c0_114] : memref<16x8x64xf32, #tpu.memory_space<vmem>>, vector<1x8x64xf32>
    %289 = vector.shape_cast %288 : vector<1x8x64xf32> to vector<8x64xf32>
    %290 = vector.shape_cast %287 : vector<8x64xf32> to vector<1x8x64xf32>
    tpu.vector_store %arg15[%c9_112, %c0_113, %c0_114], %290 {strides = array<i32>} : memref<16x8x64xf32, #tpu.memory_space<vmem>>, vector<1x8x64xf32>,
    %c10_115 = arith.constant 10 : index
    %c0_116 = arith.constant 0 : index
    %c0_117 = arith.constant 0 : index
    %291 = vector.load %arg14[%c10_115, %c0_116, %c0_117] : memref<16x8x256xf32, #tpu.memory_space<vmem>>, vector<1x8x256xf32>
    %292 = vector.shape_cast %291 : vector<1x8x256xf32> to vector<8x256xf32>
    %c5_118 = arith.constant 5 : index
    %c0_119 = arith.constant 0 : index
    %c0_120 = arith.constant 0 : index
    %293 = vector.load %arg14[%c5_118, %c0_119, %c0_120] : memref<16x8x256xf32, #tpu.memory_space<vmem>>, vector<1x8x256xf32>
    %294 = vector.shape_cast %293 : vector<1x8x256xf32> to vector<8x256xf32>
    %295 = arith.select %40, %292, %294 : vector<8x256xi1>, vector<8x256xf32>
    %296 = arith.truncf %287 : vector<8x64xf32> to vector<8x64xbf16>
    %cst_121 = arith.constant dense<0.000000e+00> : vector<8x256xf32>
    %297 = tpu.matmul %296, %1, %cst_121 {dimension_numbers = #tpu.dot_dimension_numbers<[1], [0], [0], [1], [0, 0, 1, 1], [], []>} : vector<8x64xbf16>, vector<64x256xbf16>, vector<8x256xf32> -> vector<8x256xf32>
    %298 = arith.addf %295, %297 : vector<8x256xf32>
    %299 = arith.mulf %298, %19 : vector<8x256xf32>
    %300 = math.tanh %299 : vector<8x256xf32>
    %301 = arith.mulf %300, %19 : vector<8x256xf32>
    %302 = arith.addf %301, %22 : vector<8x256xf32>
    %303 = vector.extract_strided_slice %302 {offsets = [0, 0], sizes = [8, 64], strides = [1, 1]} : vector<8x256xf32> to vector<8x64xf32>
    %304 = vector.extract_strided_slice %302 {offsets = [0, 64], sizes = [8, 64], strides = [1, 1]} : vector<8x256xf32> to vector<8x64xf32>
    %305 = vector.extract_strided_slice %302 {offsets = [0, 128], sizes = [8, 64], strides = [1, 1]} : vector<8x256xf32> to vector<8x64xf32>
    %306 = vector.extract_strided_slice %302 {offsets = [0, 192], sizes = [8, 64], strides = [1, 1]} : vector<8x256xf32> to vector<8x64xf32>
    %307 = arith.mulf %304, %285 : vector<8x64xf32>
    %308 = arith.mulf %303, %305 : vector<8x64xf32>
    %309 = arith.addf %307, %308 : vector<8x64xf32>
    %310 = math.tanh %309 : vector<8x64xf32>
    %311 = arith.mulf %306, %310 : vector<8x64xf32>
    %c10_122 = arith.constant 10 : index
    %c0_123 = arith.constant 0 : index
    %c0_124 = arith.constant 0 : index
    %312 = vector.load %arg15[%c10_122, %c0_123, %c0_124] : memref<16x8x64xf32, #tpu.memory_space<vmem>>, vector<1x8x64xf32>
    %313 = vector.shape_cast %312 : vector<1x8x64xf32> to vector<8x64xf32>
    %314 = vector.shape_cast %311 : vector<8x64xf32> to vector<1x8x64xf32>
    tpu.vector_store %arg15[%c10_122, %c0_123, %c0_124], %314 {strides = array<i32>} : memref<16x8x64xf32, #tpu.memory_space<vmem>>, vector<1x8x64xf32>,
    %c11_125 = arith.constant 11 : index
    %c0_126 = arith.constant 0 : index
    %c0_127 = arith.constant 0 : index
    %315 = vector.load %arg14[%c11_125, %c0_126, %c0_127] : memref<16x8x256xf32, #tpu.memory_space<vmem>>, vector<1x8x256xf32>
    %316 = vector.shape_cast %315 : vector<1x8x256xf32> to vector<8x256xf32>
    %c4_128 = arith.constant 4 : index
    %c0_129 = arith.constant 0 : index
    %c0_130 = arith.constant 0 : index
    %317 = vector.load %arg14[%c4_128, %c0_129, %c0_130] : memref<16x8x256xf32, #tpu.memory_space<vmem>>, vector<1x8x256xf32>
    %318 = vector.shape_cast %317 : vector<1x8x256xf32> to vector<8x256xf32>
    %319 = arith.select %40, %316, %318 : vector<8x256xi1>, vector<8x256xf32>
    %320 = arith.truncf %311 : vector<8x64xf32> to vector<8x64xbf16>
    %cst_131 = arith.constant dense<0.000000e+00> : vector<8x256xf32>
    %321 = tpu.matmul %320, %1, %cst_131 {dimension_numbers = #tpu.dot_dimension_numbers<[1], [0], [0], [1], [0, 0, 1, 1], [], []>} : vector<8x64xbf16>, vector<64x256xbf16>, vector<8x256xf32> -> vector<8x256xf32>
    %322 = arith.addf %319, %321 : vector<8x256xf32>
    %323 = arith.mulf %322, %19 : vector<8x256xf32>
    %324 = math.tanh %323 : vector<8x256xf32>
    %325 = arith.mulf %324, %19 : vector<8x256xf32>
    %326 = arith.addf %325, %22 : vector<8x256xf32>
    %327 = vector.extract_strided_slice %326 {offsets = [0, 0], sizes = [8, 64], strides = [1, 1]} : vector<8x256xf32> to vector<8x64xf32>
    %328 = vector.extract_strided_slice %326 {offsets = [0, 64], sizes = [8, 64], strides = [1, 1]} : vector<8x256xf32> to vector<8x64xf32>
    %329 = vector.extract_strided_slice %326 {offsets = [0, 128], sizes = [8, 64], strides = [1, 1]} : vector<8x256xf32> to vector<8x64xf32>
    %330 = vector.extract_strided_slice %326 {offsets = [0, 192], sizes = [8, 64], strides = [1, 1]} : vector<8x256xf32> to vector<8x64xf32>
    %331 = arith.mulf %328, %309 : vector<8x64xf32>
    %332 = arith.mulf %327, %329 : vector<8x64xf32>
    %333 = arith.addf %331, %332 : vector<8x64xf32>
    %334 = math.tanh %333 : vector<8x64xf32>
    %335 = arith.mulf %330, %334 : vector<8x64xf32>
    %c11_132 = arith.constant 11 : index
    %c0_133 = arith.constant 0 : index
    %c0_134 = arith.constant 0 : index
    %336 = vector.load %arg15[%c11_132, %c0_133, %c0_134] : memref<16x8x64xf32, #tpu.memory_space<vmem>>, vector<1x8x64xf32>
    %337 = vector.shape_cast %336 : vector<1x8x64xf32> to vector<8x64xf32>
    %338 = vector.shape_cast %335 : vector<8x64xf32> to vector<1x8x64xf32>
    tpu.vector_store %arg15[%c11_132, %c0_133, %c0_134], %338 {strides = array<i32>} : memref<16x8x64xf32, #tpu.memory_space<vmem>>, vector<1x8x64xf32>,
    %c12_135 = arith.constant 12 : index
    %c0_136 = arith.constant 0 : index
    %c0_137 = arith.constant 0 : index
    %339 = vector.load %arg14[%c12_135, %c0_136, %c0_137] : memref<16x8x256xf32, #tpu.memory_space<vmem>>, vector<1x8x256xf32>
    %340 = vector.shape_cast %339 : vector<1x8x256xf32> to vector<8x256xf32>
    %c3_138 = arith.constant 3 : index
    %c0_139 = arith.constant 0 : index
    %c0_140 = arith.constant 0 : index
    %341 = vector.load %arg14[%c3_138, %c0_139, %c0_140] : memref<16x8x256xf32, #tpu.memory_space<vmem>>, vector<1x8x256xf32>
    %342 = vector.shape_cast %341 : vector<1x8x256xf32> to vector<8x256xf32>
    %343 = arith.select %40, %340, %342 : vector<8x256xi1>, vector<8x256xf32>
    %344 = arith.truncf %335 : vector<8x64xf32> to vector<8x64xbf16>
    %cst_141 = arith.constant dense<0.000000e+00> : vector<8x256xf32>
    %345 = tpu.matmul %344, %1, %cst_141 {dimension_numbers = #tpu.dot_dimension_numbers<[1], [0], [0], [1], [0, 0, 1, 1], [], []>} : vector<8x64xbf16>, vector<64x256xbf16>, vector<8x256xf32> -> vector<8x256xf32>
    %346 = arith.addf %343, %345 : vector<8x256xf32>
    %347 = arith.mulf %346, %19 : vector<8x256xf32>
    %348 = math.tanh %347 : vector<8x256xf32>
    %349 = arith.mulf %348, %19 : vector<8x256xf32>
    %350 = arith.addf %349, %22 : vector<8x256xf32>
    %351 = vector.extract_strided_slice %350 {offsets = [0, 0], sizes = [8, 64], strides = [1, 1]} : vector<8x256xf32> to vector<8x64xf32>
    %352 = vector.extract_strided_slice %350 {offsets = [0, 64], sizes = [8, 64], strides = [1, 1]} : vector<8x256xf32> to vector<8x64xf32>
    %353 = vector.extract_strided_slice %350 {offsets = [0, 128], sizes = [8, 64], strides = [1, 1]} : vector<8x256xf32> to vector<8x64xf32>
    %354 = vector.extract_strided_slice %350 {offsets = [0, 192], sizes = [8, 64], strides = [1, 1]} : vector<8x256xf32> to vector<8x64xf32>
    %355 = arith.mulf %352, %333 : vector<8x64xf32>
    %356 = arith.mulf %351, %353 : vector<8x64xf32>
    %357 = arith.addf %355, %356 : vector<8x64xf32>
    %358 = math.tanh %357 : vector<8x64xf32>
    %359 = arith.mulf %354, %358 : vector<8x64xf32>
    %c12_142 = arith.constant 12 : index
    %c0_143 = arith.constant 0 : index
    %c0_144 = arith.constant 0 : index
    %360 = vector.load %arg15[%c12_142, %c0_143, %c0_144] : memref<16x8x64xf32, #tpu.memory_space<vmem>>, vector<1x8x64xf32>
    %361 = vector.shape_cast %360 : vector<1x8x64xf32> to vector<8x64xf32>
    %362 = vector.shape_cast %359 : vector<8x64xf32> to vector<1x8x64xf32>
    tpu.vector_store %arg15[%c12_142, %c0_143, %c0_144], %362 {strides = array<i32>} : memref<16x8x64xf32, #tpu.memory_space<vmem>>, vector<1x8x64xf32>,
    %c13_145 = arith.constant 13 : index
    %c0_146 = arith.constant 0 : index
    %c0_147 = arith.constant 0 : index
    %363 = vector.load %arg14[%c13_145, %c0_146, %c0_147] : memref<16x8x256xf32, #tpu.memory_space<vmem>>, vector<1x8x256xf32>
    %364 = vector.shape_cast %363 : vector<1x8x256xf32> to vector<8x256xf32>
    %c2_148 = arith.constant 2 : index
    %c0_149 = arith.constant 0 : index
    %c0_150 = arith.constant 0 : index
    %365 = vector.load %arg14[%c2_148, %c0_149, %c0_150] : memref<16x8x256xf32, #tpu.memory_space<vmem>>, vector<1x8x256xf32>
    %366 = vector.shape_cast %365 : vector<1x8x256xf32> to vector<8x256xf32>
    %367 = arith.select %40, %364, %366 : vector<8x256xi1>, vector<8x256xf32>
    %368 = arith.truncf %359 : vector<8x64xf32> to vector<8x64xbf16>
    %cst_151 = arith.constant dense<0.000000e+00> : vector<8x256xf32>
    %369 = tpu.matmul %368, %1, %cst_151 {dimension_numbers = #tpu.dot_dimension_numbers<[1], [0], [0], [1], [0, 0, 1, 1], [], []>} : vector<8x64xbf16>, vector<64x256xbf16>, vector<8x256xf32> -> vector<8x256xf32>
    %370 = arith.addf %367, %369 : vector<8x256xf32>
    %371 = arith.mulf %370, %19 : vector<8x256xf32>
    %372 = math.tanh %371 : vector<8x256xf32>
    %373 = arith.mulf %372, %19 : vector<8x256xf32>
    %374 = arith.addf %373, %22 : vector<8x256xf32>
    %375 = vector.extract_strided_slice %374 {offsets = [0, 0], sizes = [8, 64], strides = [1, 1]} : vector<8x256xf32> to vector<8x64xf32>
    %376 = vector.extract_strided_slice %374 {offsets = [0, 64], sizes = [8, 64], strides = [1, 1]} : vector<8x256xf32> to vector<8x64xf32>
    %377 = vector.extract_strided_slice %374 {offsets = [0, 128], sizes = [8, 64], strides = [1, 1]} : vector<8x256xf32> to vector<8x64xf32>
    %378 = vector.extract_strided_slice %374 {offsets = [0, 192], sizes = [8, 64], strides = [1, 1]} : vector<8x256xf32> to vector<8x64xf32>
    %379 = arith.mulf %376, %357 : vector<8x64xf32>
    %380 = arith.mulf %375, %377 : vector<8x64xf32>
    %381 = arith.addf %379, %380 : vector<8x64xf32>
    %382 = math.tanh %381 : vector<8x64xf32>
    %383 = arith.mulf %378, %382 : vector<8x64xf32>
    %c13_152 = arith.constant 13 : index
    %c0_153 = arith.constant 0 : index
    %c0_154 = arith.constant 0 : index
    %384 = vector.load %arg15[%c13_152, %c0_153, %c0_154] : memref<16x8x64xf32, #tpu.memory_space<vmem>>, vector<1x8x64xf32>
    %385 = vector.shape_cast %384 : vector<1x8x64xf32> to vector<8x64xf32>
    %386 = vector.shape_cast %383 : vector<8x64xf32> to vector<1x8x64xf32>
    tpu.vector_store %arg15[%c13_152, %c0_153, %c0_154], %386 {strides = array<i32>} : memref<16x8x64xf32, #tpu.memory_space<vmem>>, vector<1x8x64xf32>,
    %c14_155 = arith.constant 14 : index
    %c0_156 = arith.constant 0 : index
    %c0_157 = arith.constant 0 : index
    %387 = vector.load %arg14[%c14_155, %c0_156, %c0_157] : memref<16x8x256xf32, #tpu.memory_space<vmem>>, vector<1x8x256xf32>
    %388 = vector.shape_cast %387 : vector<1x8x256xf32> to vector<8x256xf32>
    %c1_158 = arith.constant 1 : index
    %c0_159 = arith.constant 0 : index
    %c0_160 = arith.constant 0 : index
    %389 = vector.load %arg14[%c1_158, %c0_159, %c0_160] : memref<16x8x256xf32, #tpu.memory_space<vmem>>, vector<1x8x256xf32>
    %390 = vector.shape_cast %389 : vector<1x8x256xf32> to vector<8x256xf32>
    %391 = arith.select %40, %388, %390 : vector<8x256xi1>, vector<8x256xf32>
    %392 = arith.truncf %383 : vector<8x64xf32> to vector<8x64xbf16>
    %cst_161 = arith.constant dense<0.000000e+00> : vector<8x256xf32>
    %393 = tpu.matmul %392, %1, %cst_161 {dimension_numbers = #tpu.dot_dimension_numbers<[1], [0], [0], [1], [0, 0, 1, 1], [], []>} : vector<8x64xbf16>, vector<64x256xbf16>, vector<8x256xf32> -> vector<8x256xf32>
    %394 = arith.addf %391, %393 : vector<8x256xf32>
    %395 = arith.mulf %394, %19 : vector<8x256xf32>
    %396 = math.tanh %395 : vector<8x256xf32>
    %397 = arith.mulf %396, %19 : vector<8x256xf32>
    %398 = arith.addf %397, %22 : vector<8x256xf32>
    %399 = vector.extract_strided_slice %398 {offsets = [0, 0], sizes = [8, 64], strides = [1, 1]} : vector<8x256xf32> to vector<8x64xf32>
    %400 = vector.extract_strided_slice %398 {offsets = [0, 64], sizes = [8, 64], strides = [1, 1]} : vector<8x256xf32> to vector<8x64xf32>
    %401 = vector.extract_strided_slice %398 {offsets = [0, 128], sizes = [8, 64], strides = [1, 1]} : vector<8x256xf32> to vector<8x64xf32>
    %402 = vector.extract_strided_slice %398 {offsets = [0, 192], sizes = [8, 64], strides = [1, 1]} : vector<8x256xf32> to vector<8x64xf32>
    %403 = arith.mulf %400, %381 : vector<8x64xf32>
    %404 = arith.mulf %399, %401 : vector<8x64xf32>
    %405 = arith.addf %403, %404 : vector<8x64xf32>
    %406 = math.tanh %405 : vector<8x64xf32>
    %407 = arith.mulf %402, %406 : vector<8x64xf32>
    %c14_162 = arith.constant 14 : index
    %c0_163 = arith.constant 0 : index
    %c0_164 = arith.constant 0 : index
    %408 = vector.load %arg15[%c14_162, %c0_163, %c0_164] : memref<16x8x64xf32, #tpu.memory_space<vmem>>, vector<1x8x64xf32>
    %409 = vector.shape_cast %408 : vector<1x8x64xf32> to vector<8x64xf32>
    %410 = vector.shape_cast %407 : vector<8x64xf32> to vector<1x8x64xf32>
    tpu.vector_store %arg15[%c14_162, %c0_163, %c0_164], %410 {strides = array<i32>} : memref<16x8x64xf32, #tpu.memory_space<vmem>>, vector<1x8x64xf32>,
    %c15_165 = arith.constant 15 : index
    %c0_166 = arith.constant 0 : index
    %c0_167 = arith.constant 0 : index
    %411 = vector.load %arg14[%c15_165, %c0_166, %c0_167] : memref<16x8x256xf32, #tpu.memory_space<vmem>>, vector<1x8x256xf32>
    %412 = vector.shape_cast %411 : vector<1x8x256xf32> to vector<8x256xf32>
    %c0_168 = arith.constant 0 : index
    %c0_169 = arith.constant 0 : index
    %c0_170 = arith.constant 0 : index
    %413 = vector.load %arg14[%c0_168, %c0_169, %c0_170] : memref<16x8x256xf32, #tpu.memory_space<vmem>>, vector<1x8x256xf32>
    %414 = vector.shape_cast %413 : vector<1x8x256xf32> to vector<8x256xf32>
    %415 = arith.select %40, %412, %414 : vector<8x256xi1>, vector<8x256xf32>
    %416 = arith.truncf %407 : vector<8x64xf32> to vector<8x64xbf16>
    %cst_171 = arith.constant dense<0.000000e+00> : vector<8x256xf32>
    %417 = tpu.matmul %416, %1, %cst_171 {dimension_numbers = #tpu.dot_dimension_numbers<[1], [0], [0], [1], [0, 0, 1, 1], [], []>} : vector<8x64xbf16>, vector<64x256xbf16>, vector<8x256xf32> -> vector<8x256xf32>
    %418 = arith.addf %415, %417 : vector<8x256xf32>
    %419 = arith.mulf %418, %19 : vector<8x256xf32>
    %420 = math.tanh %419 : vector<8x256xf32>
    %421 = arith.mulf %420, %19 : vector<8x256xf32>
    %422 = arith.addf %421, %22 : vector<8x256xf32>
    %423 = vector.extract_strided_slice %422 {offsets = [0, 0], sizes = [8, 64], strides = [1, 1]} : vector<8x256xf32> to vector<8x64xf32>
    %424 = vector.extract_strided_slice %422 {offsets = [0, 64], sizes = [8, 64], strides = [1, 1]} : vector<8x256xf32> to vector<8x64xf32>
    %425 = vector.extract_strided_slice %422 {offsets = [0, 128], sizes = [8, 64], strides = [1, 1]} : vector<8x256xf32> to vector<8x64xf32>
    %426 = vector.extract_strided_slice %422 {offsets = [0, 192], sizes = [8, 64], strides = [1, 1]} : vector<8x256xf32> to vector<8x64xf32>
    %427 = arith.mulf %424, %405 : vector<8x64xf32>
    %428 = arith.mulf %423, %425 : vector<8x64xf32>
    %429 = arith.addf %427, %428 : vector<8x64xf32>
    %430 = math.tanh %429 : vector<8x64xf32>
    %431 = arith.mulf %426, %430 : vector<8x64xf32>
    %c15_172 = arith.constant 15 : index
    %c0_173 = arith.constant 0 : index
    %c0_174 = arith.constant 0 : index
    %432 = vector.load %arg15[%c15_172, %c0_173, %c0_174] : memref<16x8x64xf32, #tpu.memory_space<vmem>>, vector<1x8x64xf32>
    %433 = vector.shape_cast %432 : vector<1x8x64xf32> to vector<8x64xf32>
    %434 = vector.shape_cast %431 : vector<8x64xf32> to vector<1x8x64xf32>
    tpu.vector_store %arg15[%c15_172, %c0_173, %c0_174], %434 {strides = array<i32>} : memref<16x8x64xf32, #tpu.memory_space<vmem>>, vector<1x8x64xf32>,
    %435 = vector.extract_strided_slice %431 {offsets = [0, 0], sizes = [8, 32], strides = [1, 1]} : vector<8x64xf32> to vector<8x32xf32>
    %c0_175 = arith.constant 0 : index
    %c0_176 = arith.constant 0 : index
    %c0_177 = arith.constant 0 : index
    %436 = vector.load %arg12[%c0_175, %c0_176, %c0_177] : memref<2x8x32xf32, #tpu.memory_space<vmem>>, vector<1x8x32xf32>
    %437 = vector.shape_cast %436 : vector<1x8x32xf32> to vector<8x32xf32>
    %438 = vector.shape_cast %435 : vector<8x32xf32> to vector<1x8x32xf32>
    tpu.vector_store %arg12[%c0_175, %c0_176, %c0_177], %438 {strides = array<i32>} : memref<2x8x32xf32, #tpu.memory_space<vmem>>, vector<1x8x32xf32>,
    %439 = vector.extract_strided_slice %429 {offsets = [0, 0], sizes = [8, 32], strides = [1, 1]} : vector<8x64xf32> to vector<8x32xf32>
    %c0_178 = arith.constant 0 : index
    %c0_179 = arith.constant 0 : index
    %c0_180 = arith.constant 0 : index
    %440 = vector.load %arg13[%c0_178, %c0_179, %c0_180] : memref<2x8x32xf32, #tpu.memory_space<vmem>>, vector<1x8x32xf32>
    %441 = vector.shape_cast %440 : vector<1x8x32xf32> to vector<8x32xf32>
    %442 = vector.shape_cast %439 : vector<8x32xf32> to vector<1x8x32xf32>
    tpu.vector_store %arg13[%c0_178, %c0_179, %c0_180], %442 {strides = array<i32>} : memref<2x8x32xf32, #tpu.memory_space<vmem>>, vector<1x8x32xf32>,
    %443 = vector.extract_strided_slice %431 {offsets = [0, 32], sizes = [8, 32], strides = [1, 1]} : vector<8x64xf32> to vector<8x32xf32>
    %c1_181 = arith.constant 1 : index
    %c0_182 = arith.constant 0 : index
    %c0_183 = arith.constant 0 : index
    %444 = vector.load %arg12[%c1_181, %c0_182, %c0_183] : memref<2x8x32xf32, #tpu.memory_space<vmem>>, vector<1x8x32xf32>
    %445 = vector.shape_cast %444 : vector<1x8x32xf32> to vector<8x32xf32>
    %446 = vector.shape_cast %443 : vector<8x32xf32> to vector<1x8x32xf32>
    tpu.vector_store %arg12[%c1_181, %c0_182, %c0_183], %446 {strides = array<i32>} : memref<2x8x32xf32, #tpu.memory_space<vmem>>, vector<1x8x32xf32>,
    %447 = vector.extract_strided_slice %429 {offsets = [0, 32], sizes = [8, 32], strides = [1, 1]} : vector<8x64xf32> to vector<8x32xf32>
    %c1_184 = arith.constant 1 : index
    %c0_185 = arith.constant 0 : index
    %c0_186 = arith.constant 0 : index
    %448 = vector.load %arg13[%c1_184, %c0_185, %c0_186] : memref<2x8x32xf32, #tpu.memory_space<vmem>>, vector<1x8x32xf32>
    %449 = vector.shape_cast %448 : vector<1x8x32xf32> to vector<8x32xf32>
    %450 = vector.shape_cast %447 : vector<8x32xf32> to vector<1x8x32xf32>
    tpu.vector_store %arg13[%c1_184, %c0_185, %c0_186], %450 {strides = array<i32>} : memref<2x8x32xf32, #tpu.memory_space<vmem>>, vector<1x8x32xf32>,
    %c0_187 = arith.constant 0 : index
    %c0_188 = arith.constant 0 : index
    %c0_189 = arith.constant 0 : index
    %451 = vector.load %arg15[%c0_187, %c0_188, %c0_189] : memref<16x8x64xf32, #tpu.memory_space<vmem>>, vector<16x8x64xf32>
    %c0_190 = arith.constant 0 : index
    %c0_191 = arith.constant 0 : index
    %452 = vector.load %arg7[%c0_190, %c0_191] : memref<64x16xbf16, #tpu.memory_space<vmem>>, vector<64x16xbf16>
    %453 = vector.extract_strided_slice %451 {offsets = [0, 0, 0], sizes = [16, 8, 32], strides = [1, 1, 1]} : vector<16x8x64xf32> to vector<16x8x32xf32>
    %454 = vector.shape_cast %453 : vector<16x8x32xf32> to vector<128x32xf32>
    %455 = arith.truncf %454 : vector<128x32xf32> to vector<128x32xbf16>
    %456 = vector.extract_strided_slice %452 {offsets = [0, 0], sizes = [32, 16], strides = [1, 1]} : vector<64x16xbf16> to vector<32x16xbf16>
    %cst_192 = arith.constant dense<0.000000e+00> : vector<128x16xf32>
    %457 = tpu.matmul %455, %456, %cst_192 {dimension_numbers = #tpu.dot_dimension_numbers<[1], [0], [0], [1], [0, 0, 1, 1], [], []>} : vector<128x32xbf16>, vector<32x16xbf16>, vector<128x16xf32> -> vector<128x16xf32>
    %c0_193 = arith.constant 0 : index
    %c0_194 = arith.constant 0 : index
    %458 = vector.load %arg8[%c0_193, %c0_194] : memref<1x16xf32, #tpu.memory_space<vmem>>, vector<1x16xf32>
    %459 = vector.broadcast %458 : vector<1x16xf32> to vector<128x16xf32>
    %460 = arith.addf %457, %459 : vector<128x16xf32>
    %461 = vector.shape_cast %460 : vector<128x16xf32> to vector<16x8x16xf32>
    %462 = vector.extract_strided_slice %451 {offsets = [0, 0, 32], sizes = [16, 8, 32], strides = [1, 1, 1]} : vector<16x8x64xf32> to vector<16x8x32xf32>
    %463 = vector.shape_cast %462 : vector<16x8x32xf32> to vector<128x32xf32>
    %464 = arith.truncf %463 : vector<128x32xf32> to vector<128x32xbf16>
    %465 = vector.extract_strided_slice %452 {offsets = [32, 0], sizes = [32, 16], strides = [1, 1]} : vector<64x16xbf16> to vector<32x16xbf16>
    %cst_195 = arith.constant dense<0.000000e+00> : vector<128x16xf32>
    %466 = tpu.matmul %464, %465, %cst_195 {dimension_numbers = #tpu.dot_dimension_numbers<[1], [0], [0], [1], [0, 0, 1, 1], [], []>} : vector<128x32xbf16>, vector<32x16xbf16>, vector<128x16xf32> -> vector<128x16xf32>
    %467 = vector.shape_cast %466 : vector<128x16xf32> to vector<16x8x16xf32>
    %c0_196 = arith.constant 0 : index
    %c0_197 = arith.constant 0 : index
    %c0_198 = arith.constant 0 : index
    %468 = vector.load %arg16[%c0_196, %c0_197, %c0_198] : memref<16x8x16xf32, #tpu.memory_space<vmem>>, vector<16x8x16xf32>
    tpu.vector_store %arg16[%c0_196, %c0_197, %c0_198], %467 {strides = array<i32>} : memref<16x8x16xf32, #tpu.memory_space<vmem>>, vector<16x8x16xf32>,
    %c0_i32_199 = arith.constant 0 : i32
    %c8_i32 = arith.constant 8 : i32
    %469 = arith.addi %c0_i32_199, %c8_i32 : i32
    %c1_i32_200 = arith.constant 1 : i32
    scf.for %arg17 = %c0_i32_199 to %469 step %c1_i32_200  : i32 {
      %507 = arith.index_cast %arg17 : i32 to index
      %c0_224 = arith.constant 0 : index
      %c0_225 = arith.constant 0 : index
      %508 = vector.load %arg16[%507, %c0_224, %c0_225] : memref<16x8x16xf32, #tpu.memory_space<vmem>>, vector<1x8x16xf32>
      %509 = vector.shape_cast %508 : vector<1x8x16xf32> to vector<8x16xf32>
      %c15_i32 = arith.constant 15 : i32
      %510 = arith.subi %c15_i32, %arg17 : i32
      %511 = arith.index_cast %510 : i32 to index
      %c0_226 = arith.constant 0 : index
      %c0_227 = arith.constant 0 : index
      %512 = vector.load %arg16[%511, %c0_226, %c0_227] : memref<16x8x16xf32, #tpu.memory_space<vmem>>, vector<1x8x16xf32>
      %513 = vector.shape_cast %512 : vector<1x8x16xf32> to vector<8x16xf32>
      %514 = arith.index_cast %arg17 : i32 to index
      %c0_228 = arith.constant 0 : index
      %c0_229 = arith.constant 0 : index
      %515 = vector.load %arg16[%514, %c0_228, %c0_229] : memref<16x8x16xf32, #tpu.memory_space<vmem>>, vector<1x8x16xf32>
      %516 = vector.shape_cast %515 : vector<1x8x16xf32> to vector<8x16xf32>
      %517 = vector.shape_cast %513 : vector<8x16xf32> to vector<1x8x16xf32>
      tpu.vector_store %arg16[%514, %c0_228, %c0_229], %517 {strides = array<i32>} : memref<16x8x16xf32, #tpu.memory_space<vmem>>, vector<1x8x16xf32>,
      %c15_i32_230 = arith.constant 15 : i32
      %518 = arith.subi %c15_i32_230, %arg17 : i32
      %519 = arith.index_cast %518 : i32 to index
      %c0_231 = arith.constant 0 : index
      %c0_232 = arith.constant 0 : index
      %520 = vector.load %arg16[%519, %c0_231, %c0_232] : memref<16x8x16xf32, #tpu.memory_space<vmem>>, vector<1x8x16xf32>
      %521 = vector.shape_cast %520 : vector<1x8x16xf32> to vector<8x16xf32>
      %522 = vector.shape_cast %509 : vector<8x16xf32> to vector<1x8x16xf32>
      tpu.vector_store %arg16[%519, %c0_231, %c0_232], %522 {strides = array<i32>} : memref<16x8x16xf32, #tpu.memory_space<vmem>>, vector<1x8x16xf32>,
    }
    %c8_i32_201 = arith.constant 8 : i32
    %c0_202 = arith.constant 0 : index
    %c0_203 = arith.constant 0 : index
    %c0_204 = arith.constant 0 : index
    %470 = vector.load %arg16[%c0_202, %c0_203, %c0_204] : memref<16x8x16xf32, #tpu.memory_space<vmem>>, vector<16x8x16xf32>
    %471 = arith.addf %461, %470 : vector<16x8x16xf32>
    %cst_205 = arith.constant dense<0.000000e+00> : vector<16x8xf32>
    %472 = vector.multi_reduction <add>, %471, %cst_205 [2] : vector<16x8x16xf32> to vector<16x8xf32>
    %473 = vector.shape_cast %472 : vector<16x8xf32> to vector<16x8x1xf32>
    %cst_206 = arith.constant 1.600000e+01 : f32
    %474 = vector.broadcast %cst_206 : f32 to vector<16x8x1xf32>
    %475 = arith.divf %473, %474 : vector<16x8x1xf32>
    %cst_207 = arith.constant dense<0.000000e+00> : vector<8x1xf32>
    %476 = vector.multi_reduction <add>, %475, %cst_207 [0] : vector<16x8x1xf32> to vector<8x1xf32>
    %477 = vector.shape_cast %476 : vector<8x1xf32> to vector<1x8x1xf32>
    %cst_208 = arith.constant 1.600000e+01 : f32
    %478 = vector.broadcast %cst_208 : f32 to vector<1x8x1xf32>
    %479 = arith.divf %477, %478 : vector<1x8x1xf32>
    %480 = vector.broadcast %479 : vector<1x8x1xf32> to vector<16x8x16xf32>
    %481 = arith.subf %471, %480 : vector<16x8x16xf32>
    %482 = arith.mulf %481, %481 : vector<16x8x16xf32>
    %cst_209 = arith.constant dense<0.000000e+00> : vector<16x8xf32>
    %483 = vector.multi_reduction <add>, %482, %cst_209 [2] : vector<16x8x16xf32> to vector<16x8xf32>
    %484 = vector.shape_cast %483 : vector<16x8xf32> to vector<16x8x1xf32>
    %cst_210 = arith.constant 1.600000e+01 : f32
    %485 = vector.broadcast %cst_210 : f32 to vector<16x8x1xf32>
    %486 = arith.divf %484, %485 : vector<16x8x1xf32>
    %cst_211 = arith.constant dense<0.000000e+00> : vector<8x1xf32>
    %487 = vector.multi_reduction <add>, %486, %cst_211 [0] : vector<16x8x1xf32> to vector<8x1xf32>
    %488 = vector.shape_cast %487 : vector<8x1xf32> to vector<1x8x1xf32>
    %cst_212 = arith.constant 1.600000e+01 : f32
    %489 = vector.broadcast %cst_212 : f32 to vector<1x8x1xf32>
    %490 = arith.divf %488, %489 : vector<1x8x1xf32>
    %c0_213 = arith.constant 0 : index
    %c0_214 = arith.constant 0 : index
    %491 = vector.load %arg9[%c0_213, %c0_214] : memref<1x16xf32, #tpu.memory_space<vmem>>, vector<1x16xf32>
    %cst_215 = arith.constant 9.99999993E-9 : f32
    %492 = vector.broadcast %cst_215 : f32 to vector<1x8x1xf32>
    %493 = arith.addf %490, %492 : vector<1x8x1xf32>
    %494 = math.rsqrt %493 : vector<1x8x1xf32>
    %495 = vector.broadcast %494 : vector<1x8x1xf32> to vector<16x8x16xf32>
    %496 = arith.mulf %481, %495 : vector<16x8x16xf32>
    %497 = vector.shape_cast %491 : vector<1x16xf32> to vector<1x1x16xf32>
    %498 = vector.broadcast %497 : vector<1x1x16xf32> to vector<16x8x16xf32>
    %499 = arith.mulf %498, %496 : vector<16x8x16xf32>
    %c0_216 = arith.constant 0 : index
    %c0_217 = arith.constant 0 : index
    %500 = vector.load %arg10[%c0_216, %c0_217] : memref<1x16xf32, #tpu.memory_space<vmem>>, vector<1x16xf32>
    %501 = vector.shape_cast %500 : vector<1x16xf32> to vector<1x1x16xf32>
    %502 = vector.broadcast %501 : vector<1x1x16xf32> to vector<16x8x16xf32>
    %503 = arith.addf %499, %502 : vector<16x8x16xf32>
    %c0_218 = arith.constant 0 : index
    %c0_219 = arith.constant 0 : index
    %c0_220 = arith.constant 0 : index
    %504 = vector.load %arg1[%c0_218, %c0_219, %c0_220] : memref<16x8x16xf32, #tpu.memory_space<vmem>>, vector<16x8x16xf32>
    %505 = arith.addf %504, %503 : vector<16x8x16xf32>
    %c0_221 = arith.constant 0 : index
    %c0_222 = arith.constant 0 : index
    %c0_223 = arith.constant 0 : index
    %506 = vector.load %arg11[%c0_221, %c0_222, %c0_223] : memref<16x8x16xf32, #tpu.memory_space<vmem>>, vector<16x8x16xf32>
    tpu.vector_store %arg11[%c0_221, %c0_222, %c0_223], %505 {strides = array<i32>} : memref<16x8x16xf32, #tpu.memory_space<vmem>>, vector<16x8x16xf32>,
    return
  }
  func.func @transform_0(%arg0: i32) -> (i32, i32, i32) {
    %c0_i32 = arith.constant 0 : i32
    %c0_i32_0 = arith.constant 0 : i32
    %c0_i32_1 = arith.constant 0 : i32
    return %c0_i32, %arg0, %c0_i32_0 : i32, i32, i32
  }
  func.func @transform_1(%arg0: i32) -> (i32, i32, i32) {
    %c0_i32 = arith.constant 0 : i32
    %c0_i32_0 = arith.constant 0 : i32
    %c0_i32_1 = arith.constant 0 : i32
    return %c0_i32, %arg0, %c0_i32_0 : i32, i32, i32
  }
  func.func @transform_2(%arg0: i32) -> (i32, i32, i32) {
    %c0_i32 = arith.constant 0 : i32
    %c0_i32_0 = arith.constant 0 : i32
    %c0_i32_1 = arith.constant 0 : i32
    return %c0_i32, %arg0, %c0_i32_0 : i32, i32, i32
  }
  func.func @transform_3(%arg0: i32) -> (i32, i32) {
    %c0_i32 = arith.constant 0 : i32
    %c0_i32_0 = arith.constant 0 : i32
    %c0_i32_1 = arith.constant 0 : i32
    return %c0_i32, %c0_i32_0 : i32, i32
  }
  func.func @transform_4(%arg0: i32) -> (i32, i32) {
    %c0_i32 = arith.constant 0 : i32
    %c0_i32_0 = arith.constant 0 : i32
    %c0_i32_1 = arith.constant 0 : i32
    return %c0_i32, %c0_i32_0 : i32, i32
  }
  func.func @transform_5(%arg0: i32) -> (i32, i32) {
    %c0_i32 = arith.constant 0 : i32
    %c0_i32_0 = arith.constant 0 : i32
    %c0_i32_1 = arith.constant 0 : i32
    return %c0_i32, %c0_i32_0 : i32, i32
  }
  func.func @transform_6(%arg0: i32) -> (i32, i32) {
    %c0_i32 = arith.constant 0 : i32
    %c0_i32_0 = arith.constant 0 : i32
    %c0_i32_1 = arith.constant 0 : i32
    return %c0_i32, %c0_i32_0 : i32, i32
  }
  func.func @transform_7(%arg0: i32) -> (i32, i32) {
    %c0_i32 = arith.constant 0 : i32
    %c0_i32_0 = arith.constant 0 : i32
    %c0_i32_1 = arith.constant 0 : i32
    return %c0_i32, %c0_i32_0 : i32, i32
  }
  func.func @transform_8(%arg0: i32) -> (i32, i32) {
    %c0_i32 = arith.constant 0 : i32
    %c0_i32_0 = arith.constant 0 : i32
    %c0_i32_1 = arith.constant 0 : i32
    return %c0_i32, %c0_i32_0 : i32, i32
  }
  func.func @transform_9(%arg0: i32) -> (i32, i32) {
    %c0_i32 = arith.constant 0 : i32
    %c0_i32_0 = arith.constant 0 : i32
    %c0_i32_1 = arith.constant 0 : i32
    return %c0_i32, %c0_i32_0 : i32, i32
  }
  func.func @transform_10(%arg0: i32) -> (i32, i32, i32) {
    %c0_i32 = arith.constant 0 : i32
    %c0_i32_0 = arith.constant 0 : i32
    %c0_i32_1 = arith.constant 0 : i32
    return %c0_i32, %arg0, %c0_i32_0 : i32, i32, i32
  }
  func.func @transform_11(%arg0: i32) -> (i32, i32, i32) {
    %c0_i32 = arith.constant 0 : i32
    %c0_i32_0 = arith.constant 0 : i32
    %c0_i32_1 = arith.constant 0 : i32
    return %c0_i32, %arg0, %c0_i32_0 : i32, i32, i32
  }
  func.func @transform_12(%arg0: i32) -> (i32, i32, i32) {
    %c0_i32 = arith.constant 0 : i32
    %c0_i32_0 = arith.constant 0 : i32
    %c0_i32_1 = arith.constant 0 : i32
    return %c0_i32, %arg0, %c0_i32_0 : i32, i32, i32
  }
}

</mosaic_0001>

<llo_original>
// kernel: tpu_custom_call.1
$region0: #{tpu_custom_call.1}
  #allocation0 [shape = 'u32[]', space=smem, size = 0x4, offset = 0x4, fixed_abs, tag = 'smem constant byte address 0x4 - core index']
  #allocation1 [shape = 'u32[72,128]{1,0:T(1,128)}', space=vmem, size = 0x9000, scoped, tag = 'internal scratch']
  #allocation2 [shape = 'f32[16,8,256]{2,1,0:T(8,128)}', space=vmem, size = 0x20000, scoped, tag = 'scratch operand']
  #allocation3 [shape = 'f32[16,8,64]{2,1,0:T(8,128)}', space=vmem, size = 0x10000, scoped, tag = 'scratch operand']
  #allocation4 [shape = 'f32[16,8,16]{2,1,0:T(8,128)}', space=vmem, size = 0x10000, scoped, tag = 'scratch operand']
  %s0 = inlined_call_operand.hbm [shape: f32[16,16,16], index: 0, kind: input, shape index: {}]
  %s1 = inlined_call_operand.vmem [shape: f32[2,16,32], index: 1, kind: input, shape index: {}]
  %s2 = inlined_call_operand.hbm [shape: f32[2,16,32], index: 2, kind: input, shape index: {}]
  %s3 = inlined_call_operand.hbm [shape: bf16[16,256], index: 3, kind: input, shape index: {}]
  %s4 = inlined_call_operand.hbm [shape: bf16[64,256], index: 4, kind: input, shape index: {}]
  %s5 = inlined_call_operand.vmem [shape: f32[1,256], index: 5, kind: input, shape index: {}]
  %s6 = inlined_call_operand.vmem [shape: bf16[64,16], index: 6, kind: input, shape index: {}]
  %s7 = inlined_call_operand.vmem [shape: f32[1,16], index: 7, kind: input, shape index: {}]
  %s8 = inlined_call_operand.vmem [shape: f32[1,16], index: 8, kind: input, shape index: {}]
  %s9 = inlined_call_operand.vmem [shape: f32[1,16], index: 9, kind: input, shape index: {}]
  %s10 = inlined_call_operand.hbm [shape: f32[16,16,16], index: 10, kind: output, shape index: {0}]
  %s11 = inlined_call_operand.hbm [shape: f32[2,16,32], index: 11, kind: output, shape index: {1}]
  %s12 = inlined_call_operand.hbm [shape: f32[2,16,32], index: 12, kind: output, shape index: {2}]
  %13 = xla_tuple %s10, %s11, %s12
  %s14 = sld [smem:[#allocation0]]
  $region150: #{tpu_custom_call.1} parent=0
    _
  %s16 = ssub.s32 1, %s14
  %s17 = scalar_select 0, %s16, %s14
  $region1: #{tpu_custom_call.1} parent=0
    #allocation5 [shape = 'u8[131072]{0}', space=vmem, size = 0x20000, scoped, tag = 'input window, operand 0']
    #allocation6 [shape = 's32[2]{0}', space=sflag, size = 0x8, scoped, tag = 'scoped memory for tpu_custom_call.1']
    #allocation7 [shape = 's32[2]{0}', space=sflag, size = 0x8, scoped, tag = 'scoped memory for tpu_custom_call.1']
    #allocation8 [shape = 'u8[16384]{0}', space=vmem, size = 0x4000, scoped, tag = 'input window, operand 1']
    #allocation9 [shape = 'u8[16384]{0}', space=vmem, size = 0x4000, scoped, tag = 'input window, operand 2']
    #allocation10 [shape = 's32[2]{0}', space=sflag, size = 0x8, scoped, tag = 'scoped memory for tpu_custom_call.1']
    #allocation11 [shape = 'u8[8192]{0}', space=vmem, size = 0x2000, scoped, tag = 'input window, operand 3, single buffered']
    #allocation12 [shape = 'u8[32768]{0}', space=vmem, size = 0x8000, scoped, tag = 'input window, operand 4, single buffered']
    #allocation13 [shape = 's32[1]{0}', space=sflag, size = 0x4, scoped, tag = 'scoped memory for tpu_custom_call.1']
    #allocation14 [shape = 'u8[131072]{0}', space=vmem, size = 0x20000, scoped, tag = 'output window, operand 0']
    #allocation15 [shape = 'u8[16384]{0}', space=vmem, size = 0x4000, scoped, tag = 'output window, operand 1']
    #allocation16 [shape = 's32[2]{0}', space=sflag, size = 0x8, scoped, tag = 'scoped memory for tpu_custom_call.1']
    #allocation17 [shape = 'u8[16384]{0}', space=vmem, size = 0x4000, scoped, tag = 'output window, operand 2']
    %18 = vsyncpa [#allocation6], 0
    %s19 = scalar_lea.sflag [#allocation6], 1
    %20 = vsyncpa %s19, 0
    %21 = vsyncpa [#allocation10], 0
    %s22 = scalar_lea.sflag [#allocation10], 1
    %23 = vsyncpa %s22, 0
    %24 = vsyncpa [#allocation13], 0
    %25 = vsyncpa [#allocation7], 0
    %s26 = scalar_lea.sflag [#allocation7], 1
    %27 = vsyncpa %s26, 0
    %28 = vsyncpa [#allocation16], 0
    %s29 = scalar_lea.sflag [#allocation16], 1
    %30 = vsyncpa %s29, 0
    loop: start=0, step=1, limit=4
    $region2: #{tpu_custom_call.1} parent=1 // loop_pre_header
      _
    $region3: #{tpu_custom_call.1} parent=1 // loop_header
      %s32 = sphi 0, %s36
      %p33 = scmp.ge.s32.totalorder %s32, 4
      %s42 = sphi 0, %s44
      %s45 = sphi 0, %s42
      %s46 = sphi 0, %s45
      %s62 = sphi 0, %s46
      %s68 = sphi 0, %s70
      %s71 = sphi 0, %s68
      %s72 = sphi 0, %s71
      %s88 = sphi 0, %s72
      %s94 = sphi 0, %s96
      %s97 = sphi 0, %s94
      %s98 = sphi 0, %s97
      %s114 = sphi 0, %s98
      %s118 = sphi 0, %s118
      %s120 = sphi 0, %s118
      %s121 = sphi 0, %s120
      %s135 = sphi 0, %s121
      %s139 = sphi 0, %s139
      %s141 = sphi 0, %s139
      %s142 = sphi 0, %s141
      %s156 = sphi 0, %s142
      %s160 = sphi 0, %s160
      %s162 = sphi 0, %s160
      %s163 = sphi 0, %s162
      %s177 = sphi 0, %s163
      %s181 = sphi 0, %s181
      %s183 = sphi 0, %s181
      %s184 = sphi 0, %s183
      %s198 = sphi 0, %s184
      %s202 = sphi 0, %s202
      %s204 = sphi 0, %s202
      %s205 = sphi 0, %s204
      %s219 = sphi 0, %s205
      %s223 = sphi 0, %s223
      %s225 = sphi 0, %s223
      %s226 = sphi 0, %s225
      %s240 = sphi 0, %s226
      %s244 = sphi 0, %s244
      %s246 = sphi 0, %s244
      %s247 = sphi 0, %s246
      %s261 = sphi 0, %s247
      %s267 = sphi 0, %s269
      %s270 = sphi 0, %s267
      %s271 = sphi 0, %s270
      %s287 = sphi 0, %s271
      %s293 = sphi 0, %s295
      %s296 = sphi 0, %s293
      %s297 = sphi 0, %s296
      %s313 = sphi 0, %s297
      %s319 = sphi 0, %s321
      %s322 = sphi 0, %s319
      %s323 = sphi 0, %s322
      %s339 = sphi 0, %s323
    $region4: #{tpu_custom_call.1} parent=1 // loop_header_branch
      %35 = sbr.rel (%p33) target = $region8
    $region5: #{tpu_custom_call.1} parent=1 // loop_body
      %s37 = ssub.s32 %s32, 1
      %s38 = ssub.s32 %s32, 2
      %s39 = sadd.s32 %s32, 1
      %s40 = ssub.s32 %s32, %s39
      %p41 = scmp.eq.s32.totalorder %s40, 0
      %s43 = sadd.s32 %s42, 1
      %s44 = scalar_select %p41, %s42, %s43
      %p47 = pneg %p41
      %p48 = scmp.eq.s32.totalorder %s32, 1
      %p49 = por %p47, %p48
      %p50 = scmp.ne.s32.totalorder %s42, %s45
      %p51 = scmp.eq.s32.totalorder %s32, 0
      %p52 = por %p50, %p51
      %p53 = scmp.ne.s32.totalorder %s42, %s45
      %p54 = scmp.eq.s32.totalorder %s37, 1
      %p55 = por %p53, %p54
      %p56 = scmp.ne.s32.totalorder %s45, %s46
      %p57 = scmp.eq.s32.totalorder %s37, 0
      %p58 = por %p56, %p57
      %p59 = scmp.ne.s32.totalorder %s45, %s46
      %p60 = scmp.eq.s32.totalorder %s38, 1
      %p61 = por %p59, %p60
      %p63 = scmp.ne.s32.totalorder %s46, %s62
      %p64 = scmp.eq.s32.totalorder %s38, 0
      %p65 = por %p63, %p64
      %s66 = ssub.s32 %s32, %s39
      %p67 = scmp.eq.s32.totalorder %s66, 0
      %s69 = sadd.s32 %s68, 1
      %s70 = scalar_select %p67, %s68, %s69
      %p73 = pneg %p67
      %p74 = scmp.eq.s32.totalorder %s32, 1
      %p75 = por %p73, %p74
      %p76 = scmp.ne.s32.totalorder %s68, %s71
      %p77 = scmp.eq.s32.totalorder %s32, 0
      %p78 = por %p76, %p77
      %p79 = scmp.ne.s32.totalorder %s68, %s71
      %p80 = scmp.eq.s32.totalorder %s37, 1
      %p81 = por %p79, %p80
      %p82 = scmp.ne.s32.totalorder %s71, %s72
      %p83 = scmp.eq.s32.totalorder %s37, 0
      %p84 = por %p82, %p83
      %p85 = scmp.ne.s32.totalorder %s71, %s72
      %p86 = scmp.eq.s32.totalorder %s38, 1
      %p87 = por %p85, %p86
      %p89 = scmp.ne.s32.totalorder %s72, %s88
      %p90 = scmp.eq.s32.totalorder %s38, 0
      %p91 = por %p89, %p90
      %s92 = ssub.s32 %s32, %s39
      %p93 = scmp.eq.s32.totalorder %s92, 0
      %s95 = sadd.s32 %s94, 1
      %s96 = scalar_select %p93, %s94, %s95
      %p99 = pneg %p93
      %p100 = scmp.eq.s32.totalorder %s32, 1
      %p101 = por %p99, %p100
      %p102 = scmp.ne.s32.totalorder %s94, %s97
      %p103 = scmp.eq.s32.totalorder %s32, 0
      %p104 = por %p102, %p103
      %p105 = scmp.ne.s32.totalorder %s94, %s97
      %p106 = scmp.eq.s32.totalorder %s37, 1
      %p107 = por %p105, %p106
      %p108 = scmp.ne.s32.totalorder %s97, %s98
      %p109 = scmp.eq.s32.totalorder %s37, 0
      %p110 = por %p108, %p109
      %p111 = scmp.ne.s32.totalorder %s97, %s98
      %p112 = scmp.eq.s32.totalorder %s38, 1
      %p113 = por %p111, %p112
      %p115 = scmp.ne.s32.totalorder %s98, %s114
      %p116 = scmp.eq.s32.totalorder %s38, 0
      %p117 = por %p115, %p116
      %s119 = sadd.s32 %s118, 1
      %p122 = scmp.eq.s32.totalorder %s32, 1
      %p123 = scmp.ne.s32.totalorder %s118, %s120
      %p124 = scmp.eq.s32.totalorder %s32, 0
      %p125 = por %p123, %p124
      %p126 = scmp.ne.s32.totalorder %s118, %s120
      %p127 = scmp.eq.s32.totalorder %s37, 1
      %p128 = por %p126, %p127
      %p129 = scmp.ne.s32.totalorder %s120, %s121
      %p130 = scmp.eq.s32.totalorder %s37, 0
      %p131 = por %p129, %p130
      %p132 = scmp.ne.s32.totalorder %s120, %s121
      %p133 = scmp.eq.s32.totalorder %s38, 1
      %p134 = por %p132, %p133
      %p136 = scmp.ne.s32.totalorder %s121, %s135
      %p137 = scmp.eq.s32.totalorder %s38, 0
      %p138 = por %p136, %p137
      %s140 = sadd.s32 %s139, 1
      %p143 = scmp.eq.s32.totalorder %s32, 1
      %p144 = scmp.ne.s32.totalorder %s139, %s141
      %p145 = scmp.eq.s32.totalorder %s32, 0
      %p146 = por %p144, %p145
      %p147 = scmp.ne.s32.totalorder %s139, %s141
      %p148 = scmp.eq.s32.totalorder %s37, 1
      %p149 = por %p147, %p148
      %p150 = scmp.ne.s32.totalorder %s141, %s142
      %p151 = scmp.eq.s32.totalorder %s37, 0
      %p152 = por %p150, %p151
      %p153 = scmp.ne.s32.totalorder %s141, %s142
      %p154 = scmp.eq.s32.totalorder %s38, 1
      %p155 = por %p153, %p154
      %p157 = scmp.ne.s32.totalorder %s142, %s156
      %p158 = scmp.eq.s32.totalorder %s38, 0
      %p159 = por %p157, %p158
      %s161 = sadd.s32 %s160, 1
      %p164 = scmp.eq.s32.totalorder %s32, 1
      %p165 = scmp.ne.s32.totalorder %s160, %s162
      %p166 = scmp.eq.s32.totalorder %s32, 0
      %p167 = por %p165, %p166
      %p168 = scmp.ne.s32.totalorder %s160, %s162
      %p169 = scmp.eq.s32.totalorder %s37, 1
      %p170 = por %p168, %p169
      %p171 = scmp.ne.s32.totalorder %s162, %s163
      %p172 = scmp.eq.s32.totalorder %s37, 0
      %p173 = por %p171, %p172
      %p174 = scmp.ne.s32.totalorder %s162, %s163
      %p175 = scmp.eq.s32.totalorder %s38, 1
      %p176 = por %p174, %p175
      %p178 = scmp.ne.s32.totalorder %s163, %s177
      %p179 = scmp.eq.s32.totalorder %s38, 0
      %p180 = por %p178, %p179
      %s182 = sadd.s32 %s181, 1
      %p185 = scmp.eq.s32.totalorder %s32, 1
      %p186 = scmp.ne.s32.totalorder %s181, %s183
      %p187 = scmp.eq.s32.totalorder %s32, 0
      %p188 = por %p186, %p187
      %p189 = scmp.ne.s32.totalorder %s181, %s183
      %p190 = scmp.eq.s32.totalorder %s37, 1
      %p191 = por %p189, %p190
      %p192 = scmp.ne.s32.totalorder %s183, %s184
      %p193 = scmp.eq.s32.totalorder %s37, 0
      %p194 = por %p192, %p193
      %p195 = scmp.ne.s32.totalorder %s183, %s184
      %p196 = scmp.eq.s32.totalorder %s38, 1
      %p197 = por %p195, %p196
      %p199 = scmp.ne.s32.totalorder %s184, %s198
      %p200 = scmp.eq.s32.totalorder %s38, 0
      %p201 = por %p199, %p200
      %s203 = sadd.s32 %s202, 1
      %p206 = scmp.eq.s32.totalorder %s32, 1
      %p207 = scmp.ne.s32.totalorder %s202, %s204
      %p208 = scmp.eq.s32.totalorder %s32, 0
      %p209 = por %p207, %p208
      %p210 = scmp.ne.s32.totalorder %s202, %s204
      %p211 = scmp.eq.s32.totalorder %s37, 1
      %p212 = por %p210, %p211
      %p213 = scmp.ne.s32.totalorder %s204, %s205
      %p214 = scmp.eq.s32.totalorder %s37, 0
      %p215 = por %p213, %p214
      %p216 = scmp.ne.s32.totalorder %s204, %s205
      %p217 = scmp.eq.s32.totalorder %s38, 1
      %p218 = por %p216, %p217
      %p220 = scmp.ne.s32.totalorder %s205, %s219
      %p221 = scmp.eq.s32.totalorder %s38, 0
      %p222 = por %p220, %p221
      %s224 = sadd.s32 %s223, 1
      %p227 = scmp.eq.s32.totalorder %s32, 1
      %p228 = scmp.ne.s32.totalorder %s223, %s225
      %p229 = scmp.eq.s32.totalorder %s32, 0
      %p230 = por %p228, %p229
      %p231 = scmp.ne.s32.totalorder %s223, %s225
      %p232 = scmp.eq.s32.totalorder %s37, 1
      %p233 = por %p231, %p232
      %p234 = scmp.ne.s32.totalorder %s225, %s226
      %p235 = scmp.eq.s32.totalorder %s37, 0
      %p236 = por %p234, %p235
      %p237 = scmp.ne.s32.totalorder %s225, %s226
      %p238 = scmp.eq.s32.totalorder %s38, 1
      %p239 = por %p237, %p238
      %p241 = scmp.ne.s32.totalorder %s226, %s240
      %p242 = scmp.eq.s32.totalorder %s38, 0
      %p243 = por %p241, %p242
      %s245 = sadd.s32 %s244, 1
      %p248 = scmp.eq.s32.totalorder %s32, 1
      %p249 = scmp.ne.s32.totalorder %s244, %s246
      %p250 = scmp.eq.s32.totalorder %s32, 0
      %p251 = por %p249, %p250
      %p252 = scmp.ne.s32.totalorder %s244, %s246
      %p253 = scmp.eq.s32.totalorder %s37, 1
      %p254 = por %p252, %p253
      %p255 = scmp.ne.s32.totalorder %s246, %s247
      %p256 = scmp.eq.s32.totalorder %s37, 0
      %p257 = por %p255, %p256
      %p258 = scmp.ne.s32.totalorder %s246, %s247
      %p259 = scmp.eq.s32.totalorder %s38, 1
      %p260 = por %p258, %p259
      %p262 = scmp.ne.s32.totalorder %s247, %s261
      %p263 = scmp.eq.s32.totalorder %s38, 0
      %p264 = por %p262, %p263
      %s265 = ssub.s32 %s32, %s39
      %p266 = scmp.eq.s32.totalorder %s265, 0
      %s268 = sadd.s32 %s267, 1
      %s269 = scalar_select %p266, %s267, %s268
      %p272 = pneg %p266
      %p273 = scmp.eq.s32.totalorder %s32, 1
      %p274 = por %p272, %p273
      %p275 = scmp.ne.s32.totalorder %s267, %s270
      %p276 = scmp.eq.s32.totalorder %s32, 0
      %p277 = por %p275, %p276
      %p278 = scmp.ne.s32.totalorder %s267, %s270
      %p279 = scmp.eq.s32.totalorder %s37, 1
      %p280 = por %p278, %p279
      %p281 = scmp.ne.s32.totalorder %s270, %s271
      %p282 = scmp.eq.s32.totalorder %s37, 0
      %p283 = por %p281, %p282
      %p284 = scmp.ne.s32.totalorder %s270, %s271
      %p285 = scmp.eq.s32.totalorder %s38, 1
      %p286 = por %p284, %p285
      %p288 = scmp.ne.s32.totalorder %s271, %s287
      %p289 = scmp.eq.s32.totalorder %s38, 0
      %p290 = por %p288, %p289
      %s291 = ssub.s32 %s32, %s39
      %p292 = scmp.eq.s32.totalorder %s291, 0
      %s294 = sadd.s32 %s293, 1
      %s295 = scalar_select %p292, %s293, %s294
      %p298 = pneg %p292
      %p299 = scmp.eq.s32.totalorder %s32, 1
      %p300 = por %p298, %p299
      %p301 = scmp.ne.s32.totalorder %s293, %s296
      %p302 = scmp.eq.s32.totalorder %s32, 0
      %p303 = por %p301, %p302
      %p304 = scmp.ne.s32.totalorder %s293, %s296
      %p305 = scmp.eq.s32.totalorder %s37, 1
      %p306 = por %p304, %p305
      %p307 = scmp.ne.s32.totalorder %s296, %s297
      %p308 = scmp.eq.s32.totalorder %s37, 0
      %p309 = por %p307, %p308
      %p310 = scmp.ne.s32.totalorder %s296, %s297
      %p311 = scmp.eq.s32.totalorder %s38, 1
      %p312 = por %p310, %p311
      %p314 = scmp.ne.s32.totalorder %s297, %s313
      %p315 = scmp.eq.s32.totalorder %s38, 0
      %p316 = por %p314, %p315
      %s317 = ssub.s32 %s32, %s39
      %p318 = scmp.eq.s32.totalorder %s317, 0
      %s320 = sadd.s32 %s319, 1
      %s321 = scalar_select %p318, %s319, %s320
      %p324 = pneg %p318
      %p325 = scmp.eq.s32.totalorder %s32, 1
      %p326 = por %p324, %p325
      %p327 = scmp.ne.s32.totalorder %s319, %s322
      %p328 = scmp.eq.s32.totalorder %s32, 0
      %p329 = por %p327, %p328
      %p330 = scmp.ne.s32.totalorder %s319, %s322
      %p331 = scmp.eq.s32.totalorder %s37, 1
      %p332 = por %p330, %p331
      %p333 = scmp.ne.s32.totalorder %s322, %s323
      %p334 = scmp.eq.s32.totalorder %s37, 0
      %p335 = por %p333, %p334
      %p336 = scmp.ne.s32.totalorder %s322, %s323
      %p337 = scmp.eq.s32.totalorder %s38, 1
      %p338 = por %p336, %p337
      %p340 = scmp.ne.s32.totalorder %s323, %s339
      %p341 = scmp.eq.s32.totalorder %s38, 0
      %p342 = por %p340, %p341
      %p343 = scmp.le.s32.totalorder 1, %s32
      %p344 = scmp.lt.s32.totalorder %s32, 3
      %p345 = pnand %p343, %p344
      %p346 = pneg %p345
      // Predicated region
      $region9: #{tpu_custom_call.1} parent=5 // pred_check
        _
      $region10: #{tpu_custom_call.1} parent=5 // pred_check_branch
        %348 = sbr.rel (%p345) target = $region12
      $region11: #{tpu_custom_call.1} parent=5 // pred_region
        %s349 = ssub.s32 %s32, 1
        // Predicated region
        $region13: #{tpu_custom_call.1} parent=11 // pred_check
          %p350 = pneg %p131
        $region14: #{tpu_custom_call.1} parent=11 // pred_check_branch
          %352 = sbr.rel (%p350) target = $region16
        $region15: #{tpu_custom_call.1} parent=11 // pred_region
          %354 = vsyncadd [#allocation10], 0
          %s355 = sshll.u32 %s3, 4
          %s356 = int_to_ptr.hbm [resolvable:$true] %s355
          %s357 = sshll.u32 [#allocation11], 4
          %s358 = int_to_ptr.vmem [resolvable:$true] %s357
          %363 = dma.hbm_to_vmem [thread:$0]  %s356, 256, %s358, [#allocation10], 128, 128, 8
        $region16: #{tpu_custom_call.1} parent=11 // pred_fallthru
          _
        // Predicated region
        $region17: #{tpu_custom_call.1} parent=11 // pred_check
          %p364 = pneg %p152
        $region18: #{tpu_custom_call.1} parent=11 // pred_check_branch
          %366 = sbr.rel (%p364) target = $region20
        $region19: #{tpu_custom_call.1} parent=11 // pred_region
          %368 = vsyncadd [#allocation13], 0
          %s369 = sshll.u32 %s4, 4
          %s370 = int_to_ptr.hbm [resolvable:$true] %s369
          %s371 = sshll.u32 [#allocation12], 4
          %s372 = int_to_ptr.vmem [resolvable:$true] %s371
          %377 = dma.hbm_to_vmem [thread:$0]  %s370, 1024, %s372, [#allocation13], 128, 128, 8
        $region20: #{tpu_custom_call.1} parent=11 // pred_fallthru
          _
        // Predicated region
        $region21: #{tpu_custom_call.1} parent=11 // pred_check
          %p378 = pneg %p173
        $region22: #{tpu_custom_call.1} parent=11 // pred_check_branch
          %380 = sbr.rel (%p378) target = $region24
        $region23: #{tpu_custom_call.1} parent=11 // pred_region
          _
        $region24: #{tpu_custom_call.1} parent=11 // pred_fallthru
          _
        // Predicated region
        $region25: #{tpu_custom_call.1} parent=11 // pred_check
          %p381 = pneg %p194
        $region26: #{tpu_custom_call.1} parent=11 // pred_check_branch
          %383 = sbr.rel (%p381) target = $region28
        $region27: #{tpu_custom_call.1} parent=11 // pred_region
          _
        $region28: #{tpu_custom_call.1} parent=11 // pred_fallthru
          _
        // Predicated region
        $region29: #{tpu_custom_call.1} parent=11 // pred_check
          %p384 = pneg %p215
        $region30: #{tpu_custom_call.1} parent=11 // pred_check_branch
          %386 = sbr.rel (%p384) target = $region32
        $region31: #{tpu_custom_call.1} parent=11 // pred_region
          _
        $region32: #{tpu_custom_call.1} parent=11 // pred_fallthru
          _
        // Predicated region
        $region33: #{tpu_custom_call.1} parent=11 // pred_check
          %p387 = pneg %p236
        $region34: #{tpu_custom_call.1} parent=11 // pred_check_branch
          %389 = sbr.rel (%p387) target = $region36
        $region35: #{tpu_custom_call.1} parent=11 // pred_region
          _
        $region36: #{tpu_custom_call.1} parent=11 // pred_fallthru
          _
        // Predicated region
        $region37: #{tpu_custom_call.1} parent=11 // pred_check
          %p390 = pneg %p257
        $region38: #{tpu_custom_call.1} parent=11 // pred_check_branch
          %392 = sbr.rel (%p390) target = $region40
        $region39: #{tpu_custom_call.1} parent=11 // pred_region
          _
        $region40: #{tpu_custom_call.1} parent=11 // pred_fallthru
          _
      $region12: #{tpu_custom_call.1} parent=5 // pred_fallthru
        _
      %p393 = scmp.lt.s32.totalorder %s32, 2
      // Predicated region
      $region41: #{tpu_custom_call.1} parent=5 // pred_check
        %p394 = pneg %p393
      $region42: #{tpu_custom_call.1} parent=5 // pred_check_branch
        %396 = sbr.rel (%p394) target = $region44
      $region43: #{tpu_custom_call.1} parent=5 // pred_region
        // Predicated region
        $region45: #{tpu_custom_call.1} parent=43 // pred_check
          %p397 = pneg %p52
        $region46: #{tpu_custom_call.1} parent=43 // pred_check_branch
          %399 = sbr.rel (%p397) target = $region48
        $region47: #{tpu_custom_call.1} parent=43 // pred_region
          %s400 = sand.u32 %s42, 1
          %s401 = scalar_lea.sflag [#allocation6], %s400
          %s402 = sand.u32 %s42, 1
          %s403 = smul.addr %s402, 128
          %s404 = scalar_lea.vmem [#allocation5], %s403
          %406 = vsyncadd %s401, 0
          %s407 = smul.addr %s32, 8
          %s408 = scalar_lea.hbm %s0, %s407
          %s409 = sshll.u32 %s408, 4
          %s410 = int_to_ptr.hbm [resolvable:$true] %s409
          %s411 = sshll.u32 %s404, 4
          %s412 = int_to_ptr.vmem [resolvable:$true] %s411
          %417 = dma.hbm_to_vmem [thread:$0]  %s410, 2048, %s412, %s401, 256, 128, 8
        $region48: #{tpu_custom_call.1} parent=43 // pred_fallthru
          _
        // Predicated region
        $region49: #{tpu_custom_call.1} parent=43 // pred_check
          %p418 = pneg %p78
        $region50: #{tpu_custom_call.1} parent=43 // pred_check_branch
          %420 = sbr.rel (%p418) target = $region52
        $region51: #{tpu_custom_call.1} parent=43 // pred_region
          %s421 = sand.u32 %s68, 1
          %s422 = sand.u32 %s68, 1
          %s423 = smul.addr %s422, 16
          %s424 = scalar_lea.vmem [#allocation8], %s423
          %s425 = smul.addr %s32, 8
          %s426 = scalar_lea.vmem %s1, %s425
          // Predicated region
          $region53: #{tpu_custom_call.1} parent=51 // pred_check
            _
          $region54: #{tpu_custom_call.1} parent=51 // pred_check_branch
            %428 = sbr.rel (0) target = $region56
          $region55: #{tpu_custom_call.1} parent=51 // pred_region
            // Predicated region
            $region57: #{tpu_custom_call.1} parent=55 // pred_check
              _
            $region58: #{tpu_custom_call.1} parent=55 // pred_check_branch
              %430 = sbr.rel (0) target = $region60
            $region59: #{tpu_custom_call.1} parent=55 // pred_region
              // Predicated region
              $region72: #{tpu_custom_call.1} parent=59 // pred_check
                _
              $region73: #{tpu_custom_call.1} parent=59 // pred_check_branch
                %448 = sbr.rel (0) target = $region75
              $region74: #{tpu_custom_call.1} parent=59 // pred_region
                loop: start=0, step=1, limit=1
                $region76: #{tpu_custom_call.1} parent=74 // loop_pre_header
                  _
                $region77: #{tpu_custom_call.1} parent=74 // loop_header
                  %s450 = sphi 0, %s454
                  %p451 = scmp.ge.s32.totalorder %s450, 1
                  %s455 = sphi %s426, %s426
                  %s456 = sphi %s424, %s424
                $region78: #{tpu_custom_call.1} parent=74 // loop_header_branch
                  %453 = sbr.rel (%p451) target = $region82
                $region79: #{tpu_custom_call.1} parent=74 // loop_body
                  %v457 = vld [vmem:[%s455] sm:$0xff]
                  %458 = vst [vmem:[%s456] sm:$0xff] %v457
                  %v459 = vld [vmem:[%s455 + $0x10] sm:$0xff]
                  %460 = vst [vmem:[%s456 + $0x8] sm:$0xff] %v459
                $region80: #{tpu_custom_call.1} parent=74 // loop_footer
                  %s454 = sadd.s32 1, %s450
                $region81: #{tpu_custom_call.1} parent=74 // loop_footer_branch
                  %449 = sbr.rel target = $region77
                $region82: #{tpu_custom_call.1} parent=74 // loop_exit
                  _
              $region75: #{tpu_custom_call.1} parent=59 // pred_fallthru
                _
              // Predicated region
              $region83: #{tpu_custom_call.1} parent=59 // pred_check
                _
              $region84: #{tpu_custom_call.1} parent=59 // pred_check_branch
                %462 = sbr.rel target = $region86
              $region85: #{tpu_custom_call.1} parent=59 // pred_region
                _
              $region86: #{tpu_custom_call.1} parent=59 // pred_fallthru
                _
            $region60: #{tpu_custom_call.1} parent=55 // pred_fallthru
              _
            // Predicated region
            $region61: #{tpu_custom_call.1} parent=55 // pred_check
              _
            $region62: #{tpu_custom_call.1} parent=55 // pred_check_branch
              %432 = sbr.rel target = $region64
            $region63: #{tpu_custom_call.1} parent=55 // pred_region
              %s434 = ssub.s32 256, 1
              loop: start=0, step=1, limit=1
              $region65: #{tpu_custom_call.1} parent=63 // loop_pre_header
                _
              $region66: #{tpu_custom_call.1} parent=63 // loop_header
                %s436 = sphi 0, %s440
                %p437 = scmp.ge.s32.totalorder %s436, 1
                %s441 = sphi %s426, %s426
                %s442 = sphi %s424, %s424
              $region67: #{tpu_custom_call.1} parent=63 // loop_header_branch
                %439 = sbr.rel (%p437) target = $region71
              $region68: #{tpu_custom_call.1} parent=63 // loop_body
                %v443 = vld [vmem:[%s441] sm:%s434]
                %444 = vst [vmem:[%s442] sm:%s434] %v443
                %v445 = vld [vmem:[%s441 + $0x10] sm:%s434]
                %446 = vst [vmem:[%s442 + $0x8] sm:%s434] %v445
              $region69: #{tpu_custom_call.1} parent=63 // loop_footer
                %s440 = sadd.s32 1, %s436
              $region70: #{tpu_custom_call.1} parent=63 // loop_footer_branch
                %435 = sbr.rel target = $region66
              $region71: #{tpu_custom_call.1} parent=63 // loop_exit
                _
            $region64: #{tpu_custom_call.1} parent=55 // pred_fallthru
              _
          $region56: #{tpu_custom_call.1} parent=51 // pred_fallthru
            _
          %463 = vnop
        $region52: #{tpu_custom_call.1} parent=43 // pred_fallthru
          _
        // Predicated region
        $region87: #{tpu_custom_call.1} parent=43 // pred_check
          %p464 = pneg %p104
        $region88: #{tpu_custom_call.1} parent=43 // pred_check_branch
          %466 = sbr.rel (%p464) target = $region90
        $region89: #{tpu_custom_call.1} parent=43 // pred_region
          %s467 = sand.u32 %s32, 1
          %s468 = scalar_lea.sflag [#allocation10], %s467
          %s469 = sand.u32 %s94, 1
          %s470 = smul.addr %s469, 16
          %s471 = scalar_lea.vmem [#allocation9], %s470
          %473 = vsyncadd %s468, 0
          %s474 = smul.addr %s32, 8
          %s475 = scalar_lea.hbm %s2, %s474
          %s476 = sshll.u32 %s475, 4
          %s477 = int_to_ptr.hbm [resolvable:$true] %s476
          %s478 = sshll.u32 %s471, 4
          %s479 = int_to_ptr.vmem [resolvable:$true] %s478
          %484 = dma.hbm_to_vmem [thread:$0]  %s477, 256, %s479, %s468, 256, 128, 8
        $region90: #{tpu_custom_call.1} parent=43 // pred_fallthru
          _
      $region44: #{tpu_custom_call.1} parent=5 // pred_fallthru
        _
      %p485 = scmp.le.s32.totalorder 1, %s32
      %p486 = scmp.lt.s32.totalorder %s32, 3
      %p487 = pnand %p485, %p486
      %p488 = pneg %p487
      // Predicated region
      $region91: #{tpu_custom_call.1} parent=5 // pred_check
        _
      $region92: #{tpu_custom_call.1} parent=5 // pred_check_branch
        %490 = sbr.rel (%p487) target = $region94
      $region93: #{tpu_custom_call.1} parent=5 // pred_region
        %s491 = ssub.s32 %s32, 1
        %s492 = sand.u32 %s45, 1
        %s493 = scalar_lea.sflag [#allocation6], %s492
        %s494 = sand.u32 %s45, 1
        %s495 = smul.addr %s494, 128
        %s496 = scalar_lea.vmem [#allocation5], %s495
        // Predicated region
        $region95: #{tpu_custom_call.1} parent=93 // pred_check
          %p497 = pneg %p58
        $region96: #{tpu_custom_call.1} parent=93 // pred_check_branch
          %499 = sbr.rel (%p497) target = $region98
        $region97: #{tpu_custom_call.1} parent=93 // pred_region
          %501 = dma.done %s493, 2048
        $region98: #{tpu_custom_call.1} parent=93 // pred_fallthru
          _
        %s502 = sand.u32 %s71, 1
        %s503 = sand.u32 %s71, 1
        %s504 = smul.addr %s503, 16
        %s505 = scalar_lea.vmem [#allocation8], %s504
        // Predicated region
        $region99: #{tpu_custom_call.1} parent=93 // pred_check
          %p506 = pneg %p84
        $region100: #{tpu_custom_call.1} parent=93 // pred_check_branch
          %508 = sbr.rel (%p506) target = $region102
        $region101: #{tpu_custom_call.1} parent=93 // pred_region
          _
        $region102: #{tpu_custom_call.1} parent=93 // pred_fallthru
          _
        %s509 = sand.u32 %s37, 1
        %s510 = scalar_lea.sflag [#allocation10], %s509
        %s511 = sand.u32 %s97, 1
        %s512 = smul.addr %s511, 16
        %s513 = scalar_lea.vmem [#allocation9], %s512
        // Predicated region
        $region103: #{tpu_custom_call.1} parent=93 // pred_check
          %p514 = pneg %p110
        $region104: #{tpu_custom_call.1} parent=93 // pred_check_branch
          %516 = sbr.rel (%p514) target = $region106
        $region105: #{tpu_custom_call.1} parent=93 // pred_region
          %518 = dma.done %s510, 256
        $region106: #{tpu_custom_call.1} parent=93 // pred_fallthru
          _
        // Predicated region
        $region107: #{tpu_custom_call.1} parent=93 // pred_check
          %p519 = pneg %p131
        $region108: #{tpu_custom_call.1} parent=93 // pred_check_branch
          %521 = sbr.rel (%p519) target = $region110
        $region109: #{tpu_custom_call.1} parent=93 // pred_region
          %523 = dma.done [#allocation10], 256
        $region110: #{tpu_custom_call.1} parent=93 // pred_fallthru
          _
        // Predicated region
        $region111: #{tpu_custom_call.1} parent=93 // pred_check
          %p524 = pneg %p152
        $region112: #{tpu_custom_call.1} parent=93 // pred_check_branch
          %526 = sbr.rel (%p524) target = $region114
        $region113: #{tpu_custom_call.1} parent=93 // pred_region
          %528 = dma.done [#allocation13], 1024
        $region114: #{tpu_custom_call.1} parent=93 // pred_fallthru
          _
        %s529 = sand.u32 %s45, 1
        %s530 = scalar_lea.sflag [#allocation6], %s529
        %s531 = sand.u32 %s45, 1
        %s532 = smul.addr %s531, 128
        %s533 = scalar_lea.vmem [#allocation5], %s532
        %p534 = pneg %p58
        %p535 = pneg %p55
        %s536 = sand.u32 %s71, 1
        %s537 = sand.u32 %s71, 1
        %s538 = smul.addr %s537, 16
        %s539 = scalar_lea.vmem [#allocation8], %s538
        %p540 = pneg %p84
        %p541 = pneg %p81
        %s542 = sand.u32 %s37, 1
        %s543 = scalar_lea.sflag [#allocation10], %s542
        %s544 = sand.u32 %s97, 1
        %s545 = smul.addr %s544, 16
        %s546 = scalar_lea.vmem [#allocation9], %s545
        %p547 = pneg %p110
        %p548 = pneg %p107
        %p549 = pneg %p131
        %p550 = pneg %p128
        %p551 = pneg %p152
        %p552 = pneg %p149
        %p553 = pneg %p173
        %p554 = pneg %p170
        %p555 = pneg %p194
        %p556 = pneg %p191
        %p557 = pneg %p215
        %p558 = pneg %p212
        %p559 = pneg %p236
        %p560 = pneg %p233
        %p561 = pneg %p257
        %p562 = pneg %p254
        %p563 = pneg %p283
        %p564 = pneg %p280
        %s565 = sand.u32 %s270, 1
        %s566 = scalar_lea.sflag [#allocation7], %s565
        %s567 = sand.u32 %s270, 1
        %s568 = smul.addr %s567, 128
        %s569 = scalar_lea.vmem [#allocation14], %s568
        %p570 = pneg %p309
        %p571 = pneg %p306
        %s572 = sand.u32 %s37, 1
        %s573 = scalar_lea.sflag [#allocation16], %s572
        %s574 = sand.u32 %s296, 1
        %s575 = smul.addr %s574, 16
        %s576 = scalar_lea.vmem [#allocation15], %s575
        %p577 = pneg %p335
        %p578 = pneg %p332
        %s579 = sand.u32 %s37, 1
        %s580 = scalar_lea.sflag [#allocation16], %s579
        %s581 = sand.u32 %s322, 1
        %s582 = smul.addr %s581, 16
        %s583 = scalar_lea.vmem [#allocation17], %s582
        %v585 = vld [vmem:[#allocation11] sm:$0xff]
        %v586 = vld [vmem:[#allocation11 + $0x8] sm:$0xff]
        %v587 = vld [vmem:[#allocation12] sm:$0xff]
        %v588 = vld [vmem:[#allocation12 + $0x8] sm:$0xff]
        %v589 = vld [vmem:[#allocation12 + $0x10] sm:$0xff]
        %v590 = vld [vmem:[#allocation12 + $0x18] sm:$0xff]
        %v591 = vld [vmem:[#allocation12 + $0x20] sm:$0xff]
        %v592 = vld [vmem:[#allocation12 + $0x28] sm:$0xff]
        %v593 = vld [vmem:[#allocation12 + $0x30] sm:$0xff]
        %v594 = vld [vmem:[#allocation12 + $0x38] sm:$0xff]
        %v595 = vld [vmem:[%s496] sm:$0xff]
        %v596 = vld [vmem:[%s496 + $0x8] sm:$0xff]
        %v597 = vld [vmem:[%s496 + $0x10] sm:$0xff]
        %v598 = vld [vmem:[%s496 + $0x18] sm:$0xff]
        %v599 = vld [vmem:[%s496 + $0x20] sm:$0xff]
        %v600 = vld [vmem:[%s496 + $0x28] sm:$0xff]
        %v601 = vld [vmem:[%s496 + $0x30] sm:$0xff]
        %v602 = vld [vmem:[%s496 + $0x38] sm:$0xff]
        %v603 = vld [vmem:[%s496 + $0x40] sm:$0xff]
        %v604 = vld [vmem:[%s496 + $0x48] sm:$0xff]
        %v605 = vld [vmem:[%s496 + $0x50] sm:$0xff]
        %v606 = vld [vmem:[%s496 + $0x58] sm:$0xff]
        %v607 = vld [vmem:[%s496 + $0x60] sm:$0xff]
        %v608 = vld [vmem:[%s496 + $0x68] sm:$0xff]
        %v609 = vld [vmem:[%s496 + $0x70] sm:$0xff]
        %v610 = vld [vmem:[%s496 + $0x78] sm:$0xff]
        %v611 = vpack.c.bf16 %v596, %v595
        %v612 = vpack.c.bf16 %v598, %v597
        %v613 = vpack.c.bf16 %v600, %v599
        %v614 = vpack.c.bf16 %v602, %v601
        %v615 = vpack.c.bf16 %v604, %v603
        %v616 = vpack.c.bf16 %v606, %v605
        %v617 = vpack.c.bf16 %v608, %v607
        %v618 = vpack.c.bf16 %v610, %v609
        %v619 = vld [vmem:[%s5] sm:$0x3]
        %v621 = vperm.slane %v619, 0
        %v622 = vperm.slane %v619, 1
        %v627 = vunpack.c.l.b16 %v585
        %v628 = vunpack.c.h.b16 %v585
        %v629 = vunpack.c.l.b16 %v586
        %v630 = vunpack.c.h.b16 %v586
        %v631 = vpack.c.b16 %v629, %v627
        %v632 = vpack.c.b16 %v630, %v628
        %vm635 = vcmask 130048
        %v637 = vsel %vm635, %v611, 0
        %v640 = vsel %vm635, %v612, 0
        %v643 = vsel %vm635, %v613, 0
        %v646 = vsel %vm635, %v614, 0
        %v649 = vsel %vm635, %v615, 0
        %v652 = vsel %vm635, %v616, 0
        %v655 = vsel %vm635, %v617, 0
        %v658 = vsel %vm635, %v618, 0
        %660 = vmatpush.bf16.msra.mxu0 0
        %661 = vmatpush.bf16.msra.mxu0 0
        %662 = vmatpush.bf16.msra.mxu0 0
        %663 = vmatpush.bf16.msra.mxu0 0
        %664 = vmatpush.bf16.msra.mxu0 0
        %665 = vmatpush.bf16.msra.mxu0 0
        %666 = vmatpush.bf16.msra.mxu0 0
        %667 = vmatpush.bf16.msra.mxu0 %v631
        %668 = vmatmul.bf16.gmra.mxu0 %v637
        %v669 = vpop.f32.mrf.mxu0
        %v670 = vadd.f32 %v621, %v669
        %v671 = vpop.f32.mrf.mxu0
        %v672 = vadd.f32 %v621, %v671
        %673 = vmatmul.bf16.gmra.mxu0 %v640
        %v674 = vpop.f32.mrf.mxu0
        %v675 = vadd.f32 %v621, %v674
        %v676 = vpop.f32.mrf.mxu0
        %v677 = vadd.f32 %v621, %v676
        %678 = vmatmul.bf16.gmra.mxu0 %v643
        %v679 = vpop.f32.mrf.mxu0
        %v680 = vadd.f32 %v621, %v679
        %v681 = vpop.f32.mrf.mxu0
        %v682 = vadd.f32 %v621, %v681
        %683 = vmatmul.bf16.gmra.mxu0 %v646
        %v684 = vpop.f32.mrf.mxu0
        %v685 = vadd.f32 %v621, %v684
        %v686 = vpop.f32.mrf.mxu0
        %v687 = vadd.f32 %v621, %v686
        %688 = vmatmul.bf16.gmra.mxu0 %v649
        %v689 = vpop.f32.mrf.mxu0
        %v690 = vadd.f32 %v621, %v689
        %v691 = vpop.f32.mrf.mxu0
        %v692 = vadd.f32 %v621, %v691
        %693 = vmatmul.bf16.gmra.mxu0 %v652
        %v694 = vpop.f32.mrf.mxu0
        %v695 = vadd.f32 %v621, %v694
        %v696 = vpop.f32.mrf.mxu0
        %v697 = vadd.f32 %v621, %v696
        %698 = vmatmul.bf16.gmra.mxu0 %v655
        %v699 = vpop.f32.mrf.mxu0
        %v700 = vadd.f32 %v621, %v699
        %v701 = vpop.f32.mrf.mxu0
        %v702 = vadd.f32 %v621, %v701
        %703 = vmatmul.bf16.gmra.mxu0 %v658
        %v704 = vpop.f32.mrf.mxu0
        %v705 = vadd.f32 %v621, %v704
        %v706 = vpop.f32.mrf.mxu0
        %v707 = vadd.f32 %v621, %v706
        %708 = vdwg.mxu0
        %709 = vmatpush.bf16.msra.mxu0 0
        %710 = vmatpush.bf16.msra.mxu0 0
        %711 = vmatpush.bf16.msra.mxu0 0
        %712 = vmatpush.bf16.msra.mxu0 0
        %713 = vmatpush.bf16.msra.mxu0 0
        %714 = vmatpush.bf16.msra.mxu0 0
        %715 = vmatpush.bf16.msra.mxu0 0
        %716 = vmatpush.bf16.msra.mxu0 %v632
        %717 = vmatmul.bf16.gmra.mxu0 %v637
        %v718 = vpop.f32.mrf.mxu0
        %v719 = vadd.f32 %v622, %v718
        %v720 = vpop.f32.mrf.mxu0
        %v721 = vadd.f32 %v622, %v720
        %722 = vmatmul.bf16.gmra.mxu0 %v640
        %v723 = vpop.f32.mrf.mxu0
        %v724 = vadd.f32 %v622, %v723
        %v725 = vpop.f32.mrf.mxu0
        %v726 = vadd.f32 %v622, %v725
        %727 = vmatmul.bf16.gmra.mxu0 %v643
        %v728 = vpop.f32.mrf.mxu0
        %v729 = vadd.f32 %v622, %v728
        %v730 = vpop.f32.mrf.mxu0
        %v731 = vadd.f32 %v622, %v730
        %732 = vmatmul.bf16.gmra.mxu0 %v646
        %v733 = vpop.f32.mrf.mxu0
        %v734 = vadd.f32 %v622, %v733
        %v735 = vpop.f32.mrf.mxu0
        %v736 = vadd.f32 %v622, %v735
        %737 = vmatmul.bf16.gmra.mxu0 %v649
        %v738 = vpop.f32.mrf.mxu0
        %v739 = vadd.f32 %v622, %v738
        %v740 = vpop.f32.mrf.mxu0
        %v741 = vadd.f32 %v622, %v740
        %742 = vmatmul.bf16.gmra.mxu0 %v652
        %v743 = vpop.f32.mrf.mxu0
        %v744 = vadd.f32 %v622, %v743
        %v745 = vpop.f32.mrf.mxu0
        %v746 = vadd.f32 %v622, %v745
        %747 = vmatmul.bf16.gmra.mxu0 %v655
        %v748 = vpop.f32.mrf.mxu0
        %v749 = vadd.f32 %v622, %v748
        %v750 = vpop.f32.mrf.mxu0
        %v751 = vadd.f32 %v622, %v750
        %752 = vmatmul.bf16.gmra.mxu0 %v658
        %v753 = vpop.f32.mrf.mxu0
        %v754 = vadd.f32 %v622, %v753
        %v755 = vpop.f32.mrf.mxu0
        %v756 = vadd.f32 %v622, %v755
        %757 = vdwg.mxu0
        %758 = vst [vmem:[#allocation2] sm:$0xff] %v670
        %759 = vst [vmem:[#allocation2 + $0x8] sm:$0xff] %v719
        %760 = vst [vmem:[#allocation2 + $0x10] sm:$0xff] %v672
        %761 = vst [vmem:[#allocation2 + $0x18] sm:$0xff] %v721
        %762 = vst [vmem:[#allocation2 + $0x20] sm:$0xff] %v675
        %763 = vst [vmem:[#allocation2 + $0x28] sm:$0xff] %v724
        %764 = vst [vmem:[#allocation2 + $0x30] sm:$0xff] %v677
        %765 = vst [vmem:[#allocation2 + $0x38] sm:$0xff] %v726
        %766 = vst [vmem:[#allocation2 + $0x40] sm:$0xff] %v680
        %767 = vst [vmem:[#allocation2 + $0x48] sm:$0xff] %v729
        %768 = vst [vmem:[#allocation2 + $0x50] sm:$0xff] %v682
        %769 = vst [vmem:[#allocation2 + $0x58] sm:$0xff] %v731
        %770 = vst [vmem:[#allocation2 + $0x60] sm:$0xff] %v685
        %771 = vst [vmem:[#allocation2 + $0x68] sm:$0xff] %v734
        %772 = vst [vmem:[#allocation2 + $0x70] sm:$0xff] %v687
        %773 = vst [vmem:[#allocation2 + $0x78] sm:$0xff] %v736
        %774 = vst [vmem:[#allocation2 + $0x80] sm:$0xff] %v690
        %775 = vst [vmem:[#allocation2 + $0x88] sm:$0xff] %v739
        %776 = vst [vmem:[#allocation2 + $0x90] sm:$0xff] %v692
        %777 = vst [vmem:[#allocation2 + $0x98] sm:$0xff] %v741
        %778 = vst [vmem:[#allocation2 + $0xa0] sm:$0xff] %v695
        %779 = vst [vmem:[#allocation2 + $0xa8] sm:$0xff] %v744
        %780 = vst [vmem:[#allocation2 + $0xb0] sm:$0xff] %v697
        %781 = vst [vmem:[#allocation2 + $0xb8] sm:$0xff] %v746
        %782 = vst [vmem:[#allocation2 + $0xc0] sm:$0xff] %v700
        %783 = vst [vmem:[#allocation2 + $0xc8] sm:$0xff] %v749
        %784 = vst [vmem:[#allocation2 + $0xd0] sm:$0xff] %v702
        %785 = vst [vmem:[#allocation2 + $0xd8] sm:$0xff] %v751
        %786 = vst [vmem:[#allocation2 + $0xe0] sm:$0xff] %v705
        %787 = vst [vmem:[#allocation2 + $0xe8] sm:$0xff] %v754
        %788 = vst [vmem:[#allocation2 + $0xf0] sm:$0xff] %v707
        %789 = vst [vmem:[#allocation2 + $0xf8] sm:$0xff] %v756
        %v790 = vlaneseq
        %v791 = vand.u32 %v790, 127
        %v792 = vadd.s32 %v791, 128
        %vm793 = vcmp.ge.s32.totalorder %v791, 128
        %vm794 = vcmp.ge.s32.totalorder %v792, 128
        %vm795 = vcmp.lt.s32.totalorder %v791, 192
        %vm796 = vcmp.lt.s32.totalorder %v792, 192
        %vm797 = vmand %vm793, %vm795
        %vm798 = vmand %vm794, %vm796
        %v799 = vsel %vm797, 1.0, 0.5
        %v800 = vsel %vm798, 1.0, 0.5
        %v801 = vsel %vm797, 0.0, 0.5
        %v802 = vsel %vm798, 0.0, 0.5
        %vm803 = vcmp.lt.s32.totalorder %v791, 0
        %v804 = vsub.s32 0, %v791
        %v805 = vsel %vm803, %v804, %v791
        %v806 = vshrl.u32 %v805, 6
        %v807 = vand.u32 %v805, 63
        %v808 = vsub.s32 0, %v807
        %v809 = vsel %vm803, %v808, %v807
        %vm810 = vcmp.lt.s32.totalorder %v792, 0
        %v811 = vsub.s32 0, %v792
        %v812 = vsel %vm810, %v811, %v792
        %v813 = vshrl.u32 %v812, 6
        %v814 = vand.u32 %v812, 63
        %v815 = vsub.s32 0, %v814
        %v816 = vsel %vm810, %v815, %v814
        %vm817 = vcmp.ne.s32.totalorder %v809, 0
        %vm818 = vcmp.ne.s32.totalorder %v816, 0
        %vm819 = vcmp.lt.s32.totalorder %v809, 0
        %vm820 = vcmp.lt.s32.totalorder %v816, 0
        %vm821 = vmand %vm819, %vm817
        %vm822 = vmand %vm820, %vm818
        %v823 = vadd.s32 %v809, 64
        %v824 = vadd.s32 %v816, 64
        %v825 = vsel %vm821, %v823, %v809
        %v826 = vsel %vm822, %v824, %v816
        %vm827 = vcmp.lt.s32.totalorder %v825, 32
        %vm828 = vcmp.lt.s32.totalorder %v826, 32
        %v829 = vld [vmem:[%s505] sm:$0xff]
        %s830 = scalar_lea.vmem %s505, 8 [#allocation8]
        %v831 = vld [vmem:[%s830] sm:$0xff]
        %833 = vrot.lane.b32.xlu0 %v831, 32
        %v834 = vpop.permute.xlu0 %833
        %vm836 = vcmask 261120
        %v837 = vsel %vm836, %v829, %v834
        %v838 = vld [vmem:[%s513] sm:$0xff]
        %s839 = scalar_lea.vmem %s513, 8 [#allocation9]
        %v840 = vld [vmem:[%s839] sm:$0xff]
        %842 = vrot.lane.b32.xlu0 %v840, 32
        %v843 = vpop.permute.xlu0 %842
        %v845 = vsel %vm836, %v838, %v843
        %v846 = vld [vmem:[#allocation2] sm:$0xff]
        %v847 = vld [vmem:[#allocation2 + $0x8] sm:$0xff]
        %s848 = scalar_lea.vmem [#allocation2], 240
        %v849 = vld [vmem:[%s848] sm:$0xff]
        %v850 = vld [vmem:[%s848 + $0x8] sm:$0xff]
        %v851 = vsel %vm827, %v846, %v849
        %v852 = vsel %vm828, %v847, %v850
        %v853 = vpack.c.bf16 %v837, %v837
        %v862 = vunpack.c.l.b16 %v587
        %v863 = vunpack.c.h.b16 %v587
        %v864 = vunpack.c.l.b16 %v588
        %v865 = vunpack.c.h.b16 %v588
        %v866 = vunpack.c.l.b16 %v589
        %v867 = vunpack.c.h.b16 %v589
        %v868 = vunpack.c.l.b16 %v590
        %v869 = vunpack.c.h.b16 %v590
        %v870 = vunpack.c.l.b16 %v591
        %v871 = vunpack.c.h.b16 %v591
        %v872 = vunpack.c.l.b16 %v592
        %v873 = vunpack.c.h.b16 %v592
        %v874 = vunpack.c.l.b16 %v593
        %v875 = vunpack.c.h.b16 %v593
        %v876 = vunpack.c.l.b16 %v594
        %v877 = vunpack.c.h.b16 %v594
        %v878 = vpack.c.b16 %v864, %v862
        %v879 = vpack.c.b16 %v865, %v863
        %v880 = vpack.c.b16 %v868, %v866
        %v881 = vpack.c.b16 %v869, %v867
        %v882 = vpack.c.b16 %v872, %v870
        %v883 = vpack.c.b16 %v873, %v871
        %v884 = vpack.c.b16 %v876, %v874
        %v885 = vpack.c.b16 %v877, %v875
        %vm894 = vcmask 523264
        %v896 = vsel %vm894, %v853, 0
        %898 = vmatpush.bf16.msra.mxu0 0
        %899 = vmatpush.bf16.msra.mxu0 0
        %900 = vmatpush.bf16.msra.mxu0 0
        %901 = vmatpush.bf16.msra.mxu0 0
        %902 = vmatpush.bf16.msra.mxu0 %v884
        %903 = vmatpush.bf16.msra.mxu0 %v882
        %904 = vmatpush.bf16.msra.mxu0 %v880
        %905 = vmatpush.bf16.msra.mxu0 %v878
        %906 = vmatmul.bf16.gmra.mxu0 %v896
        %v907 = vpop.f32.mrf.mxu0
        %v908 = vadd.f32 0.0, %v907
        %v909 = vpop.f32.mrf.mxu0
        %910 = vdwg.mxu0
        %911 = vmatpush.bf16.msra.mxu0 0
        %912 = vmatpush.bf16.msra.mxu0 0
        %913 = vmatpush.bf16.msra.mxu0 0
        %914 = vmatpush.bf16.msra.mxu0 0
        %915 = vmatpush.bf16.msra.mxu0 %v885
        %916 = vmatpush.bf16.msra.mxu0 %v883
        %917 = vmatpush.bf16.msra.mxu0 %v881
        %918 = vmatpush.bf16.msra.mxu0 %v879
        %919 = vmatmul.bf16.gmra.mxu0 %v896
        %v920 = vpop.f32.mrf.mxu0
        %v921 = vadd.f32 0.0, %v920
        %v922 = vpop.f32.mrf.mxu0
        %923 = vdwg.mxu0
        %v924 = vadd.f32 %v851, %v908
        %v925 = vadd.f32 %v852, %v921
        %v926 = vmul.f32 %v924, %v799
        %v927 = vmul.f32 %v925, %v800
        %v928 = vtanh.pop %v926
        %v929 = vtanh.pop %v927
        %v930 = vmul.f32 %v928, %v799
        %v931 = vmul.f32 %v929, %v800
        %v932 = vadd.f32 %v930, %v801
        %v933 = vadd.f32 %v931, %v802
        %935 = vrot.lane.b32.xlu0 %v845, 64
        %v936 = vpop.permute.xlu0 %935
        %v938 = vmul.f32 %v932, %v936
        %v939 = vmul.f32 %v932, %v933
        %941 = vrot.lane.b32.xlu0 %v939, 64
        %v942 = vpop.permute.xlu0 %941
        %v944 = vadd.f32 %v938, %v942
        %v945 = vtanh.pop %v944
        %v946 = vmul.f32 %v933, %v945
        %948 = vrot.lane.b32.xlu0 %v946, 64
        %v949 = vpop.permute.xlu0 %948
        %951 = vst.msk [vmem:[#allocation3] sm:$0xff] %vm894, %v949
        %s952 = scalar_lea.vmem [#allocation2], 16
        %v953 = vld [vmem:[%s952] sm:$0xff]
        %v954 = vld [vmem:[%s952 + $0x8] sm:$0xff]
        %s955 = scalar_lea.vmem [#allocation2], 224
        %v956 = vld [vmem:[%s955] sm:$0xff]
        %v957 = vld [vmem:[%s955 + $0x8] sm:$0xff]
        %v958 = vsel %vm827, %v953, %v956
        %v959 = vsel %vm828, %v954, %v957
        %v960 = vpack.c.bf16 %v946, %v946
        %962 = vrot.lane.b32.xlu0 %v960, 64
        %v963 = vpop.permute.xlu0 %962
        %v965 = vsel %vm894, %v963, 0
        %967 = vmatpush.bf16.msra.mxu0 0
        %968 = vmatpush.bf16.msra.mxu0 0
        %969 = vmatpush.bf16.msra.mxu0 0
        %970 = vmatpush.bf16.msra.mxu0 0
        %971 = vmatpush.bf16.msra.mxu0 %v884
        %972 = vmatpush.bf16.msra.mxu0 %v882
        %973 = vmatpush.bf16.msra.mxu0 %v880
        %974 = vmatpush.bf16.msra.mxu0 %v878
        %975 = vmatmul.bf16.gmra.mxu0 %v965
        %v976 = vpop.f32.mrf.mxu0
        %v977 = vadd.f32 0.0, %v976
        %v978 = vpop.f32.mrf.mxu0
        %979 = vdwg.mxu0
        %980 = vmatpush.bf16.msra.mxu0 0
        %981 = vmatpush.bf16.msra.mxu0 0
        %982 = vmatpush.bf16.msra.mxu0 0
        %983 = vmatpush.bf16.msra.mxu0 0
        %984 = vmatpush.bf16.msra.mxu0 %v885
        %985 = vmatpush.bf16.msra.mxu0 %v883
        %986 = vmatpush.bf16.msra.mxu0 %v881
        %987 = vmatpush.bf16.msra.mxu0 %v879
        %988 = vmatmul.bf16.gmra.mxu0 %v965
        %v989 = vpop.f32.mrf.mxu0
        %v990 = vadd.f32 0.0, %v989
        %v991 = vpop.f32.mrf.mxu0
        %992 = vdwg.mxu0
        %v993 = vadd.f32 %v958, %v977
        %v994 = vadd.f32 %v959, %v990
        %v995 = vmul.f32 %v993, %v799
        %v996 = vmul.f32 %v994, %v800
        %v997 = vtanh.pop %v995
        %v998 = vtanh.pop %v996
        %v999 = vmul.f32 %v997, %v799
        %v1000 = vmul.f32 %v998, %v800
        %v1001 = vadd.f32 %v999, %v801
        %v1002 = vadd.f32 %v1000, %v802
        %v1003 = vmul.f32 %v1001, %v944
        %v1004 = vmul.f32 %v1001, %v1002
        %1006 = vrot.lane.b32.xlu0 %v1004, 64
        %v1007 = vpop.permute.xlu0 %1006
        %v1009 = vadd.f32 %v1003, %v1007
        %v1010 = vtanh.pop %v1009
        %v1011 = vmul.f32 %v1002, %v1010
        %1013 = vrot.lane.b32.xlu0 %v1011, 64
        %v1014 = vpop.permute.xlu0 %1013
        %s1016 = scalar_lea.vmem [#allocation3], 8
        %1017 = vst.msk [vmem:[%s1016] sm:$0xff] %vm894, %v1014
        %s1018 = scalar_lea.vmem [#allocation2], 32
        %v1019 = vld [vmem:[%s1018] sm:$0xff]
        %v1020 = vld [vmem:[%s1018 + $0x8] sm:$0xff]
        %s1021 = scalar_lea.vmem [#allocation2], 208
        %v1022 = vld [vmem:[%s1021] sm:$0xff]
        %v1023 = vld [vmem:[%s1021 + $0x8] sm:$0xff]
        %v1024 = vsel %vm827, %v1019, %v1022
        %v1025 = vsel %vm828, %v1020, %v1023
        %v1026 = vpack.c.bf16 %v1011, %v1011
        %1028 = vrot.lane.b32.xlu0 %v1026, 64
        %v1029 = vpop.permute.xlu0 %1028
        %v1031 = vsel %vm894, %v1029, 0
        %1033 = vmatpush.bf16.msra.mxu0 0
        %1034 = vmatpush.bf16.msra.mxu0 0
        %1035 = vmatpush.bf16.msra.mxu0 0
        %1036 = vmatpush.bf16.msra.mxu0 0
        %1037 = vmatpush.bf16.msra.mxu0 %v884
        %1038 = vmatpush.bf16.msra.mxu0 %v882
        %1039 = vmatpush.bf16.msra.mxu0 %v880
        %1040 = vmatpush.bf16.msra.mxu0 %v878
        %1041 = vmatmul.bf16.gmra.mxu0 %v1031
        %v1042 = vpop.f32.mrf.mxu0
        %v1043 = vadd.f32 0.0, %v1042
        %v1044 = vpop.f32.mrf.mxu0
        %1045 = vdwg.mxu0
        %1046 = vmatpush.bf16.msra.mxu0 0
        %1047 = vmatpush.bf16.msra.mxu0 0
        %1048 = vmatpush.bf16.msra.mxu0 0
        %1049 = vmatpush.bf16.msra.mxu0 0
        %1050 = vmatpush.bf16.msra.mxu0 %v885
        %1051 = vmatpush.bf16.msra.mxu0 %v883
        %1052 = vmatpush.bf16.msra.mxu0 %v881
        %1053 = vmatpush.bf16.msra.mxu0 %v879
        %1054 = vmatmul.bf16.gmra.mxu0 %v1031
        %v1055 = vpop.f32.mrf.mxu0
        %v1056 = vadd.f32 0.0, %v1055
        %v1057 = vpop.f32.mrf.mxu0
        %1058 = vdwg.mxu0
        %v1059 = vadd.f32 %v1024, %v1043
        %v1060 = vadd.f32 %v1025, %v1056
        %v1061 = vmul.f32 %v1059, %v799
        %v1062 = vmul.f32 %v1060, %v800
        %v1063 = vtanh.pop %v1061
        %v1064 = vtanh.pop %v1062
        %v1065 = vmul.f32 %v1063, %v799
        %v1066 = vmul.f32 %v1064, %v800
        %v1067 = vadd.f32 %v1065, %v801
        %v1068 = vadd.f32 %v1066, %v802
        %v1069 = vmul.f32 %v1067, %v1009
        %v1070 = vmul.f32 %v1067, %v1068
        %1072 = vrot.lane.b32.xlu0 %v1070, 64
        %v1073 = vpop.permute.xlu0 %1072
        %v1075 = vadd.f32 %v1069, %v1073
        %v1076 = vtanh.pop %v1075
        %v1077 = vmul.f32 %v1068, %v1076
        %1079 = vrot.lane.b32.xlu0 %v1077, 64
        %v1080 = vpop.permute.xlu0 %1079
        %s1082 = scalar_lea.vmem [#allocation3], 16
        %1083 = vst.msk [vmem:[%s1082] sm:$0xff] %vm894, %v1080
        %s1084 = scalar_lea.vmem [#allocation2], 48
        %v1085 = vld [vmem:[%s1084] sm:$0xff]
        %v1086 = vld [vmem:[%s1084 + $0x8] sm:$0xff]
        %s1087 = scalar_lea.vmem [#allocation2], 192
        %v1088 = vld [vmem:[%s1087] sm:$0xff]
        %v1089 = vld [vmem:[%s1087 + $0x8] sm:$0xff]
        %v1090 = vsel %vm827, %v1085, %v1088
        %v1091 = vsel %vm828, %v1086, %v1089
        %v1092 = vpack.c.bf16 %v1077, %v1077
        %1094 = vrot.lane.b32.xlu0 %v1092, 64
        %v1095 = vpop.permute.xlu0 %1094
        %v1097 = vsel %vm894, %v1095, 0
        %1099 = vmatpush.bf16.msra.mxu0 0
        %1100 = vmatpush.bf16.msra.mxu0 0
        %1101 = vmatpush.bf16.msra.mxu0 0
        %1102 = vmatpush.bf16.msra.mxu0 0
        %1103 = vmatpush.bf16.msra.mxu0 %v884
        %1104 = vmatpush.bf16.msra.mxu0 %v882
        %1105 = vmatpush.bf16.msra.mxu0 %v880
        %1106 = vmatpush.bf16.msra.mxu0 %v878
        %1107 = vmatmul.bf16.gmra.mxu0 %v1097
        %v1108 = vpop.f32.mrf.mxu0
        %v1109 = vadd.f32 0.0, %v1108
        %v1110 = vpop.f32.mrf.mxu0
        %1111 = vdwg.mxu0
        %1112 = vmatpush.bf16.msra.mxu0 0
        %1113 = vmatpush.bf16.msra.mxu0 0
        %1114 = vmatpush.bf16.msra.mxu0 0
        %1115 = vmatpush.bf16.msra.mxu0 0
        %1116 = vmatpush.bf16.msra.mxu0 %v885
        %1117 = vmatpush.bf16.msra.mxu0 %v883
        %1118 = vmatpush.bf16.msra.mxu0 %v881
        %1119 = vmatpush.bf16.msra.mxu0 %v879
        %1120 = vmatmul.bf16.gmra.mxu0 %v1097
        %v1121 = vpop.f32.mrf.mxu0
        %v1122 = vadd.f32 0.0, %v1121
        %v1123 = vpop.f32.mrf.mxu0
        %1124 = vdwg.mxu0
        %v1125 = vadd.f32 %v1090, %v1109
        %v1126 = vadd.f32 %v1091, %v1122
        %v1127 = vmul.f32 %v1125, %v799
        %v1128 = vmul.f32 %v1126, %v800
        %v1129 = vtanh.pop %v1127
        %v1130 = vtanh.pop %v1128
        %v1131 = vmul.f32 %v1129, %v799
        %v1132 = vmul.f32 %v1130, %v800
        %v1133 = vadd.f32 %v1131, %v801
        %v1134 = vadd.f32 %v1132, %v802
        %v1135 = vmul.f32 %v1133, %v1075
        %v1136 = vmul.f32 %v1133, %v1134
        %1138 = vrot.lane.b32.xlu0 %v1136, 64
        %v1139 = vpop.permute.xlu0 %1138
        %v1141 = vadd.f32 %v1135, %v1139
        %v1142 = vtanh.pop %v1141
        %v1143 = vmul.f32 %v1134, %v1142
        %1145 = vrot.lane.b32.xlu0 %v1143, 64
        %v1146 = vpop.permute.xlu0 %1145
        %s1148 = scalar_lea.vmem [#allocation3], 24
        %1149 = vst.msk [vmem:[%s1148] sm:$0xff] %vm894, %v1146
        %s1150 = scalar_lea.vmem [#allocation2], 64
        %v1151 = vld [vmem:[%s1150] sm:$0xff]
        %v1152 = vld [vmem:[%s1150 + $0x8] sm:$0xff]
        %s1153 = scalar_lea.vmem [#allocation2], 176
        %v1154 = vld [vmem:[%s1153] sm:$0xff]
        %v1155 = vld [vmem:[%s1153 + $0x8] sm:$0xff]
        %v1156 = vsel %vm827, %v1151, %v1154
        %v1157 = vsel %vm828, %v1152, %v1155
        %v1158 = vpack.c.bf16 %v1143, %v1143
        %1160 = vrot.lane.b32.xlu0 %v1158, 64
        %v1161 = vpop.permute.xlu0 %1160
        %v1163 = vsel %vm894, %v1161, 0
        %1165 = vmatpush.bf16.msra.mxu0 0
        %1166 = vmatpush.bf16.msra.mxu0 0
        %1167 = vmatpush.bf16.msra.mxu0 0
        %1168 = vmatpush.bf16.msra.mxu0 0
        %1169 = vmatpush.bf16.msra.mxu0 %v884
        %1170 = vmatpush.bf16.msra.mxu0 %v882
        %1171 = vmatpush.bf16.msra.mxu0 %v880
        %1172 = vmatpush.bf16.msra.mxu0 %v878
        %1173 = vmatmul.bf16.gmra.mxu0 %v1163
        %v1174 = vpop.f32.mrf.mxu0
        %v1175 = vadd.f32 0.0, %v1174
        %v1176 = vpop.f32.mrf.mxu0
        %1177 = vdwg.mxu0
        %1178 = vmatpush.bf16.msra.mxu0 0
        %1179 = vmatpush.bf16.msra.mxu0 0
        %1180 = vmatpush.bf16.msra.mxu0 0
        %1181 = vmatpush.bf16.msra.mxu0 0
        %1182 = vmatpush.bf16.msra.mxu0 %v885
        %1183 = vmatpush.bf16.msra.mxu0 %v883
        %1184 = vmatpush.bf16.msra.mxu0 %v881
        %1185 = vmatpush.bf16.msra.mxu0 %v879
        %1186 = vmatmul.bf16.gmra.mxu0 %v1163
        %v1187 = vpop.f32.mrf.mxu0
        %v1188 = vadd.f32 0.0, %v1187
        %v1189 = vpop.f32.mrf.mxu0
        %1190 = vdwg.mxu0
        %v1191 = vadd.f32 %v1156, %v1175
        %v1192 = vadd.f32 %v1157, %v1188
        %v1193 = vmul.f32 %v1191, %v799
        %v1194 = vmul.f32 %v1192, %v800
        %v1195 = vtanh.pop %v1193
        %v1196 = vtanh.pop %v1194
        %v1197 = vmul.f32 %v1195, %v799
        %v1198 = vmul.f32 %v1196, %v800
        %v1199 = vadd.f32 %v1197, %v801
        %v1200 = vadd.f32 %v1198, %v802
        %v1201 = vmul.f32 %v1199, %v1141
        %v1202 = vmul.f32 %v1199, %v1200
        %1204 = vrot.lane.b32.xlu0 %v1202, 64
        %v1205 = vpop.permute.xlu0 %1204
        %v1207 = vadd.f32 %v1201, %v1205
        %v1208 = vtanh.pop %v1207
        %v1209 = vmul.f32 %v1200, %v1208
        %1211 = vrot.lane.b32.xlu0 %v1209, 64
        %v1212 = vpop.permute.xlu0 %1211
        %s1214 = scalar_lea.vmem [#allocation3], 32
        %1215 = vst.msk [vmem:[%s1214] sm:$0xff] %vm894, %v1212
        %s1216 = scalar_lea.vmem [#allocation2], 80
        %v1217 = vld [vmem:[%s1216] sm:$0xff]
        %v1218 = vld [vmem:[%s1216 + $0x8] sm:$0xff]
        %s1219 = scalar_lea.vmem [#allocation2], 160
        %v1220 = vld [vmem:[%s1219] sm:$0xff]
        %v1221 = vld [vmem:[%s1219 + $0x8] sm:$0xff]
        %v1222 = vsel %vm827, %v1217, %v1220
        %v1223 = vsel %vm828, %v1218, %v1221
        %v1224 = vpack.c.bf16 %v1209, %v1209
        %1226 = vrot.lane.b32.xlu0 %v1224, 64
        %v1227 = vpop.permute.xlu0 %1226
        %v1229 = vsel %vm894, %v1227, 0
        %1231 = vmatpush.bf16.msra.mxu0 0
        %1232 = vmatpush.bf16.msra.mxu0 0
        %1233 = vmatpush.bf16.msra.mxu0 0
        %1234 = vmatpush.bf16.msra.mxu0 0
        %1235 = vmatpush.bf16.msra.mxu0 %v884
        %1236 = vmatpush.bf16.msra.mxu0 %v882
        %1237 = vmatpush.bf16.msra.mxu0 %v880
        %1238 = vmatpush.bf16.msra.mxu0 %v878
        %1239 = vmatmul.bf16.gmra.mxu0 %v1229
        %v1240 = vpop.f32.mrf.mxu0
        %v1241 = vadd.f32 0.0, %v1240
        %v1242 = vpop.f32.mrf.mxu0
        %1243 = vdwg.mxu0
        %1244 = vmatpush.bf16.msra.mxu0 0
        %1245 = vmatpush.bf16.msra.mxu0 0
        %1246 = vmatpush.bf16.msra.mxu0 0
        %1247 = vmatpush.bf16.msra.mxu0 0
        %1248 = vmatpush.bf16.msra.mxu0 %v885
        %1249 = vmatpush.bf16.msra.mxu0 %v883
        %1250 = vmatpush.bf16.msra.mxu0 %v881
        %1251 = vmatpush.bf16.msra.mxu0 %v879
        %1252 = vmatmul.bf16.gmra.mxu0 %v1229
        %v1253 = vpop.f32.mrf.mxu0
        %v1254 = vadd.f32 0.0, %v1253
        %v1255 = vpop.f32.mrf.mxu0
        %1256 = vdwg.mxu0
        %v1257 = vadd.f32 %v1222, %v1241
        %v1258 = vadd.f32 %v1223, %v1254
        %v1259 = vmul.f32 %v1257, %v799
        %v1260 = vmul.f32 %v1258, %v800
        %v1261 = vtanh.pop %v1259
        %v1262 = vtanh.pop %v1260
        %v1263 = vmul.f32 %v1261, %v799
        %v1264 = vmul.f32 %v1262, %v800
        %v1265 = vadd.f32 %v1263, %v801
        %v1266 = vadd.f32 %v1264, %v802
        %v1267 = vmul.f32 %v1265, %v1207
        %v1268 = vmul.f32 %v1265, %v1266
        %1270 = vrot.lane.b32.xlu0 %v1268, 64
        %v1271 = vpop.permute.xlu0 %1270
        %v1273 = vadd.f32 %v1267, %v1271
        %v1274 = vtanh.pop %v1273
        %v1275 = vmul.f32 %v1266, %v1274
        %1277 = vrot.lane.b32.xlu0 %v1275, 64
        %v1278 = vpop.permute.xlu0 %1277
        %s1280 = scalar_lea.vmem [#allocation3], 40
        %1281 = vst.msk [vmem:[%s1280] sm:$0xff] %vm894, %v1278
        %s1282 = scalar_lea.vmem [#allocation2], 96
        %v1283 = vld [vmem:[%s1282] sm:$0xff]
        %v1284 = vld [vmem:[%s1282 + $0x8] sm:$0xff]
        %s1285 = scalar_lea.vmem [#allocation2], 144
        %v1286 = vld [vmem:[%s1285] sm:$0xff]
        %v1287 = vld [vmem:[%s1285 + $0x8] sm:$0xff]
        %v1288 = vsel %vm827, %v1283, %v1286
        %v1289 = vsel %vm828, %v1284, %v1287
        %v1290 = vpack.c.bf16 %v1275, %v1275
        %1292 = vrot.lane.b32.xlu0 %v1290, 64
        %v1293 = vpop.permute.xlu0 %1292
        %v1295 = vsel %vm894, %v1293, 0
        %1297 = vmatpush.bf16.msra.mxu0 0
        %1298 = vmatpush.bf16.msra.mxu0 0
        %1299 = vmatpush.bf16.msra.mxu0 0
        %1300 = vmatpush.bf16.msra.mxu0 0
        %1301 = vmatpush.bf16.msra.mxu0 %v884
        %1302 = vmatpush.bf16.msra.mxu0 %v882
        %1303 = vmatpush.bf16.msra.mxu0 %v880
        %1304 = vmatpush.bf16.msra.mxu0 %v878
        %1305 = vmatmul.bf16.gmra.mxu0 %v1295
        %v1306 = vpop.f32.mrf.mxu0
        %v1307 = vadd.f32 0.0, %v1306
        %v1308 = vpop.f32.mrf.mxu0
        %1309 = vdwg.mxu0
        %1310 = vmatpush.bf16.msra.mxu0 0
        %1311 = vmatpush.bf16.msra.mxu0 0
        %1312 = vmatpush.bf16.msra.mxu0 0
        %1313 = vmatpush.bf16.msra.mxu0 0
        %1314 = vmatpush.bf16.msra.mxu0 %v885
        %1315 = vmatpush.bf16.msra.mxu0 %v883
        %1316 = vmatpush.bf16.msra.mxu0 %v881
        %1317 = vmatpush.bf16.msra.mxu0 %v879
        %1318 = vmatmul.bf16.gmra.mxu0 %v1295
        %v1319 = vpop.f32.mrf.mxu0
        %v1320 = vadd.f32 0.0, %v1319
        %v1321 = vpop.f32.mrf.mxu0
        %1322 = vdwg.mxu0
        %v1323 = vadd.f32 %v1288, %v1307
        %v1324 = vadd.f32 %v1289, %v1320
        %v1325 = vmul.f32 %v1323, %v799
        %v1326 = vmul.f32 %v1324, %v800
        %v1327 = vtanh.pop %v1325
        %v1328 = vtanh.pop %v1326
        %v1329 = vmul.f32 %v1327, %v799
        %v1330 = vmul.f32 %v1328, %v800
        %v1331 = vadd.f32 %v1329, %v801
        %v1332 = vadd.f32 %v1330, %v802
        %v1333 = vmul.f32 %v1331, %v1273
        %v1334 = vmul.f32 %v1331, %v1332
        %1336 = vrot.lane.b32.xlu0 %v1334, 64
        %v1337 = vpop.permute.xlu0 %1336
        %v1339 = vadd.f32 %v1333, %v1337
        %v1340 = vtanh.pop %v1339
        %v1341 = vmul.f32 %v1332, %v1340
        %1343 = vrot.lane.b32.xlu0 %v1341, 64
        %v1344 = vpop.permute.xlu0 %1343
        %s1346 = scalar_lea.vmem [#allocation3], 48
        %1347 = vst.msk [vmem:[%s1346] sm:$0xff] %vm894, %v1344
        %s1348 = scalar_lea.vmem [#allocation2], 112
        %v1349 = vld [vmem:[%s1348] sm:$0xff]
        %v1350 = vld [vmem:[%s1348 + $0x8] sm:$0xff]
        %s1351 = scalar_lea.vmem [#allocation2], 128
        %v1352 = vld [vmem:[%s1351] sm:$0xff]
        %v1353 = vld [vmem:[%s1351 + $0x8] sm:$0xff]
        %v1354 = vsel %vm827, %v1349, %v1352
        %v1355 = vsel %vm828, %v1350, %v1353
        %v1356 = vpack.c.bf16 %v1341, %v1341
        %1358 = vrot.lane.b32.xlu0 %v1356, 64
        %v1359 = vpop.permute.xlu0 %1358
        %v1361 = vsel %vm894, %v1359, 0
        %1363 = vmatpush.bf16.msra.mxu0 0
        %1364 = vmatpush.bf16.msra.mxu0 0
        %1365 = vmatpush.bf16.msra.mxu0 0
        %1366 = vmatpush.bf16.msra.mxu0 0
        %1367 = vmatpush.bf16.msra.mxu0 %v884
        %1368 = vmatpush.bf16.msra.mxu0 %v882
        %1369 = vmatpush.bf16.msra.mxu0 %v880
        %1370 = vmatpush.bf16.msra.mxu0 %v878
        %1371 = vmatmul.bf16.gmra.mxu0 %v1361
        %v1372 = vpop.f32.mrf.mxu0
        %v1373 = vadd.f32 0.0, %v1372
        %v1374 = vpop.f32.mrf.mxu0
        %1375 = vdwg.mxu0
        %1376 = vmatpush.bf16.msra.mxu0 0
        %1377 = vmatpush.bf16.msra.mxu0 0
        %1378 = vmatpush.bf16.msra.mxu0 0
        %1379 = vmatpush.bf16.msra.mxu0 0
        %1380 = vmatpush.bf16.msra.mxu0 %v885
        %1381 = vmatpush.bf16.msra.mxu0 %v883
        %1382 = vmatpush.bf16.msra.mxu0 %v881
        %1383 = vmatpush.bf16.msra.mxu0 %v879
        %1384 = vmatmul.bf16.gmra.mxu0 %v1361
        %v1385 = vpop.f32.mrf.mxu0
        %v1386 = vadd.f32 0.0, %v1385
        %v1387 = vpop.f32.mrf.mxu0
        %1388 = vdwg.mxu0
        %v1389 = vadd.f32 %v1354, %v1373
        %v1390 = vadd.f32 %v1355, %v1386
        %v1391 = vmul.f32 %v1389, %v799
        %v1392 = vmul.f32 %v1390, %v800
        %v1393 = vtanh.pop %v1391
        %v1394 = vtanh.pop %v1392
        %v1395 = vmul.f32 %v1393, %v799
        %v1396 = vmul.f32 %v1394, %v800
        %v1397 = vadd.f32 %v1395, %v801
        %v1398 = vadd.f32 %v1396, %v802
        %v1399 = vmul.f32 %v1397, %v1339
        %v1400 = vmul.f32 %v1397, %v1398
        %1402 = vrot.lane.b32.xlu0 %v1400, 64
        %v1403 = vpop.permute.xlu0 %1402
        %v1405 = vadd.f32 %v1399, %v1403
        %v1406 = vtanh.pop %v1405
        %v1407 = vmul.f32 %v1398, %v1406
        %1409 = vrot.lane.b32.xlu0 %v1407, 64
        %v1410 = vpop.permute.xlu0 %1409
        %s1412 = scalar_lea.vmem [#allocation3], 56
        %1413 = vst.msk [vmem:[%s1412] sm:$0xff] %vm894, %v1410
        %v1414 = vld [vmem:[%s1351] sm:$0xff]
        %v1415 = vld [vmem:[%s1351 + $0x8] sm:$0xff]
        %v1416 = vld [vmem:[%s1348] sm:$0xff]
        %v1417 = vld [vmem:[%s1348 + $0x8] sm:$0xff]
        %v1418 = vsel %vm827, %v1414, %v1416
        %v1419 = vsel %vm828, %v1415, %v1417
        %v1420 = vpack.c.bf16 %v1407, %v1407
        %1422 = vrot.lane.b32.xlu0 %v1420, 64
        %v1423 = vpop.permute.xlu0 %1422
        %v1425 = vsel %vm894, %v1423, 0
        %1427 = vmatpush.bf16.msra.mxu0 0
        %1428 = vmatpush.bf16.msra.mxu0 0
        %1429 = vmatpush.bf16.msra.mxu0 0
        %1430 = vmatpush.bf16.msra.mxu0 0
        %1431 = vmatpush.bf16.msra.mxu0 %v884
        %1432 = vmatpush.bf16.msra.mxu0 %v882
        %1433 = vmatpush.bf16.msra.mxu0 %v880
        %1434 = vmatpush.bf16.msra.mxu0 %v878
        %1435 = vmatmul.bf16.gmra.mxu0 %v1425
        %v1436 = vpop.f32.mrf.mxu0
        %v1437 = vadd.f32 0.0, %v1436
        %v1438 = vpop.f32.mrf.mxu0
        %1439 = vdwg.mxu0
        %1440 = vmatpush.bf16.msra.mxu0 0
        %1441 = vmatpush.bf16.msra.mxu0 0
        %1442 = vmatpush.bf16.msra.mxu0 0
        %1443 = vmatpush.bf16.msra.mxu0 0
        %1444 = vmatpush.bf16.msra.mxu0 %v885
        %1445 = vmatpush.bf16.msra.mxu0 %v883
        %1446 = vmatpush.bf16.msra.mxu0 %v881
        %1447 = vmatpush.bf16.msra.mxu0 %v879
        %1448 = vmatmul.bf16.gmra.mxu0 %v1425
        %v1449 = vpop.f32.mrf.mxu0
        %v1450 = vadd.f32 0.0, %v1449
        %v1451 = vpop.f32.mrf.mxu0
        %1452 = vdwg.mxu0
        %v1453 = vadd.f32 %v1418, %v1437
        %v1454 = vadd.f32 %v1419, %v1450
        %v1455 = vmul.f32 %v1453, %v799
        %v1456 = vmul.f32 %v1454, %v800
        %v1457 = vtanh.pop %v1455
        %v1458 = vtanh.pop %v1456
        %v1459 = vmul.f32 %v1457, %v799
        %v1460 = vmul.f32 %v1458, %v800
        %v1461 = vadd.f32 %v1459, %v801
        %v1462 = vadd.f32 %v1460, %v802
        %v1463 = vmul.f32 %v1461, %v1405
        %v1464 = vmul.f32 %v1461, %v1462
        %1466 = vrot.lane.b32.xlu0 %v1464, 64
        %v1467 = vpop.permute.xlu0 %1466
        %v1469 = vadd.f32 %v1463, %v1467
        %v1470 = vtanh.pop %v1469
        %v1471 = vmul.f32 %v1462, %v1470
        %1473 = vrot.lane.b32.xlu0 %v1471, 64
        %v1474 = vpop.permute.xlu0 %1473
        %s1476 = scalar_lea.vmem [#allocation3], 64
        %1477 = vst.msk [vmem:[%s1476] sm:$0xff] %vm894, %v1474
        %v1478 = vld [vmem:[%s1285] sm:$0xff]
        %v1479 = vld [vmem:[%s1285 + $0x8] sm:$0xff]
        %v1480 = vld [vmem:[%s1282] sm:$0xff]
        %v1481 = vld [vmem:[%s1282 + $0x8] sm:$0xff]
        %v1482 = vsel %vm827, %v1478, %v1480
        %v1483 = vsel %vm828, %v1479, %v1481
        %v1484 = vpack.c.bf16 %v1471, %v1471
        %1486 = vrot.lane.b32.xlu0 %v1484, 64
        %v1487 = vpop.permute.xlu0 %1486
        %v1489 = vsel %vm894, %v1487, 0
        %1491 = vmatpush.bf16.msra.mxu0 0
        %1492 = vmatpush.bf16.msra.mxu0 0
        %1493 = vmatpush.bf16.msra.mxu0 0
        %1494 = vmatpush.bf16.msra.mxu0 0
        %1495 = vmatpush.bf16.msra.mxu0 %v884
        %1496 = vmatpush.bf16.msra.mxu0 %v882
        %1497 = vmatpush.bf16.msra.mxu0 %v880
        %1498 = vmatpush.bf16.msra.mxu0 %v878
        %1499 = vmatmul.bf16.gmra.mxu0 %v1489
        %v1500 = vpop.f32.mrf.mxu0
        %v1501 = vadd.f32 0.0, %v1500
        %v1502 = vpop.f32.mrf.mxu0
        %1503 = vdwg.mxu0
        %1504 = vmatpush.bf16.msra.mxu0 0
        %1505 = vmatpush.bf16.msra.mxu0 0
        %1506 = vmatpush.bf16.msra.mxu0 0
        %1507 = vmatpush.bf16.msra.mxu0 0
        %1508 = vmatpush.bf16.msra.mxu0 %v885
        %1509 = vmatpush.bf16.msra.mxu0 %v883
        %1510 = vmatpush.bf16.msra.mxu0 %v881
        %1511 = vmatpush.bf16.msra.mxu0 %v879
        %1512 = vmatmul.bf16.gmra.mxu0 %v1489
        %v1513 = vpop.f32.mrf.mxu0
        %v1514 = vadd.f32 0.0, %v1513
        %v1515 = vpop.f32.mrf.mxu0
        %1516 = vdwg.mxu0
        %v1517 = vadd.f32 %v1482, %v1501
        %v1518 = vadd.f32 %v1483, %v1514
        %v1519 = vmul.f32 %v1517, %v799
        %v1520 = vmul.f32 %v1518, %v800
        %v1521 = vtanh.pop %v1519
        %v1522 = vtanh.pop %v1520
        %v1523 = vmul.f32 %v1521, %v799
        %v1524 = vmul.f32 %v1522, %v800
        %v1525 = vadd.f32 %v1523, %v801
        %v1526 = vadd.f32 %v1524, %v802
        %v1527 = vmul.f32 %v1525, %v1469
        %v1528 = vmul.f32 %v1525, %v1526
        %1530 = vrot.lane.b32.xlu0 %v1528, 64
        %v1531 = vpop.permute.xlu0 %1530
        %v1533 = vadd.f32 %v1527, %v1531
        %v1534 = vtanh.pop %v1533
        %v1535 = vmul.f32 %v1526, %v1534
        %1537 = vrot.lane.b32.xlu0 %v1535, 64
        %v1538 = vpop.permute.xlu0 %1537
        %s1540 = scalar_lea.vmem [#allocation3], 72
        %1541 = vst.msk [vmem:[%s1540] sm:$0xff] %vm894, %v1538
        %v1542 = vld [vmem:[%s1219] sm:$0xff]
        %v1543 = vld [vmem:[%s1219 + $0x8] sm:$0xff]
        %v1544 = vld [vmem:[%s1216] sm:$0xff]
        %v1545 = vld [vmem:[%s1216 + $0x8] sm:$0xff]
        %v1546 = vsel %vm827, %v1542, %v1544
        %v1547 = vsel %vm828, %v1543, %v1545
        %v1548 = vpack.c.bf16 %v1535, %v1535
        %1550 = vrot.lane.b32.xlu0 %v1548, 64
        %v1551 = vpop.permute.xlu0 %1550
        %v1553 = vsel %vm894, %v1551, 0
        %1555 = vmatpush.bf16.msra.mxu0 0
        %1556 = vmatpush.bf16.msra.mxu0 0
        %1557 = vmatpush.bf16.msra.mxu0 0
        %1558 = vmatpush.bf16.msra.mxu0 0
        %1559 = vmatpush.bf16.msra.mxu0 %v884
        %1560 = vmatpush.bf16.msra.mxu0 %v882
        %1561 = vmatpush.bf16.msra.mxu0 %v880
        %1562 = vmatpush.bf16.msra.mxu0 %v878
        %1563 = vmatmul.bf16.gmra.mxu0 %v1553
        %v1564 = vpop.f32.mrf.mxu0
        %v1565 = vadd.f32 0.0, %v1564
        %v1566 = vpop.f32.mrf.mxu0
        %1567 = vdwg.mxu0
        %1568 = vmatpush.bf16.msra.mxu0 0
        %1569 = vmatpush.bf16.msra.mxu0 0
        %1570 = vmatpush.bf16.msra.mxu0 0
        %1571 = vmatpush.bf16.msra.mxu0 0
        %1572 = vmatpush.bf16.msra.mxu0 %v885
        %1573 = vmatpush.bf16.msra.mxu0 %v883
        %1574 = vmatpush.bf16.msra.mxu0 %v881
        %1575 = vmatpush.bf16.msra.mxu0 %v879
        %1576 = vmatmul.bf16.gmra.mxu0 %v1553
        %v1577 = vpop.f32.mrf.mxu0
        %v1578 = vadd.f32 0.0, %v1577
        %v1579 = vpop.f32.mrf.mxu0
        %1580 = vdwg.mxu0
        %v1581 = vadd.f32 %v1546, %v1565
        %v1582 = vadd.f32 %v1547, %v1578
        %v1583 = vmul.f32 %v1581, %v799
        %v1584 = vmul.f32 %v1582, %v800
        %v1585 = vtanh.pop %v1583
        %v1586 = vtanh.pop %v1584
        %v1587 = vmul.f32 %v1585, %v799
        %v1588 = vmul.f32 %v1586, %v800
        %v1589 = vadd.f32 %v1587, %v801
        %v1590 = vadd.f32 %v1588, %v802
        %v1591 = vmul.f32 %v1589, %v1533
        %v1592 = vmul.f32 %v1589, %v1590
        %1594 = vrot.lane.b32.xlu0 %v1592, 64
        %v1595 = vpop.permute.xlu0 %1594
        %v1597 = vadd.f32 %v1591, %v1595
        %v1598 = vtanh.pop %v1597
        %v1599 = vmul.f32 %v1590, %v1598
        %1601 = vrot.lane.b32.xlu0 %v1599, 64
        %v1602 = vpop.permute.xlu0 %1601
        %s1604 = scalar_lea.vmem [#allocation3], 80
        %1605 = vst.msk [vmem:[%s1604] sm:$0xff] %vm894, %v1602
        %v1606 = vld [vmem:[%s1153] sm:$0xff]
        %v1607 = vld [vmem:[%s1153 + $0x8] sm:$0xff]
        %v1608 = vld [vmem:[%s1150] sm:$0xff]
        %v1609 = vld [vmem:[%s1150 + $0x8] sm:$0xff]
        %v1610 = vsel %vm827, %v1606, %v1608
        %v1611 = vsel %vm828, %v1607, %v1609
        %v1612 = vpack.c.bf16 %v1599, %v1599
        %1614 = vrot.lane.b32.xlu0 %v1612, 64
        %v1615 = vpop.permute.xlu0 %1614
        %v1617 = vsel %vm894, %v1615, 0
        %1619 = vmatpush.bf16.msra.mxu0 0
        %1620 = vmatpush.bf16.msra.mxu0 0
        %1621 = vmatpush.bf16.msra.mxu0 0
        %1622 = vmatpush.bf16.msra.mxu0 0
        %1623 = vmatpush.bf16.msra.mxu0 %v884
        %1624 = vmatpush.bf16.msra.mxu0 %v882
        %1625 = vmatpush.bf16.msra.mxu0 %v880
        %1626 = vmatpush.bf16.msra.mxu0 %v878
        %1627 = vmatmul.bf16.gmra.mxu0 %v1617
        %v1628 = vpop.f32.mrf.mxu0
        %v1629 = vadd.f32 0.0, %v1628
        %v1630 = vpop.f32.mrf.mxu0
        %1631 = vdwg.mxu0
        %1632 = vmatpush.bf16.msra.mxu0 0
        %1633 = vmatpush.bf16.msra.mxu0 0
        %1634 = vmatpush.bf16.msra.mxu0 0
        %1635 = vmatpush.bf16.msra.mxu0 0
        %1636 = vmatpush.bf16.msra.mxu0 %v885
        %1637 = vmatpush.bf16.msra.mxu0 %v883
        %1638 = vmatpush.bf16.msra.mxu0 %v881
        %1639 = vmatpush.bf16.msra.mxu0 %v879
        %1640 = vmatmul.bf16.gmra.mxu0 %v1617
        %v1641 = vpop.f32.mrf.mxu0
        %v1642 = vadd.f32 0.0, %v1641
        %v1643 = vpop.f32.mrf.mxu0
        %1644 = vdwg.mxu0
        %v1645 = vadd.f32 %v1610, %v1629
        %v1646 = vadd.f32 %v1611, %v1642
        %v1647 = vmul.f32 %v1645, %v799
        %v1648 = vmul.f32 %v1646, %v800
        %v1649 = vtanh.pop %v1647
        %v1650 = vtanh.pop %v1648
        %v1651 = vmul.f32 %v1649, %v799
        %v1652 = vmul.f32 %v1650, %v800
        %v1653 = vadd.f32 %v1651, %v801
        %v1654 = vadd.f32 %v1652, %v802
        %v1655 = vmul.f32 %v1653, %v1597
        %v1656 = vmul.f32 %v1653, %v1654
        %1658 = vrot.lane.b32.xlu0 %v1656, 64
        %v1659 = vpop.permute.xlu0 %1658
        %v1661 = vadd.f32 %v1655, %v1659
        %v1662 = vtanh.pop %v1661
        %v1663 = vmul.f32 %v1654, %v1662
        %1665 = vrot.lane.b32.xlu0 %v1663, 64
        %v1666 = vpop.permute.xlu0 %1665
        %s1668 = scalar_lea.vmem [#allocation3], 88
        %1669 = vst.msk [vmem:[%s1668] sm:$0xff] %vm894, %v1666
        %v1670 = vld [vmem:[%s1087] sm:$0xff]
        %v1671 = vld [vmem:[%s1087 + $0x8] sm:$0xff]
        %v1672 = vld [vmem:[%s1084] sm:$0xff]
        %v1673 = vld [vmem:[%s1084 + $0x8] sm:$0xff]
        %v1674 = vsel %vm827, %v1670, %v1672
        %v1675 = vsel %vm828, %v1671, %v1673
        %v1676 = vpack.c.bf16 %v1663, %v1663
        %1678 = vrot.lane.b32.xlu0 %v1676, 64
        %v1679 = vpop.permute.xlu0 %1678
        %v1681 = vsel %vm894, %v1679, 0
        %1683 = vmatpush.bf16.msra.mxu0 0
        %1684 = vmatpush.bf16.msra.mxu0 0
        %1685 = vmatpush.bf16.msra.mxu0 0
        %1686 = vmatpush.bf16.msra.mxu0 0
        %1687 = vmatpush.bf16.msra.mxu0 %v884
        %1688 = vmatpush.bf16.msra.mxu0 %v882
        %1689 = vmatpush.bf16.msra.mxu0 %v880
        %1690 = vmatpush.bf16.msra.mxu0 %v878
        %1691 = vmatmul.bf16.gmra.mxu0 %v1681
        %v1692 = vpop.f32.mrf.mxu0
        %v1693 = vadd.f32 0.0, %v1692
        %v1694 = vpop.f32.mrf.mxu0
        %1695 = vdwg.mxu0
        %1696 = vmatpush.bf16.msra.mxu0 0
        %1697 = vmatpush.bf16.msra.mxu0 0
        %1698 = vmatpush.bf16.msra.mxu0 0
        %1699 = vmatpush.bf16.msra.mxu0 0
        %1700 = vmatpush.bf16.msra.mxu0 %v885
        %1701 = vmatpush.bf16.msra.mxu0 %v883
        %1702 = vmatpush.bf16.msra.mxu0 %v881
        %1703 = vmatpush.bf16.msra.mxu0 %v879
        %1704 = vmatmul.bf16.gmra.mxu0 %v1681
        %v1705 = vpop.f32.mrf.mxu0
        %v1706 = vadd.f32 0.0, %v1705
        %v1707 = vpop.f32.mrf.mxu0
        %1708 = vdwg.mxu0
        %v1709 = vadd.f32 %v1674, %v1693
        %v1710 = vadd.f32 %v1675, %v1706
        %v1711 = vmul.f32 %v1709, %v799
        %v1712 = vmul.f32 %v1710, %v800
        %v1713 = vtanh.pop %v1711
        %v1714 = vtanh.pop %v1712
        %v1715 = vmul.f32 %v1713, %v799
        %v1716 = vmul.f32 %v1714, %v800
        %v1717 = vadd.f32 %v1715, %v801
        %v1718 = vadd.f32 %v1716, %v802
        %v1719 = vmul.f32 %v1717, %v1661
        %v1720 = vmul.f32 %v1717, %v1718
        %1722 = vrot.lane.b32.xlu0 %v1720, 64
        %v1723 = vpop.permute.xlu0 %1722
        %v1725 = vadd.f32 %v1719, %v1723
        %v1726 = vtanh.pop %v1725
        %v1727 = vmul.f32 %v1718, %v1726
        %1729 = vrot.lane.b32.xlu0 %v1727, 64
        %v1730 = vpop.permute.xlu0 %1729
        %s1732 = scalar_lea.vmem [#allocation3], 96
        %1733 = vst.msk [vmem:[%s1732] sm:$0xff] %vm894, %v1730
        %v1734 = vld [vmem:[%s1021] sm:$0xff]
        %v1735 = vld [vmem:[%s1021 + $0x8] sm:$0xff]
        %v1736 = vld [vmem:[%s1018] sm:$0xff]
        %v1737 = vld [vmem:[%s1018 + $0x8] sm:$0xff]
        %v1738 = vsel %vm827, %v1734, %v1736
        %v1739 = vsel %vm828, %v1735, %v1737
        %v1740 = vpack.c.bf16 %v1727, %v1727
        %1742 = vrot.lane.b32.xlu0 %v1740, 64
        %v1743 = vpop.permute.xlu0 %1742
        %v1745 = vsel %vm894, %v1743, 0
        %1747 = vmatpush.bf16.msra.mxu0 0
        %1748 = vmatpush.bf16.msra.mxu0 0
        %1749 = vmatpush.bf16.msra.mxu0 0
        %1750 = vmatpush.bf16.msra.mxu0 0
        %1751 = vmatpush.bf16.msra.mxu0 %v884
        %1752 = vmatpush.bf16.msra.mxu0 %v882
        %1753 = vmatpush.bf16.msra.mxu0 %v880
        %1754 = vmatpush.bf16.msra.mxu0 %v878
        %1755 = vmatmul.bf16.gmra.mxu0 %v1745
        %v1756 = vpop.f32.mrf.mxu0
        %v1757 = vadd.f32 0.0, %v1756
        %v1758 = vpop.f32.mrf.mxu0
        %1759 = vdwg.mxu0
        %1760 = vmatpush.bf16.msra.mxu0 0
        %1761 = vmatpush.bf16.msra.mxu0 0
        %1762 = vmatpush.bf16.msra.mxu0 0
        %1763 = vmatpush.bf16.msra.mxu0 0
        %1764 = vmatpush.bf16.msra.mxu0 %v885
        %1765 = vmatpush.bf16.msra.mxu0 %v883
        %1766 = vmatpush.bf16.msra.mxu0 %v881
        %1767 = vmatpush.bf16.msra.mxu0 %v879
        %1768 = vmatmul.bf16.gmra.mxu0 %v1745
        %v1769 = vpop.f32.mrf.mxu0
        %v1770 = vadd.f32 0.0, %v1769
        %v1771 = vpop.f32.mrf.mxu0
        %1772 = vdwg.mxu0
        %v1773 = vadd.f32 %v1738, %v1757
        %v1774 = vadd.f32 %v1739, %v1770
        %v1775 = vmul.f32 %v1773, %v799
        %v1776 = vmul.f32 %v1774, %v800
        %v1777 = vtanh.pop %v1775
        %v1778 = vtanh.pop %v1776
        %v1779 = vmul.f32 %v1777, %v799
        %v1780 = vmul.f32 %v1778, %v800
        %v1781 = vadd.f32 %v1779, %v801
        %v1782 = vadd.f32 %v1780, %v802
        %v1783 = vmul.f32 %v1781, %v1725
        %v1784 = vmul.f32 %v1781, %v1782
        %1786 = vrot.lane.b32.xlu0 %v1784, 64
        %v1787 = vpop.permute.xlu0 %1786
        %v1789 = vadd.f32 %v1783, %v1787
        %v1790 = vtanh.pop %v1789
        %v1791 = vmul.f32 %v1782, %v1790
        %1793 = vrot.lane.b32.xlu0 %v1791, 64
        %v1794 = vpop.permute.xlu0 %1793
        %s1796 = scalar_lea.vmem [#allocation3], 104
        %1797 = vst.msk [vmem:[%s1796] sm:$0xff] %vm894, %v1794
        %v1798 = vld [vmem:[%s955] sm:$0xff]
        %v1799 = vld [vmem:[%s955 + $0x8] sm:$0xff]
        %v1800 = vld [vmem:[%s952] sm:$0xff]
        %v1801 = vld [vmem:[%s952 + $0x8] sm:$0xff]
        %v1802 = vsel %vm827, %v1798, %v1800
        %v1803 = vsel %vm828, %v1799, %v1801
        %v1804 = vpack.c.bf16 %v1791, %v1791
        %1806 = vrot.lane.b32.xlu0 %v1804, 64
        %v1807 = vpop.permute.xlu0 %1806
        %v1809 = vsel %vm894, %v1807, 0
        %1811 = vmatpush.bf16.msra.mxu0 0
        %1812 = vmatpush.bf16.msra.mxu0 0
        %1813 = vmatpush.bf16.msra.mxu0 0
        %1814 = vmatpush.bf16.msra.mxu0 0
        %1815 = vmatpush.bf16.msra.mxu0 %v884
        %1816 = vmatpush.bf16.msra.mxu0 %v882
        %1817 = vmatpush.bf16.msra.mxu0 %v880
        %1818 = vmatpush.bf16.msra.mxu0 %v878
        %1819 = vmatmul.bf16.gmra.mxu0 %v1809
        %v1820 = vpop.f32.mrf.mxu0
        %v1821 = vadd.f32 0.0, %v1820
        %v1822 = vpop.f32.mrf.mxu0
        %1823 = vdwg.mxu0
        %1824 = vmatpush.bf16.msra.mxu0 0
        %1825 = vmatpush.bf16.msra.mxu0 0
        %1826 = vmatpush.bf16.msra.mxu0 0
        %1827 = vmatpush.bf16.msra.mxu0 0
        %1828 = vmatpush.bf16.msra.mxu0 %v885
        %1829 = vmatpush.bf16.msra.mxu0 %v883
        %1830 = vmatpush.bf16.msra.mxu0 %v881
        %1831 = vmatpush.bf16.msra.mxu0 %v879
        %1832 = vmatmul.bf16.gmra.mxu0 %v1809
        %v1833 = vpop.f32.mrf.mxu0
        %v1834 = vadd.f32 0.0, %v1833
        %v1835 = vpop.f32.mrf.mxu0
        %1836 = vdwg.mxu0
        %v1837 = vadd.f32 %v1802, %v1821
        %v1838 = vadd.f32 %v1803, %v1834
        %v1839 = vmul.f32 %v1837, %v799
        %v1840 = vmul.f32 %v1838, %v800
        %v1841 = vtanh.pop %v1839
        %v1842 = vtanh.pop %v1840
        %v1843 = vmul.f32 %v1841, %v799
        %v1844 = vmul.f32 %v1842, %v800
        %v1845 = vadd.f32 %v1843, %v801
        %v1846 = vadd.f32 %v1844, %v802
        %v1847 = vmul.f32 %v1845, %v1789
        %v1848 = vmul.f32 %v1845, %v1846
        %1850 = vrot.lane.b32.xlu0 %v1848, 64
        %v1851 = vpop.permute.xlu0 %1850
        %v1853 = vadd.f32 %v1847, %v1851
        %v1854 = vtanh.pop %v1853
        %v1855 = vmul.f32 %v1846, %v1854
        %1857 = vrot.lane.b32.xlu0 %v1855, 64
        %v1858 = vpop.permute.xlu0 %1857
        %s1860 = scalar_lea.vmem [#allocation3], 112
        %1861 = vst.msk [vmem:[%s1860] sm:$0xff] %vm894, %v1858
        %v1862 = vld [vmem:[%s848] sm:$0xff]
        %v1863 = vld [vmem:[%s848 + $0x8] sm:$0xff]
        %v1864 = vld [vmem:[#allocation2] sm:$0xff]
        %v1865 = vld [vmem:[#allocation2 + $0x8] sm:$0xff]
        %v1866 = vsel %vm827, %v1862, %v1864
        %v1867 = vsel %vm828, %v1863, %v1865
        %v1868 = vpack.c.bf16 %v1855, %v1855
        %1870 = vrot.lane.b32.xlu0 %v1868, 64
        %v1871 = vpop.permute.xlu0 %1870
        %v1873 = vsel %vm894, %v1871, 0
        %1875 = vmatpush.bf16.msra.mxu0 0
        %1876 = vmatpush.bf16.msra.mxu0 0
        %1877 = vmatpush.bf16.msra.mxu0 0
        %1878 = vmatpush.bf16.msra.mxu0 0
        %1879 = vmatpush.bf16.msra.mxu0 %v884
        %1880 = vmatpush.bf16.msra.mxu0 %v882
        %1881 = vmatpush.bf16.msra.mxu0 %v880
        %1882 = vmatpush.bf16.msra.mxu0 %v878
        %1883 = vmatmul.bf16.gmra.mxu0 %v1873
        %v1884 = vpop.f32.mrf.mxu0
        %v1885 = vadd.f32 0.0, %v1884
        %v1886 = vpop.f32.mrf.mxu0
        %1887 = vdwg.mxu0
        %1888 = vmatpush.bf16.msra.mxu0 0
        %1889 = vmatpush.bf16.msra.mxu0 0
        %1890 = vmatpush.bf16.msra.mxu0 0
        %1891 = vmatpush.bf16.msra.mxu0 0
        %1892 = vmatpush.bf16.msra.mxu0 %v885
        %1893 = vmatpush.bf16.msra.mxu0 %v883
        %1894 = vmatpush.bf16.msra.mxu0 %v881
        %1895 = vmatpush.bf16.msra.mxu0 %v879
        %1896 = vmatmul.bf16.gmra.mxu0 %v1873
        %v1897 = vpop.f32.mrf.mxu0
        %v1898 = vadd.f32 0.0, %v1897
        %v1899 = vpop.f32.mrf.mxu0
        %1900 = vdwg.mxu0
        %v1901 = vadd.f32 %v1866, %v1885
        %v1902 = vadd.f32 %v1867, %v1898
        %v1903 = vmul.f32 %v1901, %v799
        %v1904 = vmul.f32 %v1902, %v800
        %v1905 = vtanh.pop %v1903
        %v1906 = vtanh.pop %v1904
        %v1907 = vmul.f32 %v1905, %v799
        %v1908 = vmul.f32 %v1906, %v800
        %v1909 = vadd.f32 %v1907, %v801
        %v1910 = vadd.f32 %v1908, %v802
        %v1911 = vmul.f32 %v1909, %v1853
        %v1912 = vmul.f32 %v1909, %v1910
        %1914 = vrot.lane.b32.xlu0 %v1912, 64
        %v1915 = vpop.permute.xlu0 %1914
        %v1917 = vadd.f32 %v1911, %v1915
        %v1918 = vtanh.pop %v1917
        %v1919 = vmul.f32 %v1910, %v1918
        %1921 = vrot.lane.b32.xlu0 %v1919, 64
        %v1922 = vpop.permute.xlu0 %1921
        %s1924 = scalar_lea.vmem [#allocation3], 120
        %1925 = vst.msk [vmem:[%s1924] sm:$0xff] %vm894, %v1922
        %1926 = vst.msk [vmem:[%s576] sm:$0xff] %vm836, %v1922
        %1928 = vrot.lane.b32.xlu0 %v1917, 64
        %v1929 = vpop.permute.xlu0 %1928
        %1931 = vst.msk [vmem:[%s583] sm:$0xff] %vm836, %v1929
        %1932 = vrot.lane.b32.xlu0 %v1919, 32
        %v1933 = vpop.permute.xlu0 %1932
        %s1935 = scalar_lea.vmem %s576, 8 [#allocation15]
        %1936 = vst.msk [vmem:[%s1935] sm:$0xff] %vm836, %v1933
        %1937 = vrot.lane.b32.xlu0 %v1917, 32
        %v1938 = vpop.permute.xlu0 %1937
        %s1940 = scalar_lea.vmem %s583, 8 [#allocation17]
        %1941 = vst.msk [vmem:[%s1940] sm:$0xff] %vm836, %v1938
        %v1942 = vld [vmem:[#allocation3] sm:$0xff]
        %v1943 = vld [vmem:[#allocation3 + $0x8] sm:$0xff]
        %v1944 = vld [vmem:[#allocation3 + $0x10] sm:$0xff]
        %v1945 = vld [vmem:[#allocation3 + $0x18] sm:$0xff]
        %v1946 = vld [vmem:[#allocation3 + $0x20] sm:$0xff]
        %v1947 = vld [vmem:[#allocation3 + $0x28] sm:$0xff]
        %v1948 = vld [vmem:[#allocation3 + $0x30] sm:$0xff]
        %v1949 = vld [vmem:[#allocation3 + $0x38] sm:$0xff]
        %v1950 = vld [vmem:[#allocation3 + $0x40] sm:$0xff]
        %v1951 = vld [vmem:[#allocation3 + $0x48] sm:$0xff]
        %v1952 = vld [vmem:[#allocation3 + $0x50] sm:$0xff]
        %v1953 = vld [vmem:[#allocation3 + $0x58] sm:$0xff]
        %v1954 = vld [vmem:[#allocation3 + $0x60] sm:$0xff]
        %v1955 = vld [vmem:[#allocation3 + $0x68] sm:$0xff]
        %v1956 = vld [vmem:[#allocation3 + $0x70] sm:$0xff]
        %v1957 = vld [vmem:[#allocation3 + $0x78] sm:$0xff]
        %v1958 = vld [vmem:[%s6] sm:$0xf]
        %v1959 = vld [vmem:[%s6 + $0x4] sm:$0xf]
        %v1960 = vld [vmem:[%s6 + $0x8] sm:$0xf]
        %v1961 = vld [vmem:[%s6 + $0xc] sm:$0xf]
        %v1962 = vld [vmem:[%s6 + $0x10] sm:$0xf]
        %v1963 = vld [vmem:[%s6 + $0x14] sm:$0xf]
        %v1964 = vld [vmem:[%s6 + $0x18] sm:$0xf]
        %v1965 = vld [vmem:[%s6 + $0x1c] sm:$0xf]
        %v1966 = vpack.c.bf16 %v1943, %v1942
        %v1967 = vpack.c.bf16 %v1945, %v1944
        %v1968 = vpack.c.bf16 %v1947, %v1946
        %v1969 = vpack.c.bf16 %v1949, %v1948
        %v1970 = vpack.c.bf16 %v1951, %v1950
        %v1971 = vpack.c.bf16 %v1953, %v1952
        %v1972 = vpack.c.bf16 %v1955, %v1954
        %v1973 = vpack.c.bf16 %v1957, %v1956
        %v1974 = vld [vmem:[%s7] sm:$0x1]
        %v1976 = vperm.slane %v1974, 0
        %v1982 = vunpack.c.l.b16 %v1958
        %v1983 = vunpack.c.l.b16 %v1959
        %v1984 = vunpack.c.l.b16 %v1960
        %v1985 = vunpack.c.l.b16 %v1961
        %v1986 = vpack.c.b16 %v1983, %v1982
        %v1987 = vpack.c.b16 %v1985, %v1984
        %v1991 = vsel %vm836, %v1966, 0
        %v1994 = vsel %vm836, %v1967, 0
        %v1997 = vsel %vm836, %v1968, 0
        %v2000 = vsel %vm836, %v1969, 0
        %v2003 = vsel %vm836, %v1970, 0
        %v2006 = vsel %vm836, %v1971, 0
        %v2009 = vsel %vm836, %v1972, 0
        %v2012 = vsel %vm836, %v1973, 0
        %2014 = vmatpush.bf16.msra.mxu0 0
        %2015 = vmatpush.bf16.msra.mxu0 0
        %2016 = vmatpush.bf16.msra.mxu0 0
        %2017 = vmatpush.bf16.msra.mxu0 0
        %2018 = vmatpush.bf16.msra.mxu0 0
        %2019 = vmatpush.bf16.msra.mxu0 0
        %2020 = vmatpush.bf16.msra.mxu0 %v1987
        %2021 = vmatpush.bf16.msra.mxu0 %v1986
        %2022 = vmatmul.bf16.gmra.mxu0 %v1991
        %v2023 = vpop.f32.mrf.mxu0
        %v2024 = vadd.f32 %v1976, %v2023
        %v2025 = vpop.f32.mrf.mxu0
        %v2026 = vadd.f32 %v1976, %v2025
        %2027 = vmatmul.bf16.gmra.mxu0 %v1994
        %v2028 = vpop.f32.mrf.mxu0
        %v2029 = vadd.f32 %v1976, %v2028
        %v2030 = vpop.f32.mrf.mxu0
        %v2031 = vadd.f32 %v1976, %v2030
        %2032 = vmatmul.bf16.gmra.mxu0 %v1997
        %v2033 = vpop.f32.mrf.mxu0
        %v2034 = vadd.f32 %v1976, %v2033
        %v2035 = vpop.f32.mrf.mxu0
        %v2036 = vadd.f32 %v1976, %v2035
        %2037 = vmatmul.bf16.gmra.mxu0 %v2000
        %v2038 = vpop.f32.mrf.mxu0
        %v2039 = vadd.f32 %v1976, %v2038
        %v2040 = vpop.f32.mrf.mxu0
        %v2041 = vadd.f32 %v1976, %v2040
        %2042 = vmatmul.bf16.gmra.mxu0 %v2003
        %v2043 = vpop.f32.mrf.mxu0
        %v2044 = vadd.f32 %v1976, %v2043
        %v2045 = vpop.f32.mrf.mxu0
        %v2046 = vadd.f32 %v1976, %v2045
        %2047 = vmatmul.bf16.gmra.mxu0 %v2006
        %v2048 = vpop.f32.mrf.mxu0
        %v2049 = vadd.f32 %v1976, %v2048
        %v2050 = vpop.f32.mrf.mxu0
        %v2051 = vadd.f32 %v1976, %v2050
        %2052 = vmatmul.bf16.gmra.mxu0 %v2009
        %v2053 = vpop.f32.mrf.mxu0
        %v2054 = vadd.f32 %v1976, %v2053
        %v2055 = vpop.f32.mrf.mxu0
        %v2056 = vadd.f32 %v1976, %v2055
        %2057 = vmatmul.bf16.gmra.mxu0 %v2012
        %v2058 = vpop.f32.mrf.mxu0
        %v2059 = vadd.f32 %v1976, %v2058
        %v2060 = vpop.f32.mrf.mxu0
        %v2061 = vadd.f32 %v1976, %v2060
        %2062 = vdwg.mxu0
        %2071 = vrot.lane.b32.xlu0 %v1966, 96
        %v2072 = vpop.permute.xlu0 %2071
        %2073 = vrot.lane.b32.xlu0 %v1967, 96
        %v2074 = vpop.permute.xlu0 %2073
        %2075 = vrot.lane.b32.xlu0 %v1968, 96
        %v2076 = vpop.permute.xlu0 %2075
        %2077 = vrot.lane.b32.xlu0 %v1969, 96
        %v2078 = vpop.permute.xlu0 %2077
        %2079 = vrot.lane.b32.xlu0 %v1970, 96
        %v2080 = vpop.permute.xlu0 %2079
        %2081 = vrot.lane.b32.xlu0 %v1971, 96
        %v2082 = vpop.permute.xlu0 %2081
        %2083 = vrot.lane.b32.xlu0 %v1972, 96
        %v2084 = vpop.permute.xlu0 %2083
        %2085 = vrot.lane.b32.xlu0 %v1973, 96
        %v2086 = vpop.permute.xlu0 %2085
        %v2091 = vunpack.c.l.b16 %v1962
        %v2092 = vunpack.c.l.b16 %v1963
        %v2093 = vunpack.c.l.b16 %v1964
        %v2094 = vunpack.c.l.b16 %v1965
        %v2095 = vpack.c.b16 %v2092, %v2091
        %v2096 = vpack.c.b16 %v2094, %v2093
        %v2100 = vsel %vm836, %v2072, 0
        %v2103 = vsel %vm836, %v2074, 0
        %v2106 = vsel %vm836, %v2076, 0
        %v2109 = vsel %vm836, %v2078, 0
        %v2112 = vsel %vm836, %v2080, 0
        %v2115 = vsel %vm836, %v2082, 0
        %v2118 = vsel %vm836, %v2084, 0
        %v2121 = vsel %vm836, %v2086, 0
        %2123 = vmatpush.bf16.msra.mxu0 0
        %2124 = vmatpush.bf16.msra.mxu0 0
        %2125 = vmatpush.bf16.msra.mxu0 0
        %2126 = vmatpush.bf16.msra.mxu0 0
        %2127 = vmatpush.bf16.msra.mxu0 0
        %2128 = vmatpush.bf16.msra.mxu0 0
        %2129 = vmatpush.bf16.msra.mxu0 %v2096
        %2130 = vmatpush.bf16.msra.mxu0 %v2095
        %2131 = vmatmul.bf16.gmra.mxu0 %v2100
        %v2132 = vpop.f32.mrf.mxu0
        %v2133 = vadd.f32 0.0, %v2132
        %v2134 = vpop.f32.mrf.mxu0
        %v2135 = vadd.f32 0.0, %v2134
        %2136 = vmatmul.bf16.gmra.mxu0 %v2103
        %v2137 = vpop.f32.mrf.mxu0
        %v2138 = vadd.f32 0.0, %v2137
        %v2139 = vpop.f32.mrf.mxu0
        %v2140 = vadd.f32 0.0, %v2139
        %2141 = vmatmul.bf16.gmra.mxu0 %v2106
        %v2142 = vpop.f32.mrf.mxu0
        %v2143 = vadd.f32 0.0, %v2142
        %v2144 = vpop.f32.mrf.mxu0
        %v2145 = vadd.f32 0.0, %v2144
        %2146 = vmatmul.bf16.gmra.mxu0 %v2109
        %v2147 = vpop.f32.mrf.mxu0
        %v2148 = vadd.f32 0.0, %v2147
        %v2149 = vpop.f32.mrf.mxu0
        %v2150 = vadd.f32 0.0, %v2149
        %2151 = vmatmul.bf16.gmra.mxu0 %v2112
        %v2152 = vpop.f32.mrf.mxu0
        %v2153 = vadd.f32 0.0, %v2152
        %v2154 = vpop.f32.mrf.mxu0
        %v2155 = vadd.f32 0.0, %v2154
        %2156 = vmatmul.bf16.gmra.mxu0 %v2115
        %v2157 = vpop.f32.mrf.mxu0
        %v2158 = vadd.f32 0.0, %v2157
        %v2159 = vpop.f32.mrf.mxu0
        %v2160 = vadd.f32 0.0, %v2159
        %2161 = vmatmul.bf16.gmra.mxu0 %v2118
        %v2162 = vpop.f32.mrf.mxu0
        %v2163 = vadd.f32 0.0, %v2162
        %v2164 = vpop.f32.mrf.mxu0
        %v2165 = vadd.f32 0.0, %v2164
        %2166 = vmatmul.bf16.gmra.mxu0 %v2121
        %v2167 = vpop.f32.mrf.mxu0
        %v2168 = vadd.f32 0.0, %v2167
        %v2169 = vpop.f32.mrf.mxu0
        %v2170 = vadd.f32 0.0, %v2169
        %2171 = vdwg.mxu0
        %2172 = vst.msk [vmem:[#allocation4] sm:$0xff] %vm635, %v2133
        %2173 = vst.msk [vmem:[#allocation4 + $0x8] sm:$0xff] %vm635, %v2135
        %2174 = vst.msk [vmem:[#allocation4 + $0x10] sm:$0xff] %vm635, %v2138
        %2175 = vst.msk [vmem:[#allocation4 + $0x18] sm:$0xff] %vm635, %v2140
        %2176 = vst.msk [vmem:[#allocation4 + $0x20] sm:$0xff] %vm635, %v2143
        %2177 = vst.msk [vmem:[#allocation4 + $0x28] sm:$0xff] %vm635, %v2145
        %2178 = vst.msk [vmem:[#allocation4 + $0x30] sm:$0xff] %vm635, %v2148
        %2179 = vst.msk [vmem:[#allocation4 + $0x38] sm:$0xff] %vm635, %v2150
        %2180 = vst.msk [vmem:[#allocation4 + $0x40] sm:$0xff] %vm635, %v2153
        %2181 = vst.msk [vmem:[#allocation4 + $0x48] sm:$0xff] %vm635, %v2155
        %2182 = vst.msk [vmem:[#allocation4 + $0x50] sm:$0xff] %vm635, %v2158
        %2183 = vst.msk [vmem:[#allocation4 + $0x58] sm:$0xff] %vm635, %v2160
        %2184 = vst.msk [vmem:[#allocation4 + $0x60] sm:$0xff] %vm635, %v2163
        %2185 = vst.msk [vmem:[#allocation4 + $0x68] sm:$0xff] %vm635, %v2165
        %2186 = vst.msk [vmem:[#allocation4 + $0x70] sm:$0xff] %vm635, %v2168
        %2187 = vst.msk [vmem:[#allocation4 + $0x78] sm:$0xff] %vm635, %v2170
        loop: start=0, step=1, limit=8
        $region115: #{tpu_custom_call.1} parent=93 // loop_pre_header
          _
        $region116: #{tpu_custom_call.1} parent=93 // loop_header
          %s2189 = sphi 0, %s2193
          %p2190 = scmp.ge.s32.totalorder %s2189, 8
        $region117: #{tpu_custom_call.1} parent=93 // loop_header_branch
          %2192 = sbr.rel (%p2190) target = $region121
        $region118: #{tpu_custom_call.1} parent=93 // loop_body
          %s2194 = smul.u32 %s2189, 8
          %s2195 = scalar_lea.vmem [#allocation4], %s2194
          %v2196 = vld [vmem:[%s2195] sm:$0xff]
          %s2197 = ssub.s32 15, %s2189
          %s2198 = smul.u32 %s2197, 8
          %s2199 = scalar_lea.vmem [#allocation4], %s2198
          %v2200 = vld [vmem:[%s2199] sm:$0xff]
          %2201 = vst.msk [vmem:[%s2195] sm:$0xff] %vm635, %v2200
          %2202 = vst.msk [vmem:[%s2199] sm:$0xff] %vm635, %v2196
        $region119: #{tpu_custom_call.1} parent=93 // loop_footer
          %s2193 = sadd.s32 1, %s2189
        $region120: #{tpu_custom_call.1} parent=93 // loop_footer_branch
          %2188 = sbr.rel target = $region116
        $region121: #{tpu_custom_call.1} parent=93 // loop_exit
          _
        %v2203 = vld [vmem:[#allocation4] sm:$0xff]
        %v2204 = vld [vmem:[#allocation4 + $0x8] sm:$0xff]
        %v2205 = vld [vmem:[#allocation4 + $0x10] sm:$0xff]
        %v2206 = vld [vmem:[#allocation4 + $0x18] sm:$0xff]
        %v2207 = vld [vmem:[#allocation4 + $0x20] sm:$0xff]
        %v2208 = vld [vmem:[#allocation4 + $0x28] sm:$0xff]
        %v2209 = vld [vmem:[#allocation4 + $0x30] sm:$0xff]
        %v2210 = vld [vmem:[#allocation4 + $0x38] sm:$0xff]
        %v2211 = vld [vmem:[#allocation4 + $0x40] sm:$0xff]
        %v2212 = vld [vmem:[#allocation4 + $0x48] sm:$0xff]
        %v2213 = vld [vmem:[#allocation4 + $0x50] sm:$0xff]
        %v2214 = vld [vmem:[#allocation4 + $0x58] sm:$0xff]
        %v2215 = vld [vmem:[#allocation4 + $0x60] sm:$0xff]
        %v2216 = vld [vmem:[#allocation4 + $0x68] sm:$0xff]
        %v2217 = vld [vmem:[#allocation4 + $0x70] sm:$0xff]
        %v2218 = vld [vmem:[#allocation4 + $0x78] sm:$0xff]
        %v2219 = vadd.f32 %v2024, %v2203
        %v2220 = vadd.f32 %v2026, %v2204
        %v2221 = vadd.f32 %v2029, %v2205
        %v2222 = vadd.f32 %v2031, %v2206
        %v2223 = vadd.f32 %v2034, %v2207
        %v2224 = vadd.f32 %v2036, %v2208
        %v2225 = vadd.f32 %v2039, %v2209
        %v2226 = vadd.f32 %v2041, %v2210
        %v2227 = vadd.f32 %v2044, %v2211
        %v2228 = vadd.f32 %v2046, %v2212
        %v2229 = vadd.f32 %v2049, %v2213
        %v2230 = vadd.f32 %v2051, %v2214
        %v2231 = vadd.f32 %v2054, %v2215
        %v2232 = vadd.f32 %v2056, %v2216
        %v2233 = vadd.f32 %v2059, %v2217
        %v2234 = vadd.f32 %v2061, %v2218
        %v2235 = vsel %vm635, %v2219, 0.0
        %2236 = vadd.xlane.f32.xlu0 %v2235
        %v2237 = vpop.xlane.xlu0 %2236
        %v2238 = vsel %vm635, %v2220, 0.0
        %2239 = vadd.xlane.f32.xlu0 %v2238
        %v2240 = vpop.xlane.xlu0 %2239
        %v2241 = vsel %vm635, %v2221, 0.0
        %2242 = vadd.xlane.f32.xlu0 %v2241
        %v2243 = vpop.xlane.xlu0 %2242
        %v2244 = vsel %vm635, %v2222, 0.0
        %2245 = vadd.xlane.f32.xlu0 %v2244
        %v2246 = vpop.xlane.xlu0 %2245
        %v2247 = vsel %vm635, %v2223, 0.0
        %2248 = vadd.xlane.f32.xlu0 %v2247
        %v2249 = vpop.xlane.xlu0 %2248
        %v2250 = vsel %vm635, %v2224, 0.0
        %2251 = vadd.xlane.f32.xlu0 %v2250
        %v2252 = vpop.xlane.xlu0 %2251
        %v2253 = vsel %vm635, %v2225, 0.0
        %2254 = vadd.xlane.f32.xlu0 %v2253
        %v2255 = vpop.xlane.xlu0 %2254
        %v2256 = vsel %vm635, %v2226, 0.0
        %2257 = vadd.xlane.f32.xlu0 %v2256
        %v2258 = vpop.xlane.xlu0 %2257
        %v2259 = vsel %vm635, %v2227, 0.0
        %2260 = vadd.xlane.f32.xlu0 %v2259
        %v2261 = vpop.xlane.xlu0 %2260
        %v2262 = vsel %vm635, %v2228, 0.0
        %2263 = vadd.xlane.f32.xlu0 %v2262
        %v2264 = vpop.xlane.xlu0 %2263
        %v2265 = vsel %vm635, %v2229, 0.0
        %2266 = vadd.xlane.f32.xlu0 %v2265
        %v2267 = vpop.xlane.xlu0 %2266
        %v2268 = vsel %vm635, %v2230, 0.0
        %2269 = vadd.xlane.f32.xlu0 %v2268
        %v2270 = vpop.xlane.xlu0 %2269
        %v2271 = vsel %vm635, %v2231, 0.0
        %2272 = vadd.xlane.f32.xlu0 %v2271
        %v2273 = vpop.xlane.xlu0 %2272
        %v2274 = vsel %vm635, %v2232, 0.0
        %2275 = vadd.xlane.f32.xlu0 %v2274
        %v2276 = vpop.xlane.xlu0 %2275
        %v2277 = vsel %vm635, %v2233, 0.0
        %2278 = vadd.xlane.f32.xlu0 %v2277
        %v2279 = vpop.xlane.xlu0 %2278
        %v2280 = vsel %vm635, %v2234, 0.0
        %2281 = vadd.xlane.f32.xlu0 %v2280
        %v2282 = vpop.xlane.xlu0 %2281
        %v2283 = vrcp.pop 16.0
        %v2284 = vmul.f32 16.0, %v2283
        %v2285 = vsub.f32 1.0, %v2284
        %v2286 = vmul.f32 %v2283, %v2285
        %v2287 = vadd.f32 %v2283, %v2286
        %vm2288 = vweird.f32 %v2283
        %v2289 = vsel %vm2288, %v2283, %v2287
        %v2290 = vmul.f32 %v2237, %v2289
        %v2291 = vmul.f32 %v2240, %v2289
        %v2292 = vmul.f32 %v2243, %v2289
        %v2293 = vmul.f32 %v2246, %v2289
        %v2294 = vmul.f32 %v2249, %v2289
        %v2295 = vmul.f32 %v2252, %v2289
        %v2296 = vmul.f32 %v2255, %v2289
        %v2297 = vmul.f32 %v2258, %v2289
        %v2298 = vmul.f32 %v2261, %v2289
        %v2299 = vmul.f32 %v2264, %v2289
        %v2300 = vmul.f32 %v2267, %v2289
        %v2301 = vmul.f32 %v2270, %v2289
        %v2302 = vmul.f32 %v2273, %v2289
        %v2303 = vmul.f32 %v2276, %v2289
        %v2304 = vmul.f32 %v2279, %v2289
        %v2305 = vmul.f32 %v2282, %v2289
        %v2306 = vadd.f32 %v2290, %v2291
        %v2307 = vadd.f32 %v2306, %v2292
        %v2308 = vadd.f32 %v2307, %v2293
        %v2309 = vadd.f32 %v2308, %v2294
        %v2310 = vadd.f32 %v2309, %v2295
        %v2311 = vadd.f32 %v2310, %v2296
        %v2312 = vadd.f32 %v2311, %v2297
        %v2313 = vadd.f32 %v2312, %v2298
        %v2314 = vadd.f32 %v2313, %v2299
        %v2315 = vadd.f32 %v2314, %v2300
        %v2316 = vadd.f32 %v2315, %v2301
        %v2317 = vadd.f32 %v2316, %v2302
        %v2318 = vadd.f32 %v2317, %v2303
        %v2319 = vadd.f32 %v2318, %v2304
        %v2320 = vadd.f32 %v2319, %v2305
        %v2321 = vmul.f32 %v2320, %v2289
        %v2322 = vsub.f32 %v2219, %v2321
        %v2323 = vsub.f32 %v2220, %v2321
        %v2324 = vsub.f32 %v2221, %v2321
        %v2325 = vsub.f32 %v2222, %v2321
        %v2326 = vsub.f32 %v2223, %v2321
        %v2327 = vsub.f32 %v2224, %v2321
        %v2328 = vsub.f32 %v2225, %v2321
        %v2329 = vsub.f32 %v2226, %v2321
        %v2330 = vsub.f32 %v2227, %v2321
        %v2331 = vsub.f32 %v2228, %v2321
        %v2332 = vsub.f32 %v2229, %v2321
        %v2333 = vsub.f32 %v2230, %v2321
        %v2334 = vsub.f32 %v2231, %v2321
        %v2335 = vsub.f32 %v2232, %v2321
        %v2336 = vsub.f32 %v2233, %v2321
        %v2337 = vsub.f32 %v2234, %v2321
        %v2338 = vmul.f32 %v2322, %v2322
        %v2339 = vmul.f32 %v2323, %v2323
        %v2340 = vmul.f32 %v2324, %v2324
        %v2341 = vmul.f32 %v2325, %v2325
        %v2342 = vmul.f32 %v2326, %v2326
        %v2343 = vmul.f32 %v2327, %v2327
        %v2344 = vmul.f32 %v2328, %v2328
        %v2345 = vmul.f32 %v2329, %v2329
        %v2346 = vmul.f32 %v2330, %v2330
        %v2347 = vmul.f32 %v2331, %v2331
        %v2348 = vmul.f32 %v2332, %v2332
        %v2349 = vmul.f32 %v2333, %v2333
        %v2350 = vmul.f32 %v2334, %v2334
        %v2351 = vmul.f32 %v2335, %v2335
        %v2352 = vmul.f32 %v2336, %v2336
        %v2353 = vmul.f32 %v2337, %v2337
        %v2354 = vsel %vm635, %v2338, 0.0
        %2355 = vadd.xlane.f32.xlu0 %v2354
        %v2356 = vpop.xlane.xlu0 %2355
        %v2357 = vsel %vm635, %v2339, 0.0
        %2358 = vadd.xlane.f32.xlu0 %v2357
        %v2359 = vpop.xlane.xlu0 %2358
        %v2360 = vsel %vm635, %v2340, 0.0
        %2361 = vadd.xlane.f32.xlu0 %v2360
        %v2362 = vpop.xlane.xlu0 %2361
        %v2363 = vsel %vm635, %v2341, 0.0
        %2364 = vadd.xlane.f32.xlu0 %v2363
        %v2365 = vpop.xlane.xlu0 %2364
        %v2366 = vsel %vm635, %v2342, 0.0
        %2367 = vadd.xlane.f32.xlu0 %v2366
        %v2368 = vpop.xlane.xlu0 %2367
        %v2369 = vsel %vm635, %v2343, 0.0
        %2370 = vadd.xlane.f32.xlu0 %v2369
        %v2371 = vpop.xlane.xlu0 %2370
        %v2372 = vsel %vm635, %v2344, 0.0
        %2373 = vadd.xlane.f32.xlu0 %v2372
        %v2374 = vpop.xlane.xlu0 %2373
        %v2375 = vsel %vm635, %v2345, 0.0
        %2376 = vadd.xlane.f32.xlu0 %v2375
        %v2377 = vpop.xlane.xlu0 %2376
        %v2378 = vsel %vm635, %v2346, 0.0
        %2379 = vadd.xlane.f32.xlu0 %v2378
        %v2380 = vpop.xlane.xlu0 %2379
        %v2381 = vsel %vm635, %v2347, 0.0
        %2382 = vadd.xlane.f32.xlu0 %v2381
        %v2383 = vpop.xlane.xlu0 %2382
        %v2384 = vsel %vm635, %v2348, 0.0
        %2385 = vadd.xlane.f32.xlu0 %v2384
        %v2386 = vpop.xlane.xlu0 %2385
        %v2387 = vsel %vm635, %v2349, 0.0
        %2388 = vadd.xlane.f32.xlu0 %v2387
        %v2389 = vpop.xlane.xlu0 %2388
        %v2390 = vsel %vm635, %v2350, 0.0
        %2391 = vadd.xlane.f32.xlu0 %v2390
        %v2392 = vpop.xlane.xlu0 %2391
        %v2393 = vsel %vm635, %v2351, 0.0
        %2394 = vadd.xlane.f32.xlu0 %v2393
        %v2395 = vpop.xlane.xlu0 %2394
        %v2396 = vsel %vm635, %v2352, 0.0
        %2397 = vadd.xlane.f32.xlu0 %v2396
        %v2398 = vpop.xlane.xlu0 %2397
        %v2399 = vsel %vm635, %v2353, 0.0
        %2400 = vadd.xlane.f32.xlu0 %v2399
        %v2401 = vpop.xlane.xlu0 %2400
        %v2402 = vmul.f32 %v2356, %v2289
        %v2403 = vmul.f32 %v2359, %v2289
        %v2404 = vmul.f32 %v2362, %v2289
        %v2405 = vmul.f32 %v2365, %v2289
        %v2406 = vmul.f32 %v2368, %v2289
        %v2407 = vmul.f32 %v2371, %v2289
        %v2408 = vmul.f32 %v2374, %v2289
        %v2409 = vmul.f32 %v2377, %v2289
        %v2410 = vmul.f32 %v2380, %v2289
        %v2411 = vmul.f32 %v2383, %v2289
        %v2412 = vmul.f32 %v2386, %v2289
        %v2413 = vmul.f32 %v2389, %v2289
        %v2414 = vmul.f32 %v2392, %v2289
        %v2415 = vmul.f32 %v2395, %v2289
        %v2416 = vmul.f32 %v2398, %v2289
        %v2417 = vmul.f32 %v2401, %v2289
        %v2418 = vadd.f32 %v2402, %v2403
        %v2419 = vadd.f32 %v2418, %v2404
        %v2420 = vadd.f32 %v2419, %v2405
        %v2421 = vadd.f32 %v2420, %v2406
        %v2422 = vadd.f32 %v2421, %v2407
        %v2423 = vadd.f32 %v2422, %v2408
        %v2424 = vadd.f32 %v2423, %v2409
        %v2425 = vadd.f32 %v2424, %v2410
        %v2426 = vadd.f32 %v2425, %v2411
        %v2427 = vadd.f32 %v2426, %v2412
        %v2428 = vadd.f32 %v2427, %v2413
        %v2429 = vadd.f32 %v2428, %v2414
        %v2430 = vadd.f32 %v2429, %v2415
        %v2431 = vadd.f32 %v2430, %v2416
        %v2432 = vadd.f32 %v2431, %v2417
        %v2433 = vmul.f32 %v2432, %v2289
        %v2434 = vld [vmem:[%s8] sm:$0x1]
        %v2435 = vadd.f32 %v2433, 1e-08
        %v2436 = vrsqrt.pop %v2435
        %v2437 = vmul.f32 %v2436, %v2435
        %v2438 = vmul.f32 %v2437, %v2436
        %v2439 = vmul.f32 0.5, %v2438
        %v2440 = vsub.f32 1.5, %v2439
        %v2441 = vmul.f32 %v2436, %v2440
        %vm2442 = vweird.f32 %v2435
        %vm2443 = vweird.f32 %v2436
        %vm2444 = vmor %vm2442, %vm2443
        %v2445 = vsel %vm2444, %v2436, %v2441
        %v2446 = vmul.f32 %v2322, %v2445
        %v2447 = vmul.f32 %v2323, %v2445
        %v2448 = vmul.f32 %v2324, %v2445
        %v2449 = vmul.f32 %v2325, %v2445
        %v2450 = vmul.f32 %v2326, %v2445
        %v2451 = vmul.f32 %v2327, %v2445
        %v2452 = vmul.f32 %v2328, %v2445
        %v2453 = vmul.f32 %v2329, %v2445
        %v2454 = vmul.f32 %v2330, %v2445
        %v2455 = vmul.f32 %v2331, %v2445
        %v2456 = vmul.f32 %v2332, %v2445
        %v2457 = vmul.f32 %v2333, %v2445
        %v2458 = vmul.f32 %v2334, %v2445
        %v2459 = vmul.f32 %v2335, %v2445
        %v2460 = vmul.f32 %v2336, %v2445
        %v2461 = vmul.f32 %v2337, %v2445
        %v2463 = vperm.slane %v2434, 0
        %v2465 = vmul.f32 %v2463, %v2446
        %v2466 = vmul.f32 %v2463, %v2447
        %v2467 = vmul.f32 %v2463, %v2448
        %v2468 = vmul.f32 %v2463, %v2449
        %v2469 = vmul.f32 %v2463, %v2450
        %v2470 = vmul.f32 %v2463, %v2451
        %v2471 = vmul.f32 %v2463, %v2452
        %v2472 = vmul.f32 %v2463, %v2453
        %v2473 = vmul.f32 %v2463, %v2454
        %v2474 = vmul.f32 %v2463, %v2455
        %v2475 = vmul.f32 %v2463, %v2456
        %v2476 = vmul.f32 %v2463, %v2457
        %v2477 = vmul.f32 %v2463, %v2458
        %v2478 = vmul.f32 %v2463, %v2459
        %v2479 = vmul.f32 %v2463, %v2460
        %v2480 = vmul.f32 %v2463, %v2461
        %v2481 = vld [vmem:[%s9] sm:$0x1]
        %v2483 = vperm.slane %v2481, 0
        %v2485 = vadd.f32 %v2465, %v2483
        %v2486 = vadd.f32 %v2466, %v2483
        %v2487 = vadd.f32 %v2467, %v2483
        %v2488 = vadd.f32 %v2468, %v2483
        %v2489 = vadd.f32 %v2469, %v2483
        %v2490 = vadd.f32 %v2470, %v2483
        %v2491 = vadd.f32 %v2471, %v2483
        %v2492 = vadd.f32 %v2472, %v2483
        %v2493 = vadd.f32 %v2473, %v2483
        %v2494 = vadd.f32 %v2474, %v2483
        %v2495 = vadd.f32 %v2475, %v2483
        %v2496 = vadd.f32 %v2476, %v2483
        %v2497 = vadd.f32 %v2477, %v2483
        %v2498 = vadd.f32 %v2478, %v2483
        %v2499 = vadd.f32 %v2479, %v2483
        %v2500 = vadd.f32 %v2480, %v2483
        %v2501 = vld [vmem:[%s496] sm:$0xff]
        %v2502 = vld [vmem:[%s496 + $0x8] sm:$0xff]
        %v2503 = vld [vmem:[%s496 + $0x10] sm:$0xff]
        %v2504 = vld [vmem:[%s496 + $0x18] sm:$0xff]
        %v2505 = vld [vmem:[%s496 + $0x20] sm:$0xff]
        %v2506 = vld [vmem:[%s496 + $0x28] sm:$0xff]
        %v2507 = vld [vmem:[%s496 + $0x30] sm:$0xff]
        %v2508 = vld [vmem:[%s496 + $0x38] sm:$0xff]
        %v2509 = vld [vmem:[%s496 + $0x40] sm:$0xff]
        %v2510 = vld [vmem:[%s496 + $0x48] sm:$0xff]
        %v2511 = vld [vmem:[%s496 + $0x50] sm:$0xff]
        %v2512 = vld [vmem:[%s496 + $0x58] sm:$0xff]
        %v2513 = vld [vmem:[%s496 + $0x60] sm:$0xff]
        %v2514 = vld [vmem:[%s496 + $0x68] sm:$0xff]
        %v2515 = vld [vmem:[%s496 + $0x70] sm:$0xff]
        %v2516 = vld [vmem:[%s496 + $0x78] sm:$0xff]
        %v2517 = vadd.f32 %v2501, %v2485
        %v2518 = vadd.f32 %v2502, %v2486
        %v2519 = vadd.f32 %v2503, %v2487
        %v2520 = vadd.f32 %v2504, %v2488
        %v2521 = vadd.f32 %v2505, %v2489
        %v2522 = vadd.f32 %v2506, %v2490
        %v2523 = vadd.f32 %v2507, %v2491
        %v2524 = vadd.f32 %v2508, %v2492
        %v2525 = vadd.f32 %v2509, %v2493
        %v2526 = vadd.f32 %v2510, %v2494
        %v2527 = vadd.f32 %v2511, %v2495
        %v2528 = vadd.f32 %v2512, %v2496
        %v2529 = vadd.f32 %v2513, %v2497
        %v2530 = vadd.f32 %v2514, %v2498
        %v2531 = vadd.f32 %v2515, %v2499
        %v2532 = vadd.f32 %v2516, %v2500
        %2533 = vst.msk [vmem:[%s569] sm:$0xff] %vm635, %v2517
        %2534 = vst.msk [vmem:[%s569 + $0x8] sm:$0xff] %vm635, %v2518
        %2535 = vst.msk [vmem:[%s569 + $0x10] sm:$0xff] %vm635, %v2519
        %2536 = vst.msk [vmem:[%s569 + $0x18] sm:$0xff] %vm635, %v2520
        %2537 = vst.msk [vmem:[%s569 + $0x20] sm:$0xff] %vm635, %v2521
        %2538 = vst.msk [vmem:[%s569 + $0x28] sm:$0xff] %vm635, %v2522
        %2539 = vst.msk [vmem:[%s569 + $0x30] sm:$0xff] %vm635, %v2523
        %2540 = vst.msk [vmem:[%s569 + $0x38] sm:$0xff] %vm635, %v2524
        %2541 = vst.msk [vmem:[%s569 + $0x40] sm:$0xff] %vm635, %v2525
        %2542 = vst.msk [vmem:[%s569 + $0x48] sm:$0xff] %vm635, %v2526
        %2543 = vst.msk [vmem:[%s569 + $0x50] sm:$0xff] %vm635, %v2527
        %2544 = vst.msk [vmem:[%s569 + $0x58] sm:$0xff] %vm635, %v2528
        %2545 = vst.msk [vmem:[%s569 + $0x60] sm:$0xff] %vm635, %v2529
        %2546 = vst.msk [vmem:[%s569 + $0x68] sm:$0xff] %vm635, %v2530
        %2547 = vst.msk [vmem:[%s569 + $0x70] sm:$0xff] %vm635, %v2531
        %2548 = vst.msk [vmem:[%s569 + $0x78] sm:$0xff] %vm635, %v2532
        %s2549 = sand.u32 %s270, 1
        %s2550 = scalar_lea.sflag [#allocation7], %s2549
        %s2551 = sand.u32 %s270, 1
        %s2552 = smul.addr %s2551, 128
        %s2553 = scalar_lea.vmem [#allocation14], %s2552
        %s2554 = sand.u32 %s37, 1
        %s2555 = scalar_lea.sflag [#allocation16], %s2554
        %s2556 = sand.u32 %s296, 1
        %s2557 = smul.addr %s2556, 16
        %s2558 = scalar_lea.vmem [#allocation15], %s2557
        %s2559 = sand.u32 %s37, 1
        %s2560 = scalar_lea.sflag [#allocation16], %s2559
        %s2561 = sand.u32 %s322, 1
        %s2562 = smul.addr %s2561, 16
        %s2563 = scalar_lea.vmem [#allocation17], %s2562
        // Predicated region
        $region122: #{tpu_custom_call.1} parent=93 // pred_check
          %p2564 = pneg %p280
        $region123: #{tpu_custom_call.1} parent=93 // pred_check_branch
          %2566 = sbr.rel (%p2564) target = $region125
        $region124: #{tpu_custom_call.1} parent=93 // pred_region
          %2568 = vsyncadd %s2550, 0
          %s2569 = smul.addr %s37, 8
          %s2570 = scalar_lea.hbm %s10, %s2569
          %s2571 = sshll.u32 %s2553, 4
          %s2572 = int_to_ptr.vmem [resolvable:$true] %s2571
          %s2573 = sshll.u32 %s2570, 4
          %s2574 = int_to_ptr.hbm [resolvable:$true] %s2573
          %2579 = dma.vmem_to_hbm [thread:$0]  %s2572, 2048, %s2574, %s2550, 128, 256, 8
        $region125: #{tpu_custom_call.1} parent=93 // pred_fallthru
          _
        // Predicated region
        $region126: #{tpu_custom_call.1} parent=93 // pred_check
          %p2580 = pneg %p306
        $region127: #{tpu_custom_call.1} parent=93 // pred_check_branch
          %2582 = sbr.rel (%p2580) target = $region129
        $region128: #{tpu_custom_call.1} parent=93 // pred_region
          %2584 = vsyncadd %s2555, 0
          %s2585 = smul.addr %s37, 8
          %s2586 = scalar_lea.hbm %s11, %s2585
          %s2587 = sshll.u32 %s2558, 4
          %s2588 = int_to_ptr.vmem [resolvable:$true] %s2587
          %s2589 = sshll.u32 %s2586, 4
          %s2590 = int_to_ptr.hbm [resolvable:$true] %s2589
          %2595 = dma.vmem_to_hbm [thread:$0]  %s2588, 256, %s2590, %s2555, 128, 256, 8
        $region129: #{tpu_custom_call.1} parent=93 // pred_fallthru
          _
        // Predicated region
        $region130: #{tpu_custom_call.1} parent=93 // pred_check
          %p2596 = pneg %p332
        $region131: #{tpu_custom_call.1} parent=93 // pred_check_branch
          %2598 = sbr.rel (%p2596) target = $region133
        $region132: #{tpu_custom_call.1} parent=93 // pred_region
          %2600 = vsyncadd %s2560, 0
          %s2601 = smul.addr %s37, 8
          %s2602 = scalar_lea.hbm %s12, %s2601
          %s2603 = sshll.u32 %s2563, 4
          %s2604 = int_to_ptr.vmem [resolvable:$true] %s2603
          %s2605 = sshll.u32 %s2602, 4
          %s2606 = int_to_ptr.hbm [resolvable:$true] %s2605
          %2611 = dma.vmem_to_hbm [thread:$0]  %s2604, 256, %s2606, %s2560, 128, 256, 8
        $region133: #{tpu_custom_call.1} parent=93 // pred_fallthru
          _
      $region94: #{tpu_custom_call.1} parent=5 // pred_fallthru
        _
      %p2612 = scmp.le.s32.totalorder 2, %s32
      // Predicated region
      $region134: #{tpu_custom_call.1} parent=5 // pred_check
        %p2613 = pneg %p2612
      $region135: #{tpu_custom_call.1} parent=5 // pred_check_branch
        %2615 = sbr.rel (%p2613) target = $region137
      $region136: #{tpu_custom_call.1} parent=5 // pred_region
        %s2616 = ssub.s32 %s32, 2
        // Predicated region
        $region138: #{tpu_custom_call.1} parent=136 // pred_check
          %p2617 = pneg %p286
        $region139: #{tpu_custom_call.1} parent=136 // pred_check_branch
          %2619 = sbr.rel (%p2617) target = $region141
        $region140: #{tpu_custom_call.1} parent=136 // pred_region
          %s2620 = sand.u32 %s271, 1
          %s2621 = scalar_lea.sflag [#allocation7], %s2620
          %s2622 = sand.u32 %s271, 1
          %s2623 = smul.addr %s2622, 128
          %s2624 = scalar_lea.vmem [#allocation14], %s2623
          %2626 = dma.done %s2621, 2048
        $region141: #{tpu_custom_call.1} parent=136 // pred_fallthru
          _
        // Predicated region
        $region142: #{tpu_custom_call.1} parent=136 // pred_check
          %p2627 = pneg %p312
        $region143: #{tpu_custom_call.1} parent=136 // pred_check_branch
          %2629 = sbr.rel (%p2627) target = $region145
        $region144: #{tpu_custom_call.1} parent=136 // pred_region
          %s2630 = sand.u32 %s38, 1
          %s2631 = scalar_lea.sflag [#allocation16], %s2630
          %s2632 = sand.u32 %s297, 1
          %s2633 = smul.addr %s2632, 16
          %s2634 = scalar_lea.vmem [#allocation15], %s2633
          %2636 = dma.done %s2631, 256
        $region145: #{tpu_custom_call.1} parent=136 // pred_fallthru
          _
        // Predicated region
        $region146: #{tpu_custom_call.1} parent=136 // pred_check
          %p2637 = pneg %p338
        $region147: #{tpu_custom_call.1} parent=136 // pred_check_branch
          %2639 = sbr.rel (%p2637) target = $region149
        $region148: #{tpu_custom_call.1} parent=136 // pred_region
          %s2640 = sand.u32 %s38, 1
          %s2641 = scalar_lea.sflag [#allocation16], %s2640
          %s2642 = sand.u32 %s323, 1
          %s2643 = smul.addr %s2642, 16
          %s2644 = scalar_lea.vmem [#allocation17], %s2643
          %2646 = dma.done %s2641, 256
        $region149: #{tpu_custom_call.1} parent=136 // pred_fallthru
          _
      $region137: #{tpu_custom_call.1} parent=5 // pred_fallthru
        _
    $region6: #{tpu_custom_call.1} parent=1 // loop_footer
      %s36 = sadd.s32 1, %s32
    $region7: #{tpu_custom_call.1} parent=1 // loop_footer_branch
      %31 = sbr.rel target = $region3
    $region8: #{tpu_custom_call.1} parent=1 // loop_exit
      _
    %2647 = vsyncpa [#allocation6], 1
    %s2648 = scalar_lea.sflag [#allocation6], 1
    %2649 = vsyncpa %s2648, 1
    %2650 = vsyncpa [#allocation10], 1
    %s2651 = scalar_lea.sflag [#allocation10], 1
    %2652 = vsyncpa %s2651, 1
    %2653 = vsyncpa [#allocation13], 1
    %2654 = vsyncpa [#allocation7], 1
    %s2655 = scalar_lea.sflag [#allocation7], 1
    %2656 = vsyncpa %s2655, 1
    %2657 = vsyncpa [#allocation16], 1
    %s2658 = scalar_lea.sflag [#allocation16], 1
    %2659 = vsyncpa %s2658, 1

</llo_original>
